<compile_context>
chip_gen: v6e
topology: v6e:2x2x1
jax: 0.10.0
libtpu: 0.0.40
codegen_flags: <defaults>
</compile_context>

<pallas_src>
import jax
import jax.numpy as jnp
from jax import lax
from jax.experimental import pallas as pl
from jax.experimental.pallas import tpu as pltpu  # noqa: F401  (kept for TPU-specific tuning hooks)

BN_EPS = 1e-5
N_CLS, N_LOC = 1, 4          # cls / loc head output channels (as in the PyTorch module)


# ---------------------------------------------------------------------------
# Fused kernel: conv3x3+BN+ReLU (z and x), depthwise xcorr, 1x1 head, both branches, all batches.
# Everything is channels-first:  activations are (channels, flat-spatial) 2-D tiles.
# ---------------------------------------------------------------------------
def _make_fused_kernel(B, Hz, Wz, Hx, Wx, C2):
    Hzo, Wzo = Hz - 2, Wz - 2           # template conv output spatial
    Hxo, Wxo = Hx - 2, Wx - 2           # search conv output spatial
    Ho, Wo = Hxo - Hzo + 1, Wxo - Wzo + 1
    Lz = (Hzo - 1) * Wz + Wzo           # "junk-column" flat width of template conv output
    Lx = (Hxo - 1) * Wx + Wxo           # "junk-column" flat width of search conv output
    La = (Ho - 1) * Wx + Wo             # "junk-column" flat width of xcorr output
    n_out = Ho * Wo

    def im2col_cf(img, w_img, length):
        # img: (Cin, H*W) channels-first flattened image (f32 value).
        # Channels-first im2col: each 3x3 tap is ONE contiguous lane slice (no sublane shuffles,
        # no transposes).  Columns p = ho*w_img + wo with wo >= W_out are junk and dropped later.
        taps = []
        for du in range(3):
            for dv in range(3):
                off = du * w_img + dv
                taps.append(img[:, off:off + length])
        return jnp.concatenate(taps, axis=0)            # (9*Cin, length)

    def kernel(z_ref, x_ref, wc_ref, wh1_ref, wh2_ref, bh2_ref, cls_ref, loc_ref):
        # ---- one fused MXU matmul for conv3x3(z) and conv3x3(x), both branches, both batches ----
        cols = [im2col_cf(z_ref[b], Wz, Lz) for b in range(B)]
        cols += [im2col_cf(x_ref[b], Wx, Lx) for b in range(B)]
        p_all = jnp.concatenate(cols, axis=1)                        # (9*Cin, B*(Lz+Lx)) f32
        r = jnp.dot(wc_ref[...], p_all.astype(jnp.bfloat16),
                    preferred_element_type=jnp.float32)              # (2*C2, B*(Lz+Lx)) f32
        r = jnp.maximum(r, 0.0)                                      # BN scale already folded in wc

        feats = []
        for b in range(B):
            zf = r[:C2, b * Lz:(b + 1) * Lz]                         # template features (C2, Lz)
            xf = r[C2:, B * Lz + b * Lx:B * Lz + (b + 1) * Lx]       # search features   (C2, Lx)
            # ---- depthwise cross-correlation (VPU FMAs, channels in sublanes) ----
            acc = jnp.zeros((C2, La), jnp.float32)
            for u in range(Hzo):
                for v in range(Wzo):
                    tap = zf[:, u * Wz + v:u * Wz + v + 1]           # (C2, 1)
                    acc = acc + xf[:, u * Wx + v:u * Wx + v + La] * tap
            # drop junk columns -> (C2, Ho*Wo) in row-major (ho, wo) order
            feats.append(jnp.concatenate(
                [acc[:, ho * Wx:ho * Wx + Wo] for ho in range(Ho)], axis=1))
        feat = jnp.concatenate(feats, axis=1)                        # (C2, B*Ho*Wo)

        # ---- head: two 1x1 convs as channel-major matmuls (block-diagonal keeps cls/loc separate) ----
        h = jnp.maximum(
            jnp.dot(wh1_ref[...], feat.astype(jnp.bfloat16),
                    preferred_element_type=jnp.float32), 0.0)        # (C2, B*Ho*Wo)
        o = jnp.dot(wh2_ref[...], h.astype(jnp.bfloat16),
                    preferred_element_type=jnp.float32) + bh2_ref[...]   # (8, B*Ho*Wo), rows 5..7 junk

        for b in range(B):
            cls_ref[b] = o[0:N_CLS, b * n_out:(b + 1) * n_out]
            loc_ref[b] = o[N_CLS:N_CLS + N_LOC, b * n_out:(b + 1) * n_out]

    return kernel


# ---------------------------------------------------------------------------
# Wrapper: one pallas_call; the only wrapper-side ops are free (bitcast) reshapes.
# ---------------------------------------------------------------------------
def depthwise_siamese_forward(params, z_f, x_f):
    B, Cin, Hz, Wz = z_f.shape
    _, _, Hx, Wx = x_f.shape
    Ho = (Hx - 2) - (Hz - 2) + 1
    Wo = (Wx - 2) - (Wz - 2) + 1

    wc, wh1, wh2, bh2 = params["wc"], params["wh1"], params["wh2"], params["bh2"]
    C2 = wh1.shape[0]

    kernel = _make_fused_kernel(B, Hz, Wz, Hx, Wx, C2)

    cls_flat, loc_flat = pl.pallas_call(
        kernel,
        out_shape=(jax.ShapeDtypeStruct((B, N_CLS, Ho * Wo), jnp.float32),
                   jax.ShapeDtypeStruct((B, N_LOC, Ho * Wo), jnp.float32)),
    )(z_f.reshape(B, Cin, Hz * Wz),    # free bitcast (NCHW stays channels-first)
      x_f.reshape(B, Cin, Hx * Wx),    # free bitcast
      wc, wh1, wh2, bh2)

    cls = cls_flat.reshape(B, N_CLS, Ho, Wo)   # free bitcast
    loc = loc_flat.reshape(B, N_LOC, Ho, Wo)   # free bitcast
    return loc, cls                            # matches PyTorch: return (loc, cls)


# ---------------------------------------------------------------------------
# Parameter init (deterministic, kaiming-normal fan_out like the reference)
# ---------------------------------------------------------------------------
def kaiming_normal(key, shape_oihw):
    cout, _, kh, kw = shape_oihw
    fan_out = cout * kh * kw
    std = (2.0 / fan_out) ** 0.5
    return std * jax.random.normal(key, shape_oihw, jnp.float32)


def init_branch_raw(key, feat_in, feat_out, out_channels):
    ks = jax.random.split(key, 5)
    return dict(
        wk=kaiming_normal(ks[0], (feat_out, feat_in, 3, 3)),    # conv_kernel (template)
        ws=kaiming_normal(ks[1], (feat_out, feat_in, 3, 3)),    # conv_search
        wh1=kaiming_normal(ks[2], (feat_out, feat_out, 1, 1)),  # head conv 1 (no bias)
        wh2=kaiming_normal(ks[3], (out_channels, feat_out, 1, 1)),
        bh2=0.01 * jax.random.normal(ks[4], (out_channels,), jnp.float32),
    )


def fuse_and_fold_params(raw_cls, raw_loc, feat_in, feat_out):
    """Fold eval-mode BN (init stats), batch cls+loc branches, store matmul-ready bf16 weights."""
    bn_scale = 1.0 / jnp.sqrt(jnp.float32(1.0 + BN_EPS))

    def fold3x3(w_oihw):
        # OIHW -> (cout, kh, kw, cin) -> (cout, 9*cin); matches the kernel's tap-major
        # (du, dv, cin) im2col row ordering; eval-mode BN scale folded in before the bf16 cast.
        return (jnp.transpose(w_oihw, (0, 2, 3, 1)) * bn_scale).reshape(feat_out, 9 * feat_in)

    # conv weights: rows [0:2*feat_out] = template branch (cls|loc), rows [2*feat_out:] = search branch
    w_tmpl = jnp.concatenate([fold3x3(raw_cls["wk"]), fold3x3(raw_loc["wk"])], axis=0)
    w_srch = jnp.concatenate([fold3x3(raw_cls["ws"]), fold3x3(raw_loc["ws"])], axis=0)
    wc = jnp.concatenate([w_tmpl, w_srch], axis=0).astype(jnp.bfloat16)   # (4*feat_out, 9*feat_in)

    C2 = 2 * feat_out
    wh1 = jnp.zeros((C2, C2), jnp.float32)                 # block-diagonal head conv 1 (OI layout)
    wh1 = wh1.at[:feat_out, :feat_out].set(raw_cls["wh1"][:, :, 0, 0] * bn_scale)
    wh1 = wh1.at[feat_out:, feat_out:].set(raw_loc["wh1"][:, :, 0, 0] * bn_scale)

    out_pad = 8                                            # pad 1+4 output rows to a sublane multiple
    wh2 = jnp.zeros((out_pad, C2), jnp.float32)
    wh2 = wh2.at[0:N_CLS, :feat_out].set(raw_cls["wh2"][:, :, 0, 0])
    wh2 = wh2.at[N_CLS:N_CLS + N_LOC, feat_out:].set(raw_loc["wh2"][:, :, 0, 0])

    bh2 = jnp.zeros((out_pad, 1), jnp.float32)
    bh2 = bh2.at[0:N_CLS, 0].set(raw_cls["bh2"])
    bh2 = bh2.at[N_CLS:N_CLS + N_LOC, 0].set(raw_loc["bh2"])

    return dict(wc=wc, wh1=wh1.astype(jnp.bfloat16), wh2=wh2.astype(jnp.bfloat16), bh2=bh2)


# ---------------------------------------------------------------------------
# Pure-JAX reference (unfused, per-branch, NCHW) with matching bf16 operand rounding.
# ---------------------------------------------------------------------------
def _ref_branch(z_nchw, x_nchw, raw):
    bn_scale = 1.0 / jnp.sqrt(jnp.float32(1.0 + BN_EPS))

    def conv3x3(v, w_oihw):
        return lax.conv_general_dilated(
            v.astype(jnp.bfloat16),
            (w_oihw * bn_scale).astype(jnp.bfloat16),
            window_strides=(1, 1), padding="VALID",
            dimension_numbers=("NCHW", "OIHW", "NCHW"),
            preferred_element_type=jnp.float32)

    zf = jnp.maximum(conv3x3(z_nchw, raw["wk"]), 0.0)
    xf = jnp.maximum(conv3x3(x_nchw, raw["ws"]), 0.0)
    B, C, Hk, Wk = zf.shape
    _, _, Hs, Ws = xf.shape
    Ho, Wo = Hs - Hk + 1, Ws - Wk + 1
    feat = jnp.zeros((B, C, Ho, Wo), jnp.float32)
    for u in range(Hk):
        for v in range(Wk):
            feat = feat + xf[:, :, u:u + Ho, v:v + Wo] * zf[:, :, u:u + 1, v:v + 1]

    w1 = (raw["wh1"][:, :, 0, 0] * bn_scale).astype(jnp.bfloat16)
    h = jnp.maximum(jnp.einsum("oc,bchw->bohw", w1, feat.astype(jnp.bfloat16),
                               preferred_element_type=jnp.float32), 0.0)
    w2 = raw["wh2"][:, :, 0, 0].astype(jnp.bfloat16)
    o = jnp.einsum("oc,bchw->bohw", w2, h.astype(jnp.bfloat16),
                   preferred_element_type=jnp.float32)
    return o + raw["bh2"].reshape(1, -1, 1, 1)


if __name__ == "__main__":
    key = jax.random.PRNGKey(0)
    k_z, k_x, k_cls, k_loc = jax.random.split(key, 4)

    # Small shapes consistent with the module (feat_in = feature_out = 32)
    B, C = 2, 32
    Hz = Wz = 6       # template (z_f) spatial
    Hx = Wx = 10      # search   (x_f) spatial
    feat_out = 32

    z_f = jax.random.normal(k_z, (B, C, Hz, Wz), jnp.float32)
    x_f = jax.random.normal(k_x, (B, C, Hx, Wx), jnp.float32)

    raw_cls = init_branch_raw(k_cls, C, feat_out, N_CLS)
    raw_loc = init_branch_raw(k_loc, C, feat_out, N_LOC)
    params = fuse_and_fold_params(raw_cls, raw_loc, C, feat_out)

    fwd = jax.jit(depthwise_siamese_forward)
    loc, cls = fwd(params, z_f, x_f)
    loc, cls = jax.block_until_ready((loc, cls))

    out_hw = Hx - Hz + 1   # (Hx-2) - (Hz-2) + 1
    assert loc.shape == (B, N_LOC, out_hw, out_hw), loc.shape
    assert cls.shape == (B, N_CLS, out_hw, out_hw), cls.shape
    assert bool(jnp.isfinite(loc).all()) and bool(jnp.isfinite(cls).all())

    # Correctness vs. unfused pure-JAX reference (same bf16 operand rounding, f32 accumulation).
    cls_ref = _ref_branch(z_f, x_f, raw_cls)
    loc_ref = _ref_branch(z_f, x_f, raw_loc)

    def max_rel_err(a, b):
        return float(jnp.max(jnp.abs(a - b)) / (jnp.max(jnp.abs(b)) + 1e-6))

    assert max_rel_err(cls, cls_ref) < 1e-2, ("cls mismatch", max_rel_err(cls, cls_ref))
    assert max_rel_err(loc, loc_ref) < 1e-2, ("loc mismatch", max_rel_err(loc, loc_ref))

    print("KERNEL_OK")
</pallas_src>

<mosaic_0001>
module attributes {stable_mosaic.version = 11 : i64} {
  func.func @kernel(%arg0: memref<2x32x36xf32, #tpu.memory_space<vmem>>, %arg1: memref<2x32x100xf32, #tpu.memory_space<vmem>>, %arg2: memref<128x288xbf16, #tpu.memory_space<vmem>>, %arg3: memref<64x64xbf16, #tpu.memory_space<vmem>>, %arg4: memref<8x64xbf16, #tpu.memory_space<vmem>>, %arg5: memref<8x1xf32, #tpu.memory_space<vmem>>, %arg6: memref<2x1x25xf32, #tpu.memory_space<vmem>>, %arg7: memref<2x4x25xf32, #tpu.memory_space<vmem>>) attributes {dimension_semantics = [], scalar_prefetch = 0 : i64, scratch_operands = 0 : i64, tpu.core_type = #tpu.core_type<tc>} {
    %c0 = arith.constant 0 : index
    %c0_0 = arith.constant 0 : index
    %c0_1 = arith.constant 0 : index
    %0 = vector.load %arg0[%c0, %c0_0, %c0_1] : memref<2x32x36xf32, #tpu.memory_space<vmem>>, vector<1x32x36xf32>
    %1 = vector.shape_cast %0 : vector<1x32x36xf32> to vector<32x36xf32>
    %2 = vector.extract_strided_slice %1 {offsets = [0, 0], sizes = [32, 22], strides = [1, 1]} : vector<32x36xf32> to vector<32x22xf32>
    %3 = vector.extract_strided_slice %1 {offsets = [0, 1], sizes = [32, 22], strides = [1, 1]} : vector<32x36xf32> to vector<32x22xf32>
    %4 = vector.extract_strided_slice %1 {offsets = [0, 2], sizes = [32, 22], strides = [1, 1]} : vector<32x36xf32> to vector<32x22xf32>
    %5 = vector.extract_strided_slice %1 {offsets = [0, 6], sizes = [32, 22], strides = [1, 1]} : vector<32x36xf32> to vector<32x22xf32>
    %6 = vector.extract_strided_slice %1 {offsets = [0, 7], sizes = [32, 22], strides = [1, 1]} : vector<32x36xf32> to vector<32x22xf32>
    %7 = vector.extract_strided_slice %1 {offsets = [0, 8], sizes = [32, 22], strides = [1, 1]} : vector<32x36xf32> to vector<32x22xf32>
    %8 = vector.extract_strided_slice %1 {offsets = [0, 12], sizes = [32, 22], strides = [1, 1]} : vector<32x36xf32> to vector<32x22xf32>
    %9 = vector.extract_strided_slice %1 {offsets = [0, 13], sizes = [32, 22], strides = [1, 1]} : vector<32x36xf32> to vector<32x22xf32>
    %10 = vector.extract_strided_slice %1 {offsets = [0, 14], sizes = [32, 22], strides = [1, 1]} : vector<32x36xf32> to vector<32x22xf32>
    %11 = tpu.concatenate %2, %3, %4, %5, %6, %7, %8, %9, %10 in 0 : vector<32x22xf32>, vector<32x22xf32>, vector<32x22xf32>, vector<32x22xf32>, vector<32x22xf32>, vector<32x22xf32>, vector<32x22xf32>, vector<32x22xf32>, vector<32x22xf32> -> vector<288x22xf32>
    %c1 = arith.constant 1 : index
    %c0_2 = arith.constant 0 : index
    %c0_3 = arith.constant 0 : index
    %12 = vector.load %arg0[%c1, %c0_2, %c0_3] : memref<2x32x36xf32, #tpu.memory_space<vmem>>, vector<1x32x36xf32>
    %13 = vector.shape_cast %12 : vector<1x32x36xf32> to vector<32x36xf32>
    %14 = vector.extract_strided_slice %13 {offsets = [0, 0], sizes = [32, 22], strides = [1, 1]} : vector<32x36xf32> to vector<32x22xf32>
    %15 = vector.extract_strided_slice %13 {offsets = [0, 1], sizes = [32, 22], strides = [1, 1]} : vector<32x36xf32> to vector<32x22xf32>
    %16 = vector.extract_strided_slice %13 {offsets = [0, 2], sizes = [32, 22], strides = [1, 1]} : vector<32x36xf32> to vector<32x22xf32>
    %17 = vector.extract_strided_slice %13 {offsets = [0, 6], sizes = [32, 22], strides = [1, 1]} : vector<32x36xf32> to vector<32x22xf32>
    %18 = vector.extract_strided_slice %13 {offsets = [0, 7], sizes = [32, 22], strides = [1, 1]} : vector<32x36xf32> to vector<32x22xf32>
    %19 = vector.extract_strided_slice %13 {offsets = [0, 8], sizes = [32, 22], strides = [1, 1]} : vector<32x36xf32> to vector<32x22xf32>
    %20 = vector.extract_strided_slice %13 {offsets = [0, 12], sizes = [32, 22], strides = [1, 1]} : vector<32x36xf32> to vector<32x22xf32>
    %21 = vector.extract_strided_slice %13 {offsets = [0, 13], sizes = [32, 22], strides = [1, 1]} : vector<32x36xf32> to vector<32x22xf32>
    %22 = vector.extract_strided_slice %13 {offsets = [0, 14], sizes = [32, 22], strides = [1, 1]} : vector<32x36xf32> to vector<32x22xf32>
    %23 = tpu.concatenate %14, %15, %16, %17, %18, %19, %20, %21, %22 in 0 : vector<32x22xf32>, vector<32x22xf32>, vector<32x22xf32>, vector<32x22xf32>, vector<32x22xf32>, vector<32x22xf32>, vector<32x22xf32>, vector<32x22xf32>, vector<32x22xf32> -> vector<288x22xf32>
    %c0_4 = arith.constant 0 : index
    %c0_5 = arith.constant 0 : index
    %c0_6 = arith.constant 0 : index
    %24 = vector.load %arg1[%c0_4, %c0_5, %c0_6] : memref<2x32x100xf32, #tpu.memory_space<vmem>>, vector<1x32x100xf32>
    %25 = vector.shape_cast %24 : vector<1x32x100xf32> to vector<32x100xf32>
    %26 = vector.extract_strided_slice %25 {offsets = [0, 0], sizes = [32, 78], strides = [1, 1]} : vector<32x100xf32> to vector<32x78xf32>
    %27 = vector.extract_strided_slice %25 {offsets = [0, 1], sizes = [32, 78], strides = [1, 1]} : vector<32x100xf32> to vector<32x78xf32>
    %28 = vector.extract_strided_slice %25 {offsets = [0, 2], sizes = [32, 78], strides = [1, 1]} : vector<32x100xf32> to vector<32x78xf32>
    %29 = vector.extract_strided_slice %25 {offsets = [0, 10], sizes = [32, 78], strides = [1, 1]} : vector<32x100xf32> to vector<32x78xf32>
    %30 = vector.extract_strided_slice %25 {offsets = [0, 11], sizes = [32, 78], strides = [1, 1]} : vector<32x100xf32> to vector<32x78xf32>
    %31 = vector.extract_strided_slice %25 {offsets = [0, 12], sizes = [32, 78], strides = [1, 1]} : vector<32x100xf32> to vector<32x78xf32>
    %32 = vector.extract_strided_slice %25 {offsets = [0, 20], sizes = [32, 78], strides = [1, 1]} : vector<32x100xf32> to vector<32x78xf32>
    %33 = vector.extract_strided_slice %25 {offsets = [0, 21], sizes = [32, 78], strides = [1, 1]} : vector<32x100xf32> to vector<32x78xf32>
    %34 = vector.extract_strided_slice %25 {offsets = [0, 22], sizes = [32, 78], strides = [1, 1]} : vector<32x100xf32> to vector<32x78xf32>
    %35 = tpu.concatenate %26, %27, %28, %29, %30, %31, %32, %33, %34 in 0 : vector<32x78xf32>, vector<32x78xf32>, vector<32x78xf32>, vector<32x78xf32>, vector<32x78xf32>, vector<32x78xf32>, vector<32x78xf32>, vector<32x78xf32>, vector<32x78xf32> -> vector<288x78xf32>
    %c1_7 = arith.constant 1 : index
    %c0_8 = arith.constant 0 : index
    %c0_9 = arith.constant 0 : index
    %36 = vector.load %arg1[%c1_7, %c0_8, %c0_9] : memref<2x32x100xf32, #tpu.memory_space<vmem>>, vector<1x32x100xf32>
    %37 = vector.shape_cast %36 : vector<1x32x100xf32> to vector<32x100xf32>
    %38 = vector.extract_strided_slice %37 {offsets = [0, 0], sizes = [32, 78], strides = [1, 1]} : vector<32x100xf32> to vector<32x78xf32>
    %39 = vector.extract_strided_slice %37 {offsets = [0, 1], sizes = [32, 78], strides = [1, 1]} : vector<32x100xf32> to vector<32x78xf32>
    %40 = vector.extract_strided_slice %37 {offsets = [0, 2], sizes = [32, 78], strides = [1, 1]} : vector<32x100xf32> to vector<32x78xf32>
    %41 = vector.extract_strided_slice %37 {offsets = [0, 10], sizes = [32, 78], strides = [1, 1]} : vector<32x100xf32> to vector<32x78xf32>
    %42 = vector.extract_strided_slice %37 {offsets = [0, 11], sizes = [32, 78], strides = [1, 1]} : vector<32x100xf32> to vector<32x78xf32>
    %43 = vector.extract_strided_slice %37 {offsets = [0, 12], sizes = [32, 78], strides = [1, 1]} : vector<32x100xf32> to vector<32x78xf32>
    %44 = vector.extract_strided_slice %37 {offsets = [0, 20], sizes = [32, 78], strides = [1, 1]} : vector<32x100xf32> to vector<32x78xf32>
    %45 = vector.extract_strided_slice %37 {offsets = [0, 21], sizes = [32, 78], strides = [1, 1]} : vector<32x100xf32> to vector<32x78xf32>
    %46 = vector.extract_strided_slice %37 {offsets = [0, 22], sizes = [32, 78], strides = [1, 1]} : vector<32x100xf32> to vector<32x78xf32>
    %47 = tpu.concatenate %38, %39, %40, %41, %42, %43, %44, %45, %46 in 0 : vector<32x78xf32>, vector<32x78xf32>, vector<32x78xf32>, vector<32x78xf32>, vector<32x78xf32>, vector<32x78xf32>, vector<32x78xf32>, vector<32x78xf32>, vector<32x78xf32> -> vector<288x78xf32>
    %48 = tpu.concatenate %11, %23, %35, %47 in 1 : vector<288x22xf32>, vector<288x22xf32>, vector<288x78xf32>, vector<288x78xf32> -> vector<288x200xf32>
    %c0_10 = arith.constant 0 : index
    %c0_11 = arith.constant 0 : index
    %49 = vector.load %arg2[%c0_10, %c0_11] : memref<128x288xbf16, #tpu.memory_space<vmem>>, vector<128x288xbf16>
    %50 = arith.truncf %48 : vector<288x200xf32> to vector<288x200xbf16>
    %cst = arith.constant dense<0.000000e+00> : vector<128x200xf32>
    %51 = tpu.matmul %49, %50, %cst {dimension_numbers = #tpu.dot_dimension_numbers<[1], [0], [0], [1], [0, 0, 1, 1], [], []>} : vector<128x288xbf16>, vector<288x200xbf16>, vector<128x200xf32> -> vector<128x200xf32>
    %cst_12 = arith.constant 0.000000e+00 : f32
    %52 = vector.broadcast %cst_12 : f32 to vector<128x200xf32>
    %53 = arith.maximumf %51, %52 : vector<128x200xf32>
    %54 = vector.extract_strided_slice %53 {offsets = [0, 0], sizes = [64, 22], strides = [1, 1]} : vector<128x200xf32> to vector<64x22xf32>
    %55 = vector.extract_strided_slice %53 {offsets = [64, 44], sizes = [64, 78], strides = [1, 1]} : vector<128x200xf32> to vector<64x78xf32>
    %cst_13 = arith.constant 0.000000e+00 : f32
    %56 = vector.broadcast %cst_13 : f32 to vector<64x45xf32>
    %57 = vector.extract_strided_slice %54 {offsets = [0, 0], sizes = [64, 1], strides = [1, 1]} : vector<64x22xf32> to vector<64x1xf32>
    %58 = vector.extract_strided_slice %55 {offsets = [0, 0], sizes = [64, 45], strides = [1, 1]} : vector<64x78xf32> to vector<64x45xf32>
    %59 = vector.broadcast %57 : vector<64x1xf32> to vector<64x45xf32>
    %60 = arith.mulf %58, %59 : vector<64x45xf32>
    %61 = arith.addf %56, %60 : vector<64x45xf32>
    %62 = vector.extract_strided_slice %54 {offsets = [0, 1], sizes = [64, 1], strides = [1, 1]} : vector<64x22xf32> to vector<64x1xf32>
    %63 = vector.extract_strided_slice %55 {offsets = [0, 1], sizes = [64, 45], strides = [1, 1]} : vector<64x78xf32> to vector<64x45xf32>
    %64 = vector.broadcast %62 : vector<64x1xf32> to vector<64x45xf32>
    %65 = arith.mulf %63, %64 : vector<64x45xf32>
    %66 = arith.addf %61, %65 : vector<64x45xf32>
    %67 = vector.extract_strided_slice %54 {offsets = [0, 2], sizes = [64, 1], strides = [1, 1]} : vector<64x22xf32> to vector<64x1xf32>
    %68 = vector.extract_strided_slice %55 {offsets = [0, 2], sizes = [64, 45], strides = [1, 1]} : vector<64x78xf32> to vector<64x45xf32>
    %69 = vector.broadcast %67 : vector<64x1xf32> to vector<64x45xf32>
    %70 = arith.mulf %68, %69 : vector<64x45xf32>
    %71 = arith.addf %66, %70 : vector<64x45xf32>
    %72 = vector.extract_strided_slice %54 {offsets = [0, 3], sizes = [64, 1], strides = [1, 1]} : vector<64x22xf32> to vector<64x1xf32>
    %73 = vector.extract_strided_slice %55 {offsets = [0, 3], sizes = [64, 45], strides = [1, 1]} : vector<64x78xf32> to vector<64x45xf32>
    %74 = vector.broadcast %72 : vector<64x1xf32> to vector<64x45xf32>
    %75 = arith.mulf %73, %74 : vector<64x45xf32>
    %76 = arith.addf %71, %75 : vector<64x45xf32>
    %77 = vector.extract_strided_slice %54 {offsets = [0, 6], sizes = [64, 1], strides = [1, 1]} : vector<64x22xf32> to vector<64x1xf32>
    %78 = vector.extract_strided_slice %55 {offsets = [0, 10], sizes = [64, 45], strides = [1, 1]} : vector<64x78xf32> to vector<64x45xf32>
    %79 = vector.broadcast %77 : vector<64x1xf32> to vector<64x45xf32>
    %80 = arith.mulf %78, %79 : vector<64x45xf32>
    %81 = arith.addf %76, %80 : vector<64x45xf32>
    %82 = vector.extract_strided_slice %54 {offsets = [0, 7], sizes = [64, 1], strides = [1, 1]} : vector<64x22xf32> to vector<64x1xf32>
    %83 = vector.extract_strided_slice %55 {offsets = [0, 11], sizes = [64, 45], strides = [1, 1]} : vector<64x78xf32> to vector<64x45xf32>
    %84 = vector.broadcast %82 : vector<64x1xf32> to vector<64x45xf32>
    %85 = arith.mulf %83, %84 : vector<64x45xf32>
    %86 = arith.addf %81, %85 : vector<64x45xf32>
    %87 = vector.extract_strided_slice %54 {offsets = [0, 8], sizes = [64, 1], strides = [1, 1]} : vector<64x22xf32> to vector<64x1xf32>
    %88 = vector.extract_strided_slice %55 {offsets = [0, 12], sizes = [64, 45], strides = [1, 1]} : vector<64x78xf32> to vector<64x45xf32>
    %89 = vector.broadcast %87 : vector<64x1xf32> to vector<64x45xf32>
    %90 = arith.mulf %88, %89 : vector<64x45xf32>
    %91 = arith.addf %86, %90 : vector<64x45xf32>
    %92 = vector.extract_strided_slice %54 {offsets = [0, 9], sizes = [64, 1], strides = [1, 1]} : vector<64x22xf32> to vector<64x1xf32>
    %93 = vector.extract_strided_slice %55 {offsets = [0, 13], sizes = [64, 45], strides = [1, 1]} : vector<64x78xf32> to vector<64x45xf32>
    %94 = vector.broadcast %92 : vector<64x1xf32> to vector<64x45xf32>
    %95 = arith.mulf %93, %94 : vector<64x45xf32>
    %96 = arith.addf %91, %95 : vector<64x45xf32>
    %97 = vector.extract_strided_slice %54 {offsets = [0, 12], sizes = [64, 1], strides = [1, 1]} : vector<64x22xf32> to vector<64x1xf32>
    %98 = vector.extract_strided_slice %55 {offsets = [0, 20], sizes = [64, 45], strides = [1, 1]} : vector<64x78xf32> to vector<64x45xf32>
    %99 = vector.broadcast %97 : vector<64x1xf32> to vector<64x45xf32>
    %100 = arith.mulf %98, %99 : vector<64x45xf32>
    %101 = arith.addf %96, %100 : vector<64x45xf32>
    %102 = vector.extract_strided_slice %54 {offsets = [0, 13], sizes = [64, 1], strides = [1, 1]} : vector<64x22xf32> to vector<64x1xf32>
    %103 = vector.extract_strided_slice %55 {offsets = [0, 21], sizes = [64, 45], strides = [1, 1]} : vector<64x78xf32> to vector<64x45xf32>
    %104 = vector.broadcast %102 : vector<64x1xf32> to vector<64x45xf32>
    %105 = arith.mulf %103, %104 : vector<64x45xf32>
    %106 = arith.addf %101, %105 : vector<64x45xf32>
    %107 = vector.extract_strided_slice %54 {offsets = [0, 14], sizes = [64, 1], strides = [1, 1]} : vector<64x22xf32> to vector<64x1xf32>
    %108 = vector.extract_strided_slice %55 {offsets = [0, 22], sizes = [64, 45], strides = [1, 1]} : vector<64x78xf32> to vector<64x45xf32>
    %109 = vector.broadcast %107 : vector<64x1xf32> to vector<64x45xf32>
    %110 = arith.mulf %108, %109 : vector<64x45xf32>
    %111 = arith.addf %106, %110 : vector<64x45xf32>
    %112 = vector.extract_strided_slice %54 {offsets = [0, 15], sizes = [64, 1], strides = [1, 1]} : vector<64x22xf32> to vector<64x1xf32>
    %113 = vector.extract_strided_slice %55 {offsets = [0, 23], sizes = [64, 45], strides = [1, 1]} : vector<64x78xf32> to vector<64x45xf32>
    %114 = vector.broadcast %112 : vector<64x1xf32> to vector<64x45xf32>
    %115 = arith.mulf %113, %114 : vector<64x45xf32>
    %116 = arith.addf %111, %115 : vector<64x45xf32>
    %117 = vector.extract_strided_slice %54 {offsets = [0, 18], sizes = [64, 1], strides = [1, 1]} : vector<64x22xf32> to vector<64x1xf32>
    %118 = vector.extract_strided_slice %55 {offsets = [0, 30], sizes = [64, 45], strides = [1, 1]} : vector<64x78xf32> to vector<64x45xf32>
    %119 = vector.broadcast %117 : vector<64x1xf32> to vector<64x45xf32>
    %120 = arith.mulf %118, %119 : vector<64x45xf32>
    %121 = arith.addf %116, %120 : vector<64x45xf32>
    %122 = vector.extract_strided_slice %54 {offsets = [0, 19], sizes = [64, 1], strides = [1, 1]} : vector<64x22xf32> to vector<64x1xf32>
    %123 = vector.extract_strided_slice %55 {offsets = [0, 31], sizes = [64, 45], strides = [1, 1]} : vector<64x78xf32> to vector<64x45xf32>
    %124 = vector.broadcast %122 : vector<64x1xf32> to vector<64x45xf32>
    %125 = arith.mulf %123, %124 : vector<64x45xf32>
    %126 = arith.addf %121, %125 : vector<64x45xf32>
    %127 = vector.extract_strided_slice %54 {offsets = [0, 20], sizes = [64, 1], strides = [1, 1]} : vector<64x22xf32> to vector<64x1xf32>
    %128 = vector.extract_strided_slice %55 {offsets = [0, 32], sizes = [64, 45], strides = [1, 1]} : vector<64x78xf32> to vector<64x45xf32>
    %129 = vector.broadcast %127 : vector<64x1xf32> to vector<64x45xf32>
    %130 = arith.mulf %128, %129 : vector<64x45xf32>
    %131 = arith.addf %126, %130 : vector<64x45xf32>
    %132 = vector.extract_strided_slice %54 {offsets = [0, 21], sizes = [64, 1], strides = [1, 1]} : vector<64x22xf32> to vector<64x1xf32>
    %133 = vector.extract_strided_slice %55 {offsets = [0, 33], sizes = [64, 45], strides = [1, 1]} : vector<64x78xf32> to vector<64x45xf32>
    %134 = vector.broadcast %132 : vector<64x1xf32> to vector<64x45xf32>
    %135 = arith.mulf %133, %134 : vector<64x45xf32>
    %136 = arith.addf %131, %135 : vector<64x45xf32>
    %137 = vector.extract_strided_slice %136 {offsets = [0, 0], sizes = [64, 5], strides = [1, 1]} : vector<64x45xf32> to vector<64x5xf32>
    %138 = vector.extract_strided_slice %136 {offsets = [0, 10], sizes = [64, 5], strides = [1, 1]} : vector<64x45xf32> to vector<64x5xf32>
    %139 = vector.extract_strided_slice %136 {offsets = [0, 20], sizes = [64, 5], strides = [1, 1]} : vector<64x45xf32> to vector<64x5xf32>
    %140 = vector.extract_strided_slice %136 {offsets = [0, 30], sizes = [64, 5], strides = [1, 1]} : vector<64x45xf32> to vector<64x5xf32>
    %141 = vector.extract_strided_slice %136 {offsets = [0, 40], sizes = [64, 5], strides = [1, 1]} : vector<64x45xf32> to vector<64x5xf32>
    %142 = tpu.concatenate %137, %138, %139, %140, %141 in 1 : vector<64x5xf32>, vector<64x5xf32>, vector<64x5xf32>, vector<64x5xf32>, vector<64x5xf32> -> vector<64x25xf32>
    %143 = vector.extract_strided_slice %53 {offsets = [0, 22], sizes = [64, 22], strides = [1, 1]} : vector<128x200xf32> to vector<64x22xf32>
    %144 = vector.extract_strided_slice %53 {offsets = [64, 122], sizes = [64, 78], strides = [1, 1]} : vector<128x200xf32> to vector<64x78xf32>
    %cst_14 = arith.constant 0.000000e+00 : f32
    %145 = vector.broadcast %cst_14 : f32 to vector<64x45xf32>
    %146 = vector.extract_strided_slice %143 {offsets = [0, 0], sizes = [64, 1], strides = [1, 1]} : vector<64x22xf32> to vector<64x1xf32>
    %147 = vector.extract_strided_slice %144 {offsets = [0, 0], sizes = [64, 45], strides = [1, 1]} : vector<64x78xf32> to vector<64x45xf32>
    %148 = vector.broadcast %146 : vector<64x1xf32> to vector<64x45xf32>
    %149 = arith.mulf %147, %148 : vector<64x45xf32>
    %150 = arith.addf %145, %149 : vector<64x45xf32>
    %151 = vector.extract_strided_slice %143 {offsets = [0, 1], sizes = [64, 1], strides = [1, 1]} : vector<64x22xf32> to vector<64x1xf32>
    %152 = vector.extract_strided_slice %144 {offsets = [0, 1], sizes = [64, 45], strides = [1, 1]} : vector<64x78xf32> to vector<64x45xf32>
    %153 = vector.broadcast %151 : vector<64x1xf32> to vector<64x45xf32>
    %154 = arith.mulf %152, %153 : vector<64x45xf32>
    %155 = arith.addf %150, %154 : vector<64x45xf32>
    %156 = vector.extract_strided_slice %143 {offsets = [0, 2], sizes = [64, 1], strides = [1, 1]} : vector<64x22xf32> to vector<64x1xf32>
    %157 = vector.extract_strided_slice %144 {offsets = [0, 2], sizes = [64, 45], strides = [1, 1]} : vector<64x78xf32> to vector<64x45xf32>
    %158 = vector.broadcast %156 : vector<64x1xf32> to vector<64x45xf32>
    %159 = arith.mulf %157, %158 : vector<64x45xf32>
    %160 = arith.addf %155, %159 : vector<64x45xf32>
    %161 = vector.extract_strided_slice %143 {offsets = [0, 3], sizes = [64, 1], strides = [1, 1]} : vector<64x22xf32> to vector<64x1xf32>
    %162 = vector.extract_strided_slice %144 {offsets = [0, 3], sizes = [64, 45], strides = [1, 1]} : vector<64x78xf32> to vector<64x45xf32>
    %163 = vector.broadcast %161 : vector<64x1xf32> to vector<64x45xf32>
    %164 = arith.mulf %162, %163 : vector<64x45xf32>
    %165 = arith.addf %160, %164 : vector<64x45xf32>
    %166 = vector.extract_strided_slice %143 {offsets = [0, 6], sizes = [64, 1], strides = [1, 1]} : vector<64x22xf32> to vector<64x1xf32>
    %167 = vector.extract_strided_slice %144 {offsets = [0, 10], sizes = [64, 45], strides = [1, 1]} : vector<64x78xf32> to vector<64x45xf32>
    %168 = vector.broadcast %166 : vector<64x1xf32> to vector<64x45xf32>
    %169 = arith.mulf %167, %168 : vector<64x45xf32>
    %170 = arith.addf %165, %169 : vector<64x45xf32>
    %171 = vector.extract_strided_slice %143 {offsets = [0, 7], sizes = [64, 1], strides = [1, 1]} : vector<64x22xf32> to vector<64x1xf32>
    %172 = vector.extract_strided_slice %144 {offsets = [0, 11], sizes = [64, 45], strides = [1, 1]} : vector<64x78xf32> to vector<64x45xf32>
    %173 = vector.broadcast %171 : vector<64x1xf32> to vector<64x45xf32>
    %174 = arith.mulf %172, %173 : vector<64x45xf32>
    %175 = arith.addf %170, %174 : vector<64x45xf32>
    %176 = vector.extract_strided_slice %143 {offsets = [0, 8], sizes = [64, 1], strides = [1, 1]} : vector<64x22xf32> to vector<64x1xf32>
    %177 = vector.extract_strided_slice %144 {offsets = [0, 12], sizes = [64, 45], strides = [1, 1]} : vector<64x78xf32> to vector<64x45xf32>
    %178 = vector.broadcast %176 : vector<64x1xf32> to vector<64x45xf32>
    %179 = arith.mulf %177, %178 : vector<64x45xf32>
    %180 = arith.addf %175, %179 : vector<64x45xf32>
    %181 = vector.extract_strided_slice %143 {offsets = [0, 9], sizes = [64, 1], strides = [1, 1]} : vector<64x22xf32> to vector<64x1xf32>
    %182 = vector.extract_strided_slice %144 {offsets = [0, 13], sizes = [64, 45], strides = [1, 1]} : vector<64x78xf32> to vector<64x45xf32>
    %183 = vector.broadcast %181 : vector<64x1xf32> to vector<64x45xf32>
    %184 = arith.mulf %182, %183 : vector<64x45xf32>
    %185 = arith.addf %180, %184 : vector<64x45xf32>
    %186 = vector.extract_strided_slice %143 {offsets = [0, 12], sizes = [64, 1], strides = [1, 1]} : vector<64x22xf32> to vector<64x1xf32>
    %187 = vector.extract_strided_slice %144 {offsets = [0, 20], sizes = [64, 45], strides = [1, 1]} : vector<64x78xf32> to vector<64x45xf32>
    %188 = vector.broadcast %186 : vector<64x1xf32> to vector<64x45xf32>
    %189 = arith.mulf %187, %188 : vector<64x45xf32>
    %190 = arith.addf %185, %189 : vector<64x45xf32>
    %191 = vector.extract_strided_slice %143 {offsets = [0, 13], sizes = [64, 1], strides = [1, 1]} : vector<64x22xf32> to vector<64x1xf32>
    %192 = vector.extract_strided_slice %144 {offsets = [0, 21], sizes = [64, 45], strides = [1, 1]} : vector<64x78xf32> to vector<64x45xf32>
    %193 = vector.broadcast %191 : vector<64x1xf32> to vector<64x45xf32>
    %194 = arith.mulf %192, %193 : vector<64x45xf32>
    %195 = arith.addf %190, %194 : vector<64x45xf32>
    %196 = vector.extract_strided_slice %143 {offsets = [0, 14], sizes = [64, 1], strides = [1, 1]} : vector<64x22xf32> to vector<64x1xf32>
    %197 = vector.extract_strided_slice %144 {offsets = [0, 22], sizes = [64, 45], strides = [1, 1]} : vector<64x78xf32> to vector<64x45xf32>
    %198 = vector.broadcast %196 : vector<64x1xf32> to vector<64x45xf32>
    %199 = arith.mulf %197, %198 : vector<64x45xf32>
    %200 = arith.addf %195, %199 : vector<64x45xf32>
    %201 = vector.extract_strided_slice %143 {offsets = [0, 15], sizes = [64, 1], strides = [1, 1]} : vector<64x22xf32> to vector<64x1xf32>
    %202 = vector.extract_strided_slice %144 {offsets = [0, 23], sizes = [64, 45], strides = [1, 1]} : vector<64x78xf32> to vector<64x45xf32>
    %203 = vector.broadcast %201 : vector<64x1xf32> to vector<64x45xf32>
    %204 = arith.mulf %202, %203 : vector<64x45xf32>
    %205 = arith.addf %200, %204 : vector<64x45xf32>
    %206 = vector.extract_strided_slice %143 {offsets = [0, 18], sizes = [64, 1], strides = [1, 1]} : vector<64x22xf32> to vector<64x1xf32>
    %207 = vector.extract_strided_slice %144 {offsets = [0, 30], sizes = [64, 45], strides = [1, 1]} : vector<64x78xf32> to vector<64x45xf32>
    %208 = vector.broadcast %206 : vector<64x1xf32> to vector<64x45xf32>
    %209 = arith.mulf %207, %208 : vector<64x45xf32>
    %210 = arith.addf %205, %209 : vector<64x45xf32>
    %211 = vector.extract_strided_slice %143 {offsets = [0, 19], sizes = [64, 1], strides = [1, 1]} : vector<64x22xf32> to vector<64x1xf32>
    %212 = vector.extract_strided_slice %144 {offsets = [0, 31], sizes = [64, 45], strides = [1, 1]} : vector<64x78xf32> to vector<64x45xf32>
    %213 = vector.broadcast %211 : vector<64x1xf32> to vector<64x45xf32>
    %214 = arith.mulf %212, %213 : vector<64x45xf32>
    %215 = arith.addf %210, %214 : vector<64x45xf32>
    %216 = vector.extract_strided_slice %143 {offsets = [0, 20], sizes = [64, 1], strides = [1, 1]} : vector<64x22xf32> to vector<64x1xf32>
    %217 = vector.extract_strided_slice %144 {offsets = [0, 32], sizes = [64, 45], strides = [1, 1]} : vector<64x78xf32> to vector<64x45xf32>
    %218 = vector.broadcast %216 : vector<64x1xf32> to vector<64x45xf32>
    %219 = arith.mulf %217, %218 : vector<64x45xf32>
    %220 = arith.addf %215, %219 : vector<64x45xf32>
    %221 = vector.extract_strided_slice %143 {offsets = [0, 21], sizes = [64, 1], strides = [1, 1]} : vector<64x22xf32> to vector<64x1xf32>
    %222 = vector.extract_strided_slice %144 {offsets = [0, 33], sizes = [64, 45], strides = [1, 1]} : vector<64x78xf32> to vector<64x45xf32>
    %223 = vector.broadcast %221 : vector<64x1xf32> to vector<64x45xf32>
    %224 = arith.mulf %222, %223 : vector<64x45xf32>
    %225 = arith.addf %220, %224 : vector<64x45xf32>
    %226 = vector.extract_strided_slice %225 {offsets = [0, 0], sizes = [64, 5], strides = [1, 1]} : vector<64x45xf32> to vector<64x5xf32>
    %227 = vector.extract_strided_slice %225 {offsets = [0, 10], sizes = [64, 5], strides = [1, 1]} : vector<64x45xf32> to vector<64x5xf32>
    %228 = vector.extract_strided_slice %225 {offsets = [0, 20], sizes = [64, 5], strides = [1, 1]} : vector<64x45xf32> to vector<64x5xf32>
    %229 = vector.extract_strided_slice %225 {offsets = [0, 30], sizes = [64, 5], strides = [1, 1]} : vector<64x45xf32> to vector<64x5xf32>
    %230 = vector.extract_strided_slice %225 {offsets = [0, 40], sizes = [64, 5], strides = [1, 1]} : vector<64x45xf32> to vector<64x5xf32>
    %231 = tpu.concatenate %226, %227, %228, %229, %230 in 1 : vector<64x5xf32>, vector<64x5xf32>, vector<64x5xf32>, vector<64x5xf32>, vector<64x5xf32> -> vector<64x25xf32>
    %232 = tpu.concatenate %142, %231 in 1 : vector<64x25xf32>, vector<64x25xf32> -> vector<64x50xf32>
    %c0_15 = arith.constant 0 : index
    %c0_16 = arith.constant 0 : index
    %233 = vector.load %arg3[%c0_15, %c0_16] : memref<64x64xbf16, #tpu.memory_space<vmem>>, vector<64x64xbf16>
    %234 = arith.truncf %232 : vector<64x50xf32> to vector<64x50xbf16>
    %cst_17 = arith.constant dense<0.000000e+00> : vector<64x50xf32>
    %235 = tpu.matmul %233, %234, %cst_17 {dimension_numbers = #tpu.dot_dimension_numbers<[1], [0], [0], [1], [0, 0, 1, 1], [], []>} : vector<64x64xbf16>, vector<64x50xbf16>, vector<64x50xf32> -> vector<64x50xf32>
    %cst_18 = arith.constant 0.000000e+00 : f32
    %236 = vector.broadcast %cst_18 : f32 to vector<64x50xf32>
    %237 = arith.maximumf %235, %236 : vector<64x50xf32>
    %c0_19 = arith.constant 0 : index
    %c0_20 = arith.constant 0 : index
    %238 = vector.load %arg4[%c0_19, %c0_20] : memref<8x64xbf16, #tpu.memory_space<vmem>>, vector<8x64xbf16>
    %239 = arith.truncf %237 : vector<64x50xf32> to vector<64x50xbf16>
    %cst_21 = arith.constant dense<0.000000e+00> : vector<8x50xf32>
    %240 = tpu.matmul %238, %239, %cst_21 {dimension_numbers = #tpu.dot_dimension_numbers<[1], [0], [0], [1], [0, 0, 1, 1], [], []>} : vector<8x64xbf16>, vector<64x50xbf16>, vector<8x50xf32> -> vector<8x50xf32>
    %c0_22 = arith.constant 0 : index
    %c0_23 = arith.constant 0 : index
    %241 = vector.load %arg5[%c0_22, %c0_23] : memref<8x1xf32, #tpu.memory_space<vmem>>, vector<8x1xf32>
    %242 = vector.broadcast %241 : vector<8x1xf32> to vector<8x50xf32>
    %243 = arith.addf %240, %242 : vector<8x50xf32>
    %244 = vector.extract_strided_slice %243 {offsets = [0, 0], sizes = [1, 25], strides = [1, 1]} : vector<8x50xf32> to vector<1x25xf32>
    %c0_24 = arith.constant 0 : index
    %c0_25 = arith.constant 0 : index
    %c0_26 = arith.constant 0 : index
    %245 = vector.load %arg6[%c0_24, %c0_25, %c0_26] : memref<2x1x25xf32, #tpu.memory_space<vmem>>, vector<1x1x25xf32>
    %246 = vector.shape_cast %245 : vector<1x1x25xf32> to vector<1x25xf32>
    %247 = vector.shape_cast %244 : vector<1x25xf32> to vector<1x1x25xf32>
    tpu.vector_store %arg6[%c0_24, %c0_25, %c0_26], %247 {strides = array<i32>} : memref<2x1x25xf32, #tpu.memory_space<vmem>>, vector<1x1x25xf32>,
    %248 = vector.extract_strided_slice %243 {offsets = [1, 0], sizes = [4, 25], strides = [1, 1]} : vector<8x50xf32> to vector<4x25xf32>
    %c0_27 = arith.constant 0 : index
    %c0_28 = arith.constant 0 : index
    %c0_29 = arith.constant 0 : index
    %249 = vector.load %arg7[%c0_27, %c0_28, %c0_29] : memref<2x4x25xf32, #tpu.memory_space<vmem>>, vector<1x4x25xf32>
    %250 = vector.shape_cast %249 : vector<1x4x25xf32> to vector<4x25xf32>
    %251 = vector.shape_cast %248 : vector<4x25xf32> to vector<1x4x25xf32>
    tpu.vector_store %arg7[%c0_27, %c0_28, %c0_29], %251 {strides = array<i32>} : memref<2x4x25xf32, #tpu.memory_space<vmem>>, vector<1x4x25xf32>,
    %252 = vector.extract_strided_slice %243 {offsets = [0, 25], sizes = [1, 25], strides = [1, 1]} : vector<8x50xf32> to vector<1x25xf32>
    %c1_30 = arith.constant 1 : index
    %c0_31 = arith.constant 0 : index
    %c0_32 = arith.constant 0 : index
    %253 = vector.load %arg6[%c1_30, %c0_31, %c0_32] : memref<2x1x25xf32, #tpu.memory_space<vmem>>, vector<1x1x25xf32>
    %254 = vector.shape_cast %253 : vector<1x1x25xf32> to vector<1x25xf32>
    %255 = vector.shape_cast %252 : vector<1x25xf32> to vector<1x1x25xf32>
    tpu.vector_store %arg6[%c1_30, %c0_31, %c0_32], %255 {strides = array<i32>} : memref<2x1x25xf32, #tpu.memory_space<vmem>>, vector<1x1x25xf32>,
    %256 = vector.extract_strided_slice %243 {offsets = [1, 25], sizes = [4, 25], strides = [1, 1]} : vector<8x50xf32> to vector<4x25xf32>
    %c1_33 = arith.constant 1 : index
    %c0_34 = arith.constant 0 : index
    %c0_35 = arith.constant 0 : index
    %257 = vector.load %arg7[%c1_33, %c0_34, %c0_35] : memref<2x4x25xf32, #tpu.memory_space<vmem>>, vector<1x4x25xf32>
    %258 = vector.shape_cast %257 : vector<1x4x25xf32> to vector<4x25xf32>
    %259 = vector.shape_cast %256 : vector<4x25xf32> to vector<1x4x25xf32>
    tpu.vector_store %arg7[%c1_33, %c0_34, %c0_35], %259 {strides = array<i32>} : memref<2x4x25xf32, #tpu.memory_space<vmem>>, vector<1x4x25xf32>,
    return
  }
}

</mosaic_0001>

<llo_original>
// kernel: depthwise_siamese_forward.1
$region0: #{depthwise_siamese_forward.1}
  #allocation0 [shape = 'u32[]', space=smem, size = 0x4, offset = 0x4, fixed_abs, tag = 'smem constant byte address 0x4 - core index']
  #allocation1 [shape = 'u32[144,128]{1,0:T(1,128)}', space=vmem, size = 0x12000, scoped, tag = 'internal scratch']
  %s0 = inlined_call_operand.vmem [shape: f32[2,32,36], index: 0, kind: input, shape index: {}]
  %s1 = inlined_call_operand.vmem [shape: f32[2,32,100], index: 1, kind: input, shape index: {}]
  %s2 = inlined_call_operand.vmem [shape: bf16[128,288], index: 2, kind: input, shape index: {}]
  %s3 = inlined_call_operand.vmem [shape: bf16[64,64], index: 3, kind: input, shape index: {}]
  %s4 = inlined_call_operand.vmem [shape: bf16[8,64], index: 4, kind: input, shape index: {}]
  %s5 = inlined_call_operand.vmem [shape: f32[8,1], index: 5, kind: input, shape index: {}]
  %s6 = inlined_call_operand.vmem [shape: f32[2,1,25], index: 6, kind: output, shape index: {0}]
  %s7 = inlined_call_operand.vmem [shape: f32[2,4,25], index: 7, kind: output, shape index: {1}]
  %8 = xla_tuple %s6, %s7
  %s9 = sld [smem:[#allocation0]]
  $region42: #{depthwise_siamese_forward.1} parent=0
    _
  %s11 = ssub.s32 1, %s9
  %s12 = scalar_select 0, %s11, %s9
  // Predicated region
  $region2: #{depthwise_siamese_forward.1} parent=0 // pred_check
    _
  $region3: #{depthwise_siamese_forward.1} parent=0 // pred_check_branch
    %14 = sbr.rel (0) target = $region5
  $region4: #{depthwise_siamese_forward.1} parent=0 // pred_region
    _
  $region5: #{depthwise_siamese_forward.1} parent=0 // pred_fallthru
    _
  // Predicated region
  $region6: #{depthwise_siamese_forward.1} parent=0 // pred_check
    _
  $region7: #{depthwise_siamese_forward.1} parent=0 // pred_check_branch
    %16 = sbr.rel (0) target = $region9
  $region8: #{depthwise_siamese_forward.1} parent=0 // pred_region
    _
  $region9: #{depthwise_siamese_forward.1} parent=0 // pred_fallthru
    _
  // Predicated region
  $region10: #{depthwise_siamese_forward.1} parent=0 // pred_check
    _
  $region11: #{depthwise_siamese_forward.1} parent=0 // pred_check_branch
    %18 = sbr.rel (0) target = $region13
  $region12: #{depthwise_siamese_forward.1} parent=0 // pred_region
    _
  $region13: #{depthwise_siamese_forward.1} parent=0 // pred_fallthru
    _
  // Predicated region
  $region14: #{depthwise_siamese_forward.1} parent=0 // pred_check
    _
  $region15: #{depthwise_siamese_forward.1} parent=0 // pred_check_branch
    %20 = sbr.rel (0) target = $region17
  $region16: #{depthwise_siamese_forward.1} parent=0 // pred_region
    _
  $region17: #{depthwise_siamese_forward.1} parent=0 // pred_fallthru
    _
  // Predicated region
  $region18: #{depthwise_siamese_forward.1} parent=0 // pred_check
    _
  $region19: #{depthwise_siamese_forward.1} parent=0 // pred_check_branch
    %22 = sbr.rel (0) target = $region21
  $region20: #{depthwise_siamese_forward.1} parent=0 // pred_region
    _
  $region21: #{depthwise_siamese_forward.1} parent=0 // pred_fallthru
    _
  // Predicated region
  $region22: #{depthwise_siamese_forward.1} parent=0 // pred_check
    _
  $region23: #{depthwise_siamese_forward.1} parent=0 // pred_check_branch
    %24 = sbr.rel (0) target = $region25
  $region24: #{depthwise_siamese_forward.1} parent=0 // pred_region
    _
  $region25: #{depthwise_siamese_forward.1} parent=0 // pred_fallthru
    _
  %v26 = vld [vmem:[%s0] sm:$0xff]
  %v27 = vld [vmem:[%s0 + $0x8] sm:$0xff]
  %v28 = vld [vmem:[%s0 + $0x10] sm:$0xff]
  %v29 = vld [vmem:[%s0 + $0x18] sm:$0xff]
  %34 = vrot.lane.b32.xlu0 %v26, 127
  %v35 = vpop.permute.xlu0 %34
  %36 = vrot.lane.b32.xlu0 %v27, 127
  %v37 = vpop.permute.xlu0 %36
  %38 = vrot.lane.b32.xlu0 %v28, 127
  %v39 = vpop.permute.xlu0 %38
  %40 = vrot.lane.b32.xlu0 %v29, 127
  %v41 = vpop.permute.xlu0 %40
  %46 = vrot.lane.b32.xlu0 %v26, 126
  %v47 = vpop.permute.xlu0 %46
  %48 = vrot.lane.b32.xlu0 %v27, 126
  %v49 = vpop.permute.xlu0 %48
  %50 = vrot.lane.b32.xlu0 %v28, 126
  %v51 = vpop.permute.xlu0 %50
  %52 = vrot.lane.b32.xlu0 %v29, 126
  %v53 = vpop.permute.xlu0 %52
  %58 = vrot.lane.b32.xlu0 %v26, 122
  %v59 = vpop.permute.xlu0 %58
  %60 = vrot.lane.b32.xlu0 %v27, 122
  %v61 = vpop.permute.xlu0 %60
  %62 = vrot.lane.b32.xlu0 %v28, 122
  %v63 = vpop.permute.xlu0 %62
  %64 = vrot.lane.b32.xlu0 %v29, 122
  %v65 = vpop.permute.xlu0 %64
  %70 = vrot.lane.b32.xlu0 %v26, 121
  %v71 = vpop.permute.xlu0 %70
  %72 = vrot.lane.b32.xlu0 %v27, 121
  %v73 = vpop.permute.xlu0 %72
  %74 = vrot.lane.b32.xlu0 %v28, 121
  %v75 = vpop.permute.xlu0 %74
  %76 = vrot.lane.b32.xlu0 %v29, 121
  %v77 = vpop.permute.xlu0 %76
  %82 = vrot.lane.b32.xlu0 %v26, 120
  %v83 = vpop.permute.xlu0 %82
  %84 = vrot.lane.b32.xlu0 %v27, 120
  %v85 = vpop.permute.xlu0 %84
  %86 = vrot.lane.b32.xlu0 %v28, 120
  %v87 = vpop.permute.xlu0 %86
  %88 = vrot.lane.b32.xlu0 %v29, 120
  %v89 = vpop.permute.xlu0 %88
  %94 = vrot.lane.b32.xlu0 %v26, 116
  %v95 = vpop.permute.xlu0 %94
  %96 = vrot.lane.b32.xlu0 %v27, 116
  %v97 = vpop.permute.xlu0 %96
  %98 = vrot.lane.b32.xlu0 %v28, 116
  %v99 = vpop.permute.xlu0 %98
  %100 = vrot.lane.b32.xlu0 %v29, 116
  %v101 = vpop.permute.xlu0 %100
  %106 = vrot.lane.b32.xlu0 %v26, 115
  %v107 = vpop.permute.xlu0 %106
  %108 = vrot.lane.b32.xlu0 %v27, 115
  %v109 = vpop.permute.xlu0 %108
  %110 = vrot.lane.b32.xlu0 %v28, 115
  %v111 = vpop.permute.xlu0 %110
  %112 = vrot.lane.b32.xlu0 %v29, 115
  %v113 = vpop.permute.xlu0 %112
  %118 = vrot.lane.b32.xlu0 %v26, 114
  %v119 = vpop.permute.xlu0 %118
  %120 = vrot.lane.b32.xlu0 %v27, 114
  %v121 = vpop.permute.xlu0 %120
  %122 = vrot.lane.b32.xlu0 %v28, 114
  %v123 = vpop.permute.xlu0 %122
  %124 = vrot.lane.b32.xlu0 %v29, 114
  %v125 = vpop.permute.xlu0 %124
  %s130 = scalar_lea.vmem %s0, 32
  %v131 = vld [vmem:[%s130] sm:$0xff]
  %v132 = vld [vmem:[%s130 + $0x8] sm:$0xff]
  %v133 = vld [vmem:[%s130 + $0x10] sm:$0xff]
  %v134 = vld [vmem:[%s130 + $0x18] sm:$0xff]
  %139 = vrot.lane.b32.xlu0 %v131, 127
  %v140 = vpop.permute.xlu0 %139
  %141 = vrot.lane.b32.xlu0 %v132, 127
  %v142 = vpop.permute.xlu0 %141
  %143 = vrot.lane.b32.xlu0 %v133, 127
  %v144 = vpop.permute.xlu0 %143
  %145 = vrot.lane.b32.xlu0 %v134, 127
  %v146 = vpop.permute.xlu0 %145
  %147 = vrot.lane.b32.xlu0 %v131, 126
  %v148 = vpop.permute.xlu0 %147
  %149 = vrot.lane.b32.xlu0 %v132, 126
  %v150 = vpop.permute.xlu0 %149
  %151 = vrot.lane.b32.xlu0 %v133, 126
  %v152 = vpop.permute.xlu0 %151
  %153 = vrot.lane.b32.xlu0 %v134, 126
  %v154 = vpop.permute.xlu0 %153
  %155 = vrot.lane.b32.xlu0 %v131, 122
  %v156 = vpop.permute.xlu0 %155
  %157 = vrot.lane.b32.xlu0 %v132, 122
  %v158 = vpop.permute.xlu0 %157
  %159 = vrot.lane.b32.xlu0 %v133, 122
  %v160 = vpop.permute.xlu0 %159
  %161 = vrot.lane.b32.xlu0 %v134, 122
  %v162 = vpop.permute.xlu0 %161
  %163 = vrot.lane.b32.xlu0 %v131, 121
  %v164 = vpop.permute.xlu0 %163
  %165 = vrot.lane.b32.xlu0 %v132, 121
  %v166 = vpop.permute.xlu0 %165
  %167 = vrot.lane.b32.xlu0 %v133, 121
  %v168 = vpop.permute.xlu0 %167
  %169 = vrot.lane.b32.xlu0 %v134, 121
  %v170 = vpop.permute.xlu0 %169
  %171 = vrot.lane.b32.xlu0 %v131, 120
  %v172 = vpop.permute.xlu0 %171
  %173 = vrot.lane.b32.xlu0 %v132, 120
  %v174 = vpop.permute.xlu0 %173
  %175 = vrot.lane.b32.xlu0 %v133, 120
  %v176 = vpop.permute.xlu0 %175
  %177 = vrot.lane.b32.xlu0 %v134, 120
  %v178 = vpop.permute.xlu0 %177
  %179 = vrot.lane.b32.xlu0 %v131, 116
  %v180 = vpop.permute.xlu0 %179
  %181 = vrot.lane.b32.xlu0 %v132, 116
  %v182 = vpop.permute.xlu0 %181
  %183 = vrot.lane.b32.xlu0 %v133, 116
  %v184 = vpop.permute.xlu0 %183
  %185 = vrot.lane.b32.xlu0 %v134, 116
  %v186 = vpop.permute.xlu0 %185
  %187 = vrot.lane.b32.xlu0 %v131, 115
  %v188 = vpop.permute.xlu0 %187
  %189 = vrot.lane.b32.xlu0 %v132, 115
  %v190 = vpop.permute.xlu0 %189
  %191 = vrot.lane.b32.xlu0 %v133, 115
  %v192 = vpop.permute.xlu0 %191
  %193 = vrot.lane.b32.xlu0 %v134, 115
  %v194 = vpop.permute.xlu0 %193
  %195 = vrot.lane.b32.xlu0 %v131, 114
  %v196 = vpop.permute.xlu0 %195
  %197 = vrot.lane.b32.xlu0 %v132, 114
  %v198 = vpop.permute.xlu0 %197
  %199 = vrot.lane.b32.xlu0 %v133, 114
  %v200 = vpop.permute.xlu0 %199
  %201 = vrot.lane.b32.xlu0 %v134, 114
  %v202 = vpop.permute.xlu0 %201
  %v203 = vld [vmem:[%s1] sm:$0xff]
  %v204 = vld [vmem:[%s1 + $0x8] sm:$0xff]
  %v205 = vld [vmem:[%s1 + $0x10] sm:$0xff]
  %v206 = vld [vmem:[%s1 + $0x18] sm:$0xff]
  %211 = vrot.lane.b32.xlu0 %v203, 127
  %v212 = vpop.permute.xlu0 %211
  %213 = vrot.lane.b32.xlu0 %v204, 127
  %v214 = vpop.permute.xlu0 %213
  %215 = vrot.lane.b32.xlu0 %v205, 127
  %v216 = vpop.permute.xlu0 %215
  %217 = vrot.lane.b32.xlu0 %v206, 127
  %v218 = vpop.permute.xlu0 %217
  %219 = vrot.lane.b32.xlu0 %v203, 126
  %v220 = vpop.permute.xlu0 %219
  %221 = vrot.lane.b32.xlu0 %v204, 126
  %v222 = vpop.permute.xlu0 %221
  %223 = vrot.lane.b32.xlu0 %v205, 126
  %v224 = vpop.permute.xlu0 %223
  %225 = vrot.lane.b32.xlu0 %v206, 126
  %v226 = vpop.permute.xlu0 %225
  %227 = vrot.lane.b32.xlu0 %v203, 118
  %v228 = vpop.permute.xlu0 %227
  %229 = vrot.lane.b32.xlu0 %v204, 118
  %v230 = vpop.permute.xlu0 %229
  %231 = vrot.lane.b32.xlu0 %v205, 118
  %v232 = vpop.permute.xlu0 %231
  %233 = vrot.lane.b32.xlu0 %v206, 118
  %v234 = vpop.permute.xlu0 %233
  %235 = vrot.lane.b32.xlu0 %v203, 117
  %v236 = vpop.permute.xlu0 %235
  %237 = vrot.lane.b32.xlu0 %v204, 117
  %v238 = vpop.permute.xlu0 %237
  %239 = vrot.lane.b32.xlu0 %v205, 117
  %v240 = vpop.permute.xlu0 %239
  %241 = vrot.lane.b32.xlu0 %v206, 117
  %v242 = vpop.permute.xlu0 %241
  %243 = vrot.lane.b32.xlu0 %v203, 116
  %v244 = vpop.permute.xlu0 %243
  %245 = vrot.lane.b32.xlu0 %v204, 116
  %v246 = vpop.permute.xlu0 %245
  %247 = vrot.lane.b32.xlu0 %v205, 116
  %v248 = vpop.permute.xlu0 %247
  %249 = vrot.lane.b32.xlu0 %v206, 116
  %v250 = vpop.permute.xlu0 %249
  %251 = vrot.lane.b32.xlu0 %v203, 108
  %v252 = vpop.permute.xlu0 %251
  %253 = vrot.lane.b32.xlu0 %v204, 108
  %v254 = vpop.permute.xlu0 %253
  %255 = vrot.lane.b32.xlu0 %v205, 108
  %v256 = vpop.permute.xlu0 %255
  %257 = vrot.lane.b32.xlu0 %v206, 108
  %v258 = vpop.permute.xlu0 %257
  %259 = vrot.lane.b32.xlu0 %v203, 107
  %v260 = vpop.permute.xlu0 %259
  %261 = vrot.lane.b32.xlu0 %v204, 107
  %v262 = vpop.permute.xlu0 %261
  %263 = vrot.lane.b32.xlu0 %v205, 107
  %v264 = vpop.permute.xlu0 %263
  %265 = vrot.lane.b32.xlu0 %v206, 107
  %v266 = vpop.permute.xlu0 %265
  %267 = vrot.lane.b32.xlu0 %v203, 106
  %v268 = vpop.permute.xlu0 %267
  %269 = vrot.lane.b32.xlu0 %v204, 106
  %v270 = vpop.permute.xlu0 %269
  %271 = vrot.lane.b32.xlu0 %v205, 106
  %v272 = vpop.permute.xlu0 %271
  %273 = vrot.lane.b32.xlu0 %v206, 106
  %v274 = vpop.permute.xlu0 %273
  %s275 = scalar_lea.vmem %s1, 32
  %v276 = vld [vmem:[%s275] sm:$0xff]
  %v277 = vld [vmem:[%s275 + $0x8] sm:$0xff]
  %v278 = vld [vmem:[%s275 + $0x10] sm:$0xff]
  %v279 = vld [vmem:[%s275 + $0x18] sm:$0xff]
  %284 = vrot.lane.b32.xlu0 %v276, 127
  %v285 = vpop.permute.xlu0 %284
  %286 = vrot.lane.b32.xlu0 %v277, 127
  %v287 = vpop.permute.xlu0 %286
  %288 = vrot.lane.b32.xlu0 %v278, 127
  %v289 = vpop.permute.xlu0 %288
  %290 = vrot.lane.b32.xlu0 %v279, 127
  %v291 = vpop.permute.xlu0 %290
  %292 = vrot.lane.b32.xlu0 %v276, 126
  %v293 = vpop.permute.xlu0 %292
  %294 = vrot.lane.b32.xlu0 %v277, 126
  %v295 = vpop.permute.xlu0 %294
  %296 = vrot.lane.b32.xlu0 %v278, 126
  %v297 = vpop.permute.xlu0 %296
  %298 = vrot.lane.b32.xlu0 %v279, 126
  %v299 = vpop.permute.xlu0 %298
  %300 = vrot.lane.b32.xlu0 %v276, 118
  %v301 = vpop.permute.xlu0 %300
  %302 = vrot.lane.b32.xlu0 %v277, 118
  %v303 = vpop.permute.xlu0 %302
  %304 = vrot.lane.b32.xlu0 %v278, 118
  %v305 = vpop.permute.xlu0 %304
  %306 = vrot.lane.b32.xlu0 %v279, 118
  %v307 = vpop.permute.xlu0 %306
  %308 = vrot.lane.b32.xlu0 %v276, 117
  %v309 = vpop.permute.xlu0 %308
  %310 = vrot.lane.b32.xlu0 %v277, 117
  %v311 = vpop.permute.xlu0 %310
  %312 = vrot.lane.b32.xlu0 %v278, 117
  %v313 = vpop.permute.xlu0 %312
  %314 = vrot.lane.b32.xlu0 %v279, 117
  %v315 = vpop.permute.xlu0 %314
  %316 = vrot.lane.b32.xlu0 %v276, 116
  %v317 = vpop.permute.xlu0 %316
  %318 = vrot.lane.b32.xlu0 %v277, 116
  %v319 = vpop.permute.xlu0 %318
  %320 = vrot.lane.b32.xlu0 %v278, 116
  %v321 = vpop.permute.xlu0 %320
  %322 = vrot.lane.b32.xlu0 %v279, 116
  %v323 = vpop.permute.xlu0 %322
  %324 = vrot.lane.b32.xlu0 %v276, 108
  %v325 = vpop.permute.xlu0 %324
  %326 = vrot.lane.b32.xlu0 %v277, 108
  %v327 = vpop.permute.xlu0 %326
  %328 = vrot.lane.b32.xlu0 %v278, 108
  %v329 = vpop.permute.xlu0 %328
  %330 = vrot.lane.b32.xlu0 %v279, 108
  %v331 = vpop.permute.xlu0 %330
  %332 = vrot.lane.b32.xlu0 %v276, 107
  %v333 = vpop.permute.xlu0 %332
  %334 = vrot.lane.b32.xlu0 %v277, 107
  %v335 = vpop.permute.xlu0 %334
  %336 = vrot.lane.b32.xlu0 %v278, 107
  %v337 = vpop.permute.xlu0 %336
  %338 = vrot.lane.b32.xlu0 %v279, 107
  %v339 = vpop.permute.xlu0 %338
  %340 = vrot.lane.b32.xlu0 %v276, 106
  %v341 = vpop.permute.xlu0 %340
  %342 = vrot.lane.b32.xlu0 %v277, 106
  %v343 = vpop.permute.xlu0 %342
  %344 = vrot.lane.b32.xlu0 %v278, 106
  %v345 = vpop.permute.xlu0 %344
  %346 = vrot.lane.b32.xlu0 %v279, 106
  %v347 = vpop.permute.xlu0 %346
  %348 = vrot.lane.b32.xlu0 %v131, 22
  %v349 = vpop.permute.xlu0 %348
  %350 = vrot.lane.b32.xlu0 %v132, 22
  %v351 = vpop.permute.xlu0 %350
  %352 = vrot.lane.b32.xlu0 %v133, 22
  %v353 = vpop.permute.xlu0 %352
  %354 = vrot.lane.b32.xlu0 %v134, 22
  %v355 = vpop.permute.xlu0 %354
  %356 = vrot.lane.b32.xlu0 %v140, 22
  %v357 = vpop.permute.xlu0 %356
  %358 = vrot.lane.b32.xlu0 %v142, 22
  %v359 = vpop.permute.xlu0 %358
  %360 = vrot.lane.b32.xlu0 %v144, 22
  %v361 = vpop.permute.xlu0 %360
  %362 = vrot.lane.b32.xlu0 %v146, 22
  %v363 = vpop.permute.xlu0 %362
  %364 = vrot.lane.b32.xlu0 %v148, 22
  %v365 = vpop.permute.xlu0 %364
  %366 = vrot.lane.b32.xlu0 %v150, 22
  %v367 = vpop.permute.xlu0 %366
  %368 = vrot.lane.b32.xlu0 %v152, 22
  %v369 = vpop.permute.xlu0 %368
  %370 = vrot.lane.b32.xlu0 %v154, 22
  %v371 = vpop.permute.xlu0 %370
  %372 = vrot.lane.b32.xlu0 %v156, 22
  %v373 = vpop.permute.xlu0 %372
  %374 = vrot.lane.b32.xlu0 %v158, 22
  %v375 = vpop.permute.xlu0 %374
  %376 = vrot.lane.b32.xlu0 %v160, 22
  %v377 = vpop.permute.xlu0 %376
  %378 = vrot.lane.b32.xlu0 %v162, 22
  %v379 = vpop.permute.xlu0 %378
  %380 = vrot.lane.b32.xlu0 %v164, 22
  %v381 = vpop.permute.xlu0 %380
  %382 = vrot.lane.b32.xlu0 %v166, 22
  %v383 = vpop.permute.xlu0 %382
  %384 = vrot.lane.b32.xlu0 %v168, 22
  %v385 = vpop.permute.xlu0 %384
  %386 = vrot.lane.b32.xlu0 %v170, 22
  %v387 = vpop.permute.xlu0 %386
  %388 = vrot.lane.b32.xlu0 %v172, 22
  %v389 = vpop.permute.xlu0 %388
  %390 = vrot.lane.b32.xlu0 %v174, 22
  %v391 = vpop.permute.xlu0 %390
  %392 = vrot.lane.b32.xlu0 %v176, 22
  %v393 = vpop.permute.xlu0 %392
  %394 = vrot.lane.b32.xlu0 %v178, 22
  %v395 = vpop.permute.xlu0 %394
  %396 = vrot.lane.b32.xlu0 %v180, 22
  %v397 = vpop.permute.xlu0 %396
  %398 = vrot.lane.b32.xlu0 %v182, 22
  %v399 = vpop.permute.xlu0 %398
  %400 = vrot.lane.b32.xlu0 %v184, 22
  %v401 = vpop.permute.xlu0 %400
  %402 = vrot.lane.b32.xlu0 %v186, 22
  %v403 = vpop.permute.xlu0 %402
  %404 = vrot.lane.b32.xlu0 %v188, 22
  %v405 = vpop.permute.xlu0 %404
  %406 = vrot.lane.b32.xlu0 %v190, 22
  %v407 = vpop.permute.xlu0 %406
  %408 = vrot.lane.b32.xlu0 %v192, 22
  %v409 = vpop.permute.xlu0 %408
  %410 = vrot.lane.b32.xlu0 %v194, 22
  %v411 = vpop.permute.xlu0 %410
  %412 = vrot.lane.b32.xlu0 %v196, 22
  %v413 = vpop.permute.xlu0 %412
  %414 = vrot.lane.b32.xlu0 %v198, 22
  %v415 = vpop.permute.xlu0 %414
  %416 = vrot.lane.b32.xlu0 %v200, 22
  %v417 = vpop.permute.xlu0 %416
  %418 = vrot.lane.b32.xlu0 %v202, 22
  %v419 = vpop.permute.xlu0 %418
  %456 = vrot.lane.b32.xlu0 %v203, 44
  %v457 = vpop.permute.xlu0 %456
  %458 = vrot.lane.b32.xlu0 %v204, 44
  %v459 = vpop.permute.xlu0 %458
  %460 = vrot.lane.b32.xlu0 %v205, 44
  %v461 = vpop.permute.xlu0 %460
  %462 = vrot.lane.b32.xlu0 %v206, 44
  %v463 = vpop.permute.xlu0 %462
  %464 = vrot.lane.b32.xlu0 %v212, 44
  %v465 = vpop.permute.xlu0 %464
  %466 = vrot.lane.b32.xlu0 %v214, 44
  %v467 = vpop.permute.xlu0 %466
  %468 = vrot.lane.b32.xlu0 %v216, 44
  %v469 = vpop.permute.xlu0 %468
  %470 = vrot.lane.b32.xlu0 %v218, 44
  %v471 = vpop.permute.xlu0 %470
  %472 = vrot.lane.b32.xlu0 %v220, 44
  %v473 = vpop.permute.xlu0 %472
  %474 = vrot.lane.b32.xlu0 %v222, 44
  %v475 = vpop.permute.xlu0 %474
  %476 = vrot.lane.b32.xlu0 %v224, 44
  %v477 = vpop.permute.xlu0 %476
  %478 = vrot.lane.b32.xlu0 %v226, 44
  %v479 = vpop.permute.xlu0 %478
  %480 = vrot.lane.b32.xlu0 %v228, 44
  %v481 = vpop.permute.xlu0 %480
  %482 = vrot.lane.b32.xlu0 %v230, 44
  %v483 = vpop.permute.xlu0 %482
  %484 = vrot.lane.b32.xlu0 %v232, 44
  %v485 = vpop.permute.xlu0 %484
  %486 = vrot.lane.b32.xlu0 %v234, 44
  %v487 = vpop.permute.xlu0 %486
  %488 = vrot.lane.b32.xlu0 %v236, 44
  %v489 = vpop.permute.xlu0 %488
  %490 = vrot.lane.b32.xlu0 %v238, 44
  %v491 = vpop.permute.xlu0 %490
  %492 = vrot.lane.b32.xlu0 %v240, 44
  %v493 = vpop.permute.xlu0 %492
  %494 = vrot.lane.b32.xlu0 %v242, 44
  %v495 = vpop.permute.xlu0 %494
  %496 = vrot.lane.b32.xlu0 %v244, 44
  %v497 = vpop.permute.xlu0 %496
  %498 = vrot.lane.b32.xlu0 %v246, 44
  %v499 = vpop.permute.xlu0 %498
  %500 = vrot.lane.b32.xlu0 %v248, 44
  %v501 = vpop.permute.xlu0 %500
  %502 = vrot.lane.b32.xlu0 %v250, 44
  %v503 = vpop.permute.xlu0 %502
  %504 = vrot.lane.b32.xlu0 %v252, 44
  %v505 = vpop.permute.xlu0 %504
  %506 = vrot.lane.b32.xlu0 %v254, 44
  %v507 = vpop.permute.xlu0 %506
  %508 = vrot.lane.b32.xlu0 %v256, 44
  %v509 = vpop.permute.xlu0 %508
  %510 = vrot.lane.b32.xlu0 %v258, 44
  %v511 = vpop.permute.xlu0 %510
  %512 = vrot.lane.b32.xlu0 %v260, 44
  %v513 = vpop.permute.xlu0 %512
  %514 = vrot.lane.b32.xlu0 %v262, 44
  %v515 = vpop.permute.xlu0 %514
  %516 = vrot.lane.b32.xlu0 %v264, 44
  %v517 = vpop.permute.xlu0 %516
  %518 = vrot.lane.b32.xlu0 %v266, 44
  %v519 = vpop.permute.xlu0 %518
  %520 = vrot.lane.b32.xlu0 %v268, 44
  %v521 = vpop.permute.xlu0 %520
  %522 = vrot.lane.b32.xlu0 %v270, 44
  %v523 = vpop.permute.xlu0 %522
  %524 = vrot.lane.b32.xlu0 %v272, 44
  %v525 = vpop.permute.xlu0 %524
  %526 = vrot.lane.b32.xlu0 %v274, 44
  %v527 = vpop.permute.xlu0 %526
  %564 = vrot.lane.b32.xlu0 %v276, 122
  %v565 = vpop.permute.xlu0 %564
  %566 = vrot.lane.b32.xlu0 %v277, 122
  %v567 = vpop.permute.xlu0 %566
  %568 = vrot.lane.b32.xlu0 %v278, 122
  %v569 = vpop.permute.xlu0 %568
  %570 = vrot.lane.b32.xlu0 %v279, 122
  %v571 = vpop.permute.xlu0 %570
  %572 = vrot.lane.b32.xlu0 %v285, 122
  %v573 = vpop.permute.xlu0 %572
  %574 = vrot.lane.b32.xlu0 %v287, 122
  %v575 = vpop.permute.xlu0 %574
  %576 = vrot.lane.b32.xlu0 %v289, 122
  %v577 = vpop.permute.xlu0 %576
  %578 = vrot.lane.b32.xlu0 %v291, 122
  %v579 = vpop.permute.xlu0 %578
  %580 = vrot.lane.b32.xlu0 %v293, 122
  %v581 = vpop.permute.xlu0 %580
  %582 = vrot.lane.b32.xlu0 %v295, 122
  %v583 = vpop.permute.xlu0 %582
  %584 = vrot.lane.b32.xlu0 %v297, 122
  %v585 = vpop.permute.xlu0 %584
  %586 = vrot.lane.b32.xlu0 %v299, 122
  %v587 = vpop.permute.xlu0 %586
  %588 = vrot.lane.b32.xlu0 %v301, 122
  %v589 = vpop.permute.xlu0 %588
  %590 = vrot.lane.b32.xlu0 %v303, 122
  %v591 = vpop.permute.xlu0 %590
  %592 = vrot.lane.b32.xlu0 %v305, 122
  %v593 = vpop.permute.xlu0 %592
  %594 = vrot.lane.b32.xlu0 %v307, 122
  %v595 = vpop.permute.xlu0 %594
  %596 = vrot.lane.b32.xlu0 %v309, 122
  %v597 = vpop.permute.xlu0 %596
  %598 = vrot.lane.b32.xlu0 %v311, 122
  %v599 = vpop.permute.xlu0 %598
  %600 = vrot.lane.b32.xlu0 %v313, 122
  %v601 = vpop.permute.xlu0 %600
  %602 = vrot.lane.b32.xlu0 %v315, 122
  %v603 = vpop.permute.xlu0 %602
  %604 = vrot.lane.b32.xlu0 %v317, 122
  %v605 = vpop.permute.xlu0 %604
  %606 = vrot.lane.b32.xlu0 %v319, 122
  %v607 = vpop.permute.xlu0 %606
  %608 = vrot.lane.b32.xlu0 %v321, 122
  %v609 = vpop.permute.xlu0 %608
  %610 = vrot.lane.b32.xlu0 %v323, 122
  %v611 = vpop.permute.xlu0 %610
  %612 = vrot.lane.b32.xlu0 %v325, 122
  %v613 = vpop.permute.xlu0 %612
  %614 = vrot.lane.b32.xlu0 %v327, 122
  %v615 = vpop.permute.xlu0 %614
  %616 = vrot.lane.b32.xlu0 %v329, 122
  %v617 = vpop.permute.xlu0 %616
  %618 = vrot.lane.b32.xlu0 %v331, 122
  %v619 = vpop.permute.xlu0 %618
  %620 = vrot.lane.b32.xlu0 %v333, 122
  %v621 = vpop.permute.xlu0 %620
  %622 = vrot.lane.b32.xlu0 %v335, 122
  %v623 = vpop.permute.xlu0 %622
  %624 = vrot.lane.b32.xlu0 %v337, 122
  %v625 = vpop.permute.xlu0 %624
  %626 = vrot.lane.b32.xlu0 %v339, 122
  %v627 = vpop.permute.xlu0 %626
  %628 = vrot.lane.b32.xlu0 %v341, 122
  %v629 = vpop.permute.xlu0 %628
  %630 = vrot.lane.b32.xlu0 %v343, 122
  %v631 = vpop.permute.xlu0 %630
  %632 = vrot.lane.b32.xlu0 %v345, 122
  %v633 = vpop.permute.xlu0 %632
  %634 = vrot.lane.b32.xlu0 %v347, 122
  %v635 = vpop.permute.xlu0 %634
  %vm672 = vcmask 179200
  %v673 = vsel %vm672, %v26, %v349
  %v674 = vsel %vm672, %v27, %v351
  %v675 = vsel %vm672, %v28, %v353
  %v676 = vsel %vm672, %v29, %v355
  %v677 = vsel %vm672, %v35, %v357
  %v678 = vsel %vm672, %v37, %v359
  %v679 = vsel %vm672, %v39, %v361
  %v680 = vsel %vm672, %v41, %v363
  %v681 = vsel %vm672, %v47, %v365
  %v682 = vsel %vm672, %v49, %v367
  %v683 = vsel %vm672, %v51, %v369
  %v684 = vsel %vm672, %v53, %v371
  %v685 = vsel %vm672, %v59, %v373
  %v686 = vsel %vm672, %v61, %v375
  %v687 = vsel %vm672, %v63, %v377
  %v688 = vsel %vm672, %v65, %v379
  %v689 = vsel %vm672, %v71, %v381
  %v690 = vsel %vm672, %v73, %v383
  %v691 = vsel %vm672, %v75, %v385
  %v692 = vsel %vm672, %v77, %v387
  %v693 = vsel %vm672, %v83, %v389
  %v694 = vsel %vm672, %v85, %v391
  %v695 = vsel %vm672, %v87, %v393
  %v696 = vsel %vm672, %v89, %v395
  %v697 = vsel %vm672, %v95, %v397
  %v698 = vsel %vm672, %v97, %v399
  %v699 = vsel %vm672, %v99, %v401
  %v700 = vsel %vm672, %v101, %v403
  %v701 = vsel %vm672, %v107, %v405
  %v702 = vsel %vm672, %v109, %v407
  %v703 = vsel %vm672, %v111, %v409
  %v704 = vsel %vm672, %v113, %v411
  %v705 = vsel %vm672, %v119, %v413
  %v706 = vsel %vm672, %v121, %v415
  %v707 = vsel %vm672, %v123, %v417
  %v708 = vsel %vm672, %v125, %v419
  %vm709 = vcmask 359424
  %v710 = vsel %vm709, %v673, %v457
  %v711 = vsel %vm709, %v674, %v459
  %v712 = vsel %vm709, %v675, %v461
  %v713 = vsel %vm709, %v676, %v463
  %v714 = vsel %vm709, %v677, %v465
  %v715 = vsel %vm709, %v678, %v467
  %v716 = vsel %vm709, %v679, %v469
  %v717 = vsel %vm709, %v680, %v471
  %v718 = vsel %vm709, %v681, %v473
  %v719 = vsel %vm709, %v682, %v475
  %v720 = vsel %vm709, %v683, %v477
  %v721 = vsel %vm709, %v684, %v479
  %v722 = vsel %vm709, %v685, %v481
  %v723 = vsel %vm709, %v686, %v483
  %v724 = vsel %vm709, %v687, %v485
  %v725 = vsel %vm709, %v688, %v487
  %v726 = vsel %vm709, %v689, %v489
  %v727 = vsel %vm709, %v690, %v491
  %v728 = vsel %vm709, %v691, %v493
  %v729 = vsel %vm709, %v692, %v495
  %v730 = vsel %vm709, %v693, %v497
  %v731 = vsel %vm709, %v694, %v499
  %v732 = vsel %vm709, %v695, %v501
  %v733 = vsel %vm709, %v696, %v503
  %v734 = vsel %vm709, %v697, %v505
  %v735 = vsel %vm709, %v698, %v507
  %v736 = vsel %vm709, %v699, %v509
  %v737 = vsel %vm709, %v700, %v511
  %v738 = vsel %vm709, %v701, %v513
  %v739 = vsel %vm709, %v702, %v515
  %v740 = vsel %vm709, %v703, %v517
  %v741 = vsel %vm709, %v704, %v519
  %v742 = vsel %vm709, %v705, %v521
  %v743 = vsel %vm709, %v706, %v523
  %v744 = vsel %vm709, %v707, %v525
  %v745 = vsel %vm709, %v708, %v527
  %vm746 = vcmask 998400
  %v747 = vsel %vm746, %v710, %v565
  %v748 = vsel %vm746, %v711, %v567
  %v749 = vsel %vm746, %v712, %v569
  %v750 = vsel %vm746, %v713, %v571
  %v751 = vsel %vm746, %v714, %v573
  %v752 = vsel %vm746, %v715, %v575
  %v753 = vsel %vm746, %v716, %v577
  %v754 = vsel %vm746, %v717, %v579
  %v755 = vsel %vm746, %v718, %v581
  %v756 = vsel %vm746, %v719, %v583
  %v757 = vsel %vm746, %v720, %v585
  %v758 = vsel %vm746, %v721, %v587
  %v759 = vsel %vm746, %v722, %v589
  %v760 = vsel %vm746, %v723, %v591
  %v761 = vsel %vm746, %v724, %v593
  %v762 = vsel %vm746, %v725, %v595
  %v763 = vsel %vm746, %v726, %v597
  %v764 = vsel %vm746, %v727, %v599
  %v765 = vsel %vm746, %v728, %v601
  %v766 = vsel %vm746, %v729, %v603
  %v767 = vsel %vm746, %v730, %v605
  %v768 = vsel %vm746, %v731, %v607
  %v769 = vsel %vm746, %v732, %v609
  %v770 = vsel %vm746, %v733, %v611
  %v771 = vsel %vm746, %v734, %v613
  %v772 = vsel %vm746, %v735, %v615
  %v773 = vsel %vm746, %v736, %v617
  %v774 = vsel %vm746, %v737, %v619
  %v775 = vsel %vm746, %v738, %v621
  %v776 = vsel %vm746, %v739, %v623
  %v777 = vsel %vm746, %v740, %v625
  %v778 = vsel %vm746, %v741, %v627
  %v779 = vsel %vm746, %v742, %v629
  %v780 = vsel %vm746, %v743, %v631
  %v781 = vsel %vm746, %v744, %v633
  %v782 = vsel %vm746, %v745, %v635
  %v783 = vld [vmem:[%s2] sm:$0xff]
  %v784 = vld [vmem:[%s2 + $0x8] sm:$0xf]
  %v785 = vld [vmem:[%s2 + $0xc] sm:$0xff]
  %v786 = vld [vmem:[%s2 + $0x14] sm:$0xf]
  %v787 = vld [vmem:[%s2 + $0x18] sm:$0xff]
  %v788 = vld [vmem:[%s2 + $0x20] sm:$0xf]
  %v789 = vld [vmem:[%s2 + $0x24] sm:$0xff]
  %v790 = vld [vmem:[%s2 + $0x2c] sm:$0xf]
  %v791 = vld [vmem:[%s2 + $0x30] sm:$0xff]
  %v792 = vld [vmem:[%s2 + $0x38] sm:$0xf]
  %v793 = vld [vmem:[%s2 + $0x3c] sm:$0xff]
  %v794 = vld [vmem:[%s2 + $0x44] sm:$0xf]
  %v795 = vld [vmem:[%s2 + $0x48] sm:$0xff]
  %v796 = vld [vmem:[%s2 + $0x50] sm:$0xf]
  %v797 = vld [vmem:[%s2 + $0x54] sm:$0xff]
  %v798 = vld [vmem:[%s2 + $0x5c] sm:$0xf]
  %v799 = vld [vmem:[%s2 + $0x60] sm:$0xff]
  %v800 = vld [vmem:[%s2 + $0x68] sm:$0xf]
  %v801 = vld [vmem:[%s2 + $0x6c] sm:$0xff]
  %v802 = vld [vmem:[%s2 + $0x74] sm:$0xf]
  %v803 = vld [vmem:[%s2 + $0x78] sm:$0xff]
  %v804 = vld [vmem:[%s2 + $0x80] sm:$0xf]
  %v805 = vld [vmem:[%s2 + $0x84] sm:$0xff]
  %v806 = vld [vmem:[%s2 + $0x8c] sm:$0xf]
  %v807 = vld [vmem:[%s2 + $0x90] sm:$0xff]
  %v808 = vld [vmem:[%s2 + $0x98] sm:$0xf]
  %v809 = vld [vmem:[%s2 + $0x9c] sm:$0xff]
  %v810 = vld [vmem:[%s2 + $0xa4] sm:$0xf]
  %v811 = vld [vmem:[%s2 + $0xa8] sm:$0xff]
  %v812 = vld [vmem:[%s2 + $0xb0] sm:$0xf]
  %v813 = vld [vmem:[%s2 + $0xb4] sm:$0xff]
  %v814 = vld [vmem:[%s2 + $0xbc] sm:$0xf]
  %v815 = vpack.c.bf16 %v748, %v747
  %v816 = vpack.c.bf16 %v567, %v565
  %v817 = vpack.c.bf16 %v750, %v749
  %v818 = vpack.c.bf16 %v571, %v569
  %v819 = vpack.c.bf16 %v752, %v751
  %v820 = vpack.c.bf16 %v575, %v573
  %v821 = vpack.c.bf16 %v754, %v753
  %v822 = vpack.c.bf16 %v579, %v577
  %v823 = vpack.c.bf16 %v756, %v755
  %v824 = vpack.c.bf16 %v583, %v581
  %v825 = vpack.c.bf16 %v758, %v757
  %v826 = vpack.c.bf16 %v587, %v585
  %v827 = vpack.c.bf16 %v760, %v759
  %v828 = vpack.c.bf16 %v591, %v589
  %v829 = vpack.c.bf16 %v762, %v761
  %v830 = vpack.c.bf16 %v595, %v593
  %v831 = vpack.c.bf16 %v764, %v763
  %v832 = vpack.c.bf16 %v599, %v597
  %v833 = vpack.c.bf16 %v766, %v765
  %v834 = vpack.c.bf16 %v603, %v601
  %v835 = vpack.c.bf16 %v768, %v767
  %v836 = vpack.c.bf16 %v607, %v605
  %v837 = vpack.c.bf16 %v770, %v769
  %v838 = vpack.c.bf16 %v611, %v609
  %v839 = vpack.c.bf16 %v772, %v771
  %v840 = vpack.c.bf16 %v615, %v613
  %v841 = vpack.c.bf16 %v774, %v773
  %v842 = vpack.c.bf16 %v619, %v617
  %v843 = vpack.c.bf16 %v776, %v775
  %v844 = vpack.c.bf16 %v623, %v621
  %v845 = vpack.c.bf16 %v778, %v777
  %v846 = vpack.c.bf16 %v627, %v625
  %v847 = vpack.c.bf16 %v780, %v779
  %v848 = vpack.c.bf16 %v631, %v629
  %v849 = vpack.c.bf16 %v782, %v781
  %v850 = vpack.c.bf16 %v635, %v633
  %v883 = vunpack.c.l.b16 %v783
  %v884 = vunpack.c.h.b16 %v783
  %v885 = vunpack.c.l.b16 %v784
  %v886 = vunpack.c.l.b16 %v785
  %v887 = vunpack.c.h.b16 %v785
  %v888 = vunpack.c.l.b16 %v786
  %v889 = vunpack.c.l.b16 %v787
  %v890 = vunpack.c.h.b16 %v787
  %v891 = vunpack.c.l.b16 %v788
  %v892 = vunpack.c.l.b16 %v789
  %v893 = vunpack.c.h.b16 %v789
  %v894 = vunpack.c.l.b16 %v790
  %v895 = vunpack.c.l.b16 %v791
  %v896 = vunpack.c.h.b16 %v791
  %v897 = vunpack.c.l.b16 %v792
  %v898 = vunpack.c.l.b16 %v793
  %v899 = vunpack.c.h.b16 %v793
  %v900 = vunpack.c.l.b16 %v794
  %v901 = vunpack.c.l.b16 %v795
  %v902 = vunpack.c.h.b16 %v795
  %v903 = vunpack.c.l.b16 %v796
  %v904 = vunpack.c.l.b16 %v797
  %v905 = vunpack.c.h.b16 %v797
  %v906 = vunpack.c.l.b16 %v798
  %v907 = vunpack.c.l.b16 %v799
  %v908 = vunpack.c.h.b16 %v799
  %v909 = vunpack.c.l.b16 %v800
  %v910 = vunpack.c.l.b16 %v801
  %v911 = vunpack.c.h.b16 %v801
  %v912 = vunpack.c.l.b16 %v802
  %v913 = vunpack.c.l.b16 %v803
  %v914 = vunpack.c.h.b16 %v803
  %v915 = vunpack.c.l.b16 %v804
  %v916 = vunpack.c.l.b16 %v805
  %v917 = vunpack.c.h.b16 %v805
  %v918 = vunpack.c.l.b16 %v806
  %v919 = vunpack.c.l.b16 %v807
  %v920 = vunpack.c.h.b16 %v807
  %v921 = vunpack.c.l.b16 %v808
  %v922 = vunpack.c.l.b16 %v809
  %v923 = vunpack.c.h.b16 %v809
  %v924 = vunpack.c.l.b16 %v810
  %v925 = vunpack.c.l.b16 %v811
  %v926 = vunpack.c.h.b16 %v811
  %v927 = vunpack.c.l.b16 %v812
  %v928 = vunpack.c.l.b16 %v813
  %v929 = vunpack.c.h.b16 %v813
  %v930 = vunpack.c.l.b16 %v814
  %v931 = vpack.c.b16 %v886, %v883
  %v932 = vpack.c.b16 %v887, %v884
  %v933 = vpack.c.b16 %v888, %v885
  %v934 = vpack.c.b16 %v892, %v889
  %v935 = vpack.c.b16 %v893, %v890
  %v936 = vpack.c.b16 %v894, %v891
  %v937 = vpack.c.b16 %v898, %v895
  %v938 = vpack.c.b16 %v899, %v896
  %v939 = vpack.c.b16 %v900, %v897
  %v940 = vpack.c.b16 %v904, %v901
  %v941 = vpack.c.b16 %v905, %v902
  %v942 = vpack.c.b16 %v906, %v903
  %v943 = vpack.c.b16 %v910, %v907
  %v944 = vpack.c.b16 %v911, %v908
  %v945 = vpack.c.b16 %v912, %v909
  %v946 = vpack.c.b16 %v916, %v913
  %v947 = vpack.c.b16 %v917, %v914
  %v948 = vpack.c.b16 %v918, %v915
  %v949 = vpack.c.b16 %v922, %v919
  %v950 = vpack.c.b16 %v923, %v920
  %v951 = vpack.c.b16 %v924, %v921
  %v952 = vpack.c.b16 %v928, %v925
  %v953 = vpack.c.b16 %v929, %v926
  %v954 = vpack.c.b16 %v930, %v927
  %vm971 = vcmask 261120
  %v973 = vsel %vm971, %v933, 0
  %v976 = vsel %vm971, %v936, 0
  %v979 = vsel %vm971, %v939, 0
  %v982 = vsel %vm971, %v942, 0
  %v985 = vsel %vm971, %v945, 0
  %v988 = vsel %vm971, %v948, 0
  %v991 = vsel %vm971, %v951, 0
  %v994 = vsel %vm971, %v954, 0
  %996 = vmatprep.subr.bf16.mxu0 %v830
  %997 = vmatpush1.bf16.msra.mxu0 %v829
  %998 = vmatprep.subr.bf16.mxu0 %v828
  %999 = vmatpush1.bf16.msra.mxu0 %v827
  %1000 = vmatprep.subr.bf16.mxu0 %v826
  %1001 = vmatpush1.bf16.msra.mxu0 %v825
  %1002 = vmatprep.subr.bf16.mxu0 %v824
  %1003 = vmatpush1.bf16.msra.mxu0 %v823
  %1004 = vmatprep.subr.bf16.mxu0 %v822
  %1005 = vmatpush1.bf16.msra.mxu0 %v821
  %1006 = vmatprep.subr.bf16.mxu0 %v820
  %1007 = vmatpush1.bf16.msra.mxu0 %v819
  %1008 = vmatprep.subr.bf16.mxu0 %v818
  %1009 = vmatpush1.bf16.msra.mxu0 %v817
  %1010 = vmatprep.subr.bf16.mxu0 %v816
  %1011 = vmatpush1.bf16.msra.mxu0 %v815
  %1012 = vmatprep.subr.bf16.mxu0 %v846
  %1013 = vmatpush2.bf16.msra.mxu0 %v845
  %1014 = vmatprep.subr.bf16.mxu0 %v844
  %1015 = vmatpush2.bf16.msra.mxu0 %v843
  %1016 = vmatprep.subr.bf16.mxu0 %v842
  %1017 = vmatpush2.bf16.msra.mxu0 %v841
  %1018 = vmatprep.subr.bf16.mxu0 %v840
  %1019 = vmatpush2.bf16.msra.mxu0 %v839
  %1020 = vmatprep.subr.bf16.mxu0 %v838
  %1021 = vmatpush2.bf16.msra.mxu0 %v837
  %1022 = vmatprep.subr.bf16.mxu0 %v836
  %1023 = vmatpush2.bf16.msra.mxu0 %v835
  %1024 = vmatprep.subr.bf16.mxu0 %v834
  %1025 = vmatpush2.bf16.msra.mxu0 %v833
  %1026 = vmatprep.subr.bf16.mxu0 %v832
  %1027 = vmatpush2.bf16.msra.mxu0 %v831
  %1028 = vmatprep.mubr.bf16.mxu0 %v932
  %1029 = vmatmul.mubr.bf16.gmra.mxu0 %v931
  %v1030 = vpop.f32.mrf.mxu0
  %v1031 = vadd.f32 0.0, %v1030
  %v1032 = vpop.f32.mrf.mxu0
  %v1033 = vpop.f32.mrf.mxu0
  %v1034 = vadd.f32 0.0, %v1033
  %v1035 = vpop.f32.mrf.mxu0
  %1036 = vmatprep.mubr.bf16.mxu0 %v935
  %1037 = vmatmul.mubr.bf16.gmra.mxu0 %v934
  %v1038 = vpop.f32.mrf.mxu0
  %v1039 = vadd.f32 0.0, %v1038
  %v1040 = vpop.f32.mrf.mxu0
  %v1041 = vpop.f32.mrf.mxu0
  %v1042 = vadd.f32 0.0, %v1041
  %v1043 = vpop.f32.mrf.mxu0
  %1044 = vmatprep.mubr.bf16.mxu0 %v938
  %1045 = vmatmul.mubr.bf16.gmra.mxu0 %v937
  %v1046 = vpop.f32.mrf.mxu0
  %v1047 = vadd.f32 0.0, %v1046
  %v1048 = vpop.f32.mrf.mxu0
  %v1049 = vpop.f32.mrf.mxu0
  %v1050 = vadd.f32 0.0, %v1049
  %v1051 = vpop.f32.mrf.mxu0
  %1052 = vmatprep.mubr.bf16.mxu0 %v941
  %1053 = vmatmul.mubr.bf16.gmra.mxu0 %v940
  %v1054 = vpop.f32.mrf.mxu0
  %v1055 = vadd.f32 0.0, %v1054
  %v1056 = vpop.f32.mrf.mxu0
  %v1057 = vpop.f32.mrf.mxu0
  %v1058 = vadd.f32 0.0, %v1057
  %v1059 = vpop.f32.mrf.mxu0
  %1060 = vmatprep.mubr.bf16.mxu0 %v944
  %1061 = vmatmul.mubr.bf16.gmra.mxu0 %v943
  %v1062 = vpop.f32.mrf.mxu0
  %v1063 = vadd.f32 0.0, %v1062
  %v1064 = vpop.f32.mrf.mxu0
  %v1065 = vadd.f32 0.0, %v1064
  %v1066 = vpop.f32.mrf.mxu0
  %v1067 = vadd.f32 0.0, %v1066
  %v1068 = vpop.f32.mrf.mxu0
  %v1069 = vadd.f32 0.0, %v1068
  %1070 = vmatprep.mubr.bf16.mxu0 %v947
  %1071 = vmatmul.mubr.bf16.gmra.mxu0 %v946
  %v1072 = vpop.f32.mrf.mxu0
  %v1073 = vadd.f32 0.0, %v1072
  %v1074 = vpop.f32.mrf.mxu0
  %v1075 = vadd.f32 0.0, %v1074
  %v1076 = vpop.f32.mrf.mxu0
  %v1077 = vadd.f32 0.0, %v1076
  %v1078 = vpop.f32.mrf.mxu0
  %v1079 = vadd.f32 0.0, %v1078
  %1080 = vmatprep.mubr.bf16.mxu0 %v950
  %1081 = vmatmul.mubr.bf16.gmra.mxu0 %v949
  %v1082 = vpop.f32.mrf.mxu0
  %v1083 = vadd.f32 0.0, %v1082
  %v1084 = vpop.f32.mrf.mxu0
  %v1085 = vadd.f32 0.0, %v1084
  %v1086 = vpop.f32.mrf.mxu0
  %v1087 = vadd.f32 0.0, %v1086
  %v1088 = vpop.f32.mrf.mxu0
  %v1089 = vadd.f32 0.0, %v1088
  %1090 = vmatprep.mubr.bf16.mxu0 %v953
  %1091 = vmatmul.mubr.bf16.gmra.mxu0 %v952
  %v1092 = vpop.f32.mrf.mxu0
  %v1093 = vadd.f32 0.0, %v1092
  %v1094 = vpop.f32.mrf.mxu0
  %v1095 = vadd.f32 0.0, %v1094
  %v1096 = vpop.f32.mrf.mxu0
  %v1097 = vadd.f32 0.0, %v1096
  %v1098 = vpop.f32.mrf.mxu0
  %v1099 = vadd.f32 0.0, %v1098
  %1100 = vdwg.mxu0
  %1101 = vmatprep.subr.bf16.mxu0 0
  %1102 = vmatpush1.bf16.msra.mxu0 0
  %1103 = vmatprep.subr.bf16.mxu0 0
  %1104 = vmatpush1.bf16.msra.mxu0 0
  %1105 = vmatprep.subr.bf16.mxu0 0
  %1106 = vmatpush1.bf16.msra.mxu0 0
  %1107 = vmatprep.subr.bf16.mxu0 0
  %1108 = vmatpush1.bf16.msra.mxu0 0
  %1109 = vmatprep.subr.bf16.mxu0 0
  %1110 = vmatpush1.bf16.msra.mxu0 0
  %1111 = vmatprep.subr.bf16.mxu0 0
  %1112 = vmatpush1.bf16.msra.mxu0 0
  %1113 = vmatprep.subr.bf16.mxu0 %v850
  %1114 = vmatpush1.bf16.msra.mxu0 %v849
  %1115 = vmatprep.subr.bf16.mxu0 %v848
  %1116 = vmatpush1.bf16.msra.mxu0 %v847
  %1117 = vmatprep.subr.bf16.mxu0 0
  %1118 = vmatpush2.bf16.msra.mxu0 0
  %1119 = vmatprep.subr.bf16.mxu0 0
  %1120 = vmatpush2.bf16.msra.mxu0 0
  %1121 = vmatprep.subr.bf16.mxu0 0
  %1122 = vmatpush2.bf16.msra.mxu0 0
  %1123 = vmatprep.subr.bf16.mxu0 0
  %1124 = vmatpush2.bf16.msra.mxu0 0
  %1125 = vmatprep.subr.bf16.mxu0 0
  %1126 = vmatpush2.bf16.msra.mxu0 0
  %1127 = vmatprep.subr.bf16.mxu0 0
  %1128 = vmatpush2.bf16.msra.mxu0 0
  %1129 = vmatprep.subr.bf16.mxu0 0
  %1130 = vmatpush2.bf16.msra.mxu0 0
  %1131 = vmatprep.subr.bf16.mxu0 0
  %1132 = vmatpush2.bf16.msra.mxu0 0
  %1133 = vmatprep.mubr.bf16.mxu0 0
  %1134 = vmatmul.mubr.bf16.gmra.mxu0 %v973
  %v1135 = vpop.f32.mrf.mxu0
  %v1136 = vadd.f32 %v1031, %v1135
  %v1137 = vpop.f32.mrf.mxu0
  %v1138 = vpop.f32.mrf.mxu0
  %v1139 = vadd.f32 %v1034, %v1138
  %v1140 = vpop.f32.mrf.mxu0
  %1141 = vmatprep.mubr.bf16.mxu0 0
  %1142 = vmatmul.mubr.bf16.gmra.mxu0 %v976
  %v1143 = vpop.f32.mrf.mxu0
  %v1144 = vadd.f32 %v1039, %v1143
  %v1145 = vpop.f32.mrf.mxu0
  %v1146 = vpop.f32.mrf.mxu0
  %v1147 = vadd.f32 %v1042, %v1146
  %v1148 = vpop.f32.mrf.mxu0
  %1149 = vmatprep.mubr.bf16.mxu0 0
  %1150 = vmatmul.mubr.bf16.gmra.mxu0 %v979
  %v1151 = vpop.f32.mrf.mxu0
  %v1152 = vadd.f32 %v1047, %v1151
  %v1153 = vpop.f32.mrf.mxu0
  %v1154 = vpop.f32.mrf.mxu0
  %v1155 = vadd.f32 %v1050, %v1154
  %v1156 = vpop.f32.mrf.mxu0
  %1157 = vmatprep.mubr.bf16.mxu0 0
  %1158 = vmatmul.mubr.bf16.gmra.mxu0 %v982
  %v1159 = vpop.f32.mrf.mxu0
  %v1160 = vadd.f32 %v1055, %v1159
  %v1161 = vpop.f32.mrf.mxu0
  %v1162 = vpop.f32.mrf.mxu0
  %v1163 = vadd.f32 %v1058, %v1162
  %v1164 = vpop.f32.mrf.mxu0
  %1165 = vmatprep.mubr.bf16.mxu0 0
  %1166 = vmatmul.mubr.bf16.gmra.mxu0 %v985
  %v1167 = vpop.f32.mrf.mxu0
  %v1168 = vadd.f32 %v1063, %v1167
  %v1169 = vpop.f32.mrf.mxu0
  %v1170 = vadd.f32 %v1065, %v1169
  %v1171 = vpop.f32.mrf.mxu0
  %v1172 = vadd.f32 %v1067, %v1171
  %v1173 = vpop.f32.mrf.mxu0
  %v1174 = vadd.f32 %v1069, %v1173
  %1175 = vmatprep.mubr.bf16.mxu0 0
  %1176 = vmatmul.mubr.bf16.gmra.mxu0 %v988
  %v1177 = vpop.f32.mrf.mxu0
  %v1178 = vadd.f32 %v1073, %v1177
  %v1179 = vpop.f32.mrf.mxu0
  %v1180 = vadd.f32 %v1075, %v1179
  %v1181 = vpop.f32.mrf.mxu0
  %v1182 = vadd.f32 %v1077, %v1181
  %v1183 = vpop.f32.mrf.mxu0
  %v1184 = vadd.f32 %v1079, %v1183
  %1185 = vmatprep.mubr.bf16.mxu0 0
  %1186 = vmatmul.mubr.bf16.gmra.mxu0 %v991
  %v1187 = vpop.f32.mrf.mxu0
  %v1188 = vadd.f32 %v1083, %v1187
  %v1189 = vpop.f32.mrf.mxu0
  %v1190 = vadd.f32 %v1085, %v1189
  %v1191 = vpop.f32.mrf.mxu0
  %v1192 = vadd.f32 %v1087, %v1191
  %v1193 = vpop.f32.mrf.mxu0
  %v1194 = vadd.f32 %v1089, %v1193
  %1195 = vmatprep.mubr.bf16.mxu0 0
  %1196 = vmatmul.mubr.bf16.gmra.mxu0 %v994
  %v1197 = vpop.f32.mrf.mxu0
  %v1198 = vadd.f32 %v1093, %v1197
  %v1199 = vpop.f32.mrf.mxu0
  %v1200 = vadd.f32 %v1095, %v1199
  %v1201 = vpop.f32.mrf.mxu0
  %v1202 = vadd.f32 %v1097, %v1201
  %v1203 = vpop.f32.mrf.mxu0
  %v1204 = vadd.f32 %v1099, %v1203
  %1205 = vdwg.mxu0
  %v1206 = vmax.f32 %v1136, 0.0
  %v1207 = vmax.f32 %v1139, 0.0
  %v1208 = vmax.f32 %v1144, 0.0
  %v1209 = vmax.f32 %v1147, 0.0
  %v1210 = vmax.f32 %v1152, 0.0
  %v1211 = vmax.f32 %v1155, 0.0
  %v1212 = vmax.f32 %v1160, 0.0
  %v1213 = vmax.f32 %v1163, 0.0
  %v1214 = vmax.f32 %v1168, 0.0
  %v1215 = vmax.f32 %v1170, 0.0
  %v1216 = vmax.f32 %v1172, 0.0
  %v1217 = vmax.f32 %v1174, 0.0
  %v1218 = vmax.f32 %v1178, 0.0
  %v1219 = vmax.f32 %v1180, 0.0
  %v1220 = vmax.f32 %v1182, 0.0
  %v1221 = vmax.f32 %v1184, 0.0
  %v1222 = vmax.f32 %v1188, 0.0
  %v1223 = vmax.f32 %v1190, 0.0
  %v1224 = vmax.f32 %v1192, 0.0
  %v1225 = vmax.f32 %v1194, 0.0
  %v1226 = vmax.f32 %v1198, 0.0
  %v1227 = vmax.f32 %v1200, 0.0
  %v1228 = vmax.f32 %v1202, 0.0
  %v1229 = vmax.f32 %v1204, 0.0
  %1231 = vset.pattern.permute.xlu0 0
  %1232 = vperm.xlu0 %1231, %v1206
  %v1233 = vpop.permute.xlu0 %1232
  %1236 = vset.pattern.permute.xlu0 0
  %1237 = vperm.xlu0 %1236, %v1207
  %v1238 = vpop.permute.xlu0 %1237
  %1241 = vset.pattern.permute.xlu0 0
  %1242 = vperm.xlu0 %1241, %v1208
  %v1243 = vpop.permute.xlu0 %1242
  %1246 = vset.pattern.permute.xlu0 0
  %1247 = vperm.xlu0 %1246, %v1209
  %v1248 = vpop.permute.xlu0 %1247
  %1251 = vset.pattern.permute.xlu0 0
  %1252 = vperm.xlu0 %1251, %v1210
  %v1253 = vpop.permute.xlu0 %1252
  %1256 = vset.pattern.permute.xlu0 0
  %1257 = vperm.xlu0 %1256, %v1211
  %v1258 = vpop.permute.xlu0 %1257
  %1261 = vset.pattern.permute.xlu0 0
  %1262 = vperm.xlu0 %1261, %v1212
  %v1263 = vpop.permute.xlu0 %1262
  %1266 = vset.pattern.permute.xlu0 0
  %1267 = vperm.xlu0 %1266, %v1213
  %v1268 = vpop.permute.xlu0 %1267
  %v1270 = vmul.f32 %v1214, %v1233
  %v1271 = vmul.f32 %v1216, %v1238
  %v1272 = vmul.f32 %v1218, %v1243
  %v1273 = vmul.f32 %v1220, %v1248
  %v1274 = vmul.f32 %v1222, %v1253
  %v1275 = vmul.f32 %v1224, %v1258
  %v1276 = vmul.f32 %v1226, %v1263
  %v1277 = vmul.f32 %v1228, %v1268
  %v1278 = vadd.f32 %v1270, 0.0
  %v1279 = vadd.f32 %v1271, 0.0
  %v1280 = vadd.f32 %v1272, 0.0
  %v1281 = vadd.f32 %v1273, 0.0
  %v1282 = vadd.f32 %v1274, 0.0
  %v1283 = vadd.f32 %v1275, 0.0
  %v1284 = vadd.f32 %v1276, 0.0
  %v1285 = vadd.f32 %v1277, 0.0
  %1286 = vset.pattern.permute.xlu0 1
  %1287 = vperm.xlu0 %1286, %v1206
  %v1288 = vpop.permute.xlu0 %1287
  %1290 = vset.pattern.permute.xlu0 1
  %1291 = vperm.xlu0 %1290, %v1207
  %v1292 = vpop.permute.xlu0 %1291
  %1294 = vset.pattern.permute.xlu0 1
  %1295 = vperm.xlu0 %1294, %v1208
  %v1296 = vpop.permute.xlu0 %1295
  %1298 = vset.pattern.permute.xlu0 1
  %1299 = vperm.xlu0 %1298, %v1209
  %v1300 = vpop.permute.xlu0 %1299
  %1302 = vset.pattern.permute.xlu0 1
  %1303 = vperm.xlu0 %1302, %v1210
  %v1304 = vpop.permute.xlu0 %1303
  %1306 = vset.pattern.permute.xlu0 1
  %1307 = vperm.xlu0 %1306, %v1211
  %v1308 = vpop.permute.xlu0 %1307
  %1310 = vset.pattern.permute.xlu0 1
  %1311 = vperm.xlu0 %1310, %v1212
  %v1312 = vpop.permute.xlu0 %1311
  %1314 = vset.pattern.permute.xlu0 1
  %1315 = vperm.xlu0 %1314, %v1213
  %v1316 = vpop.permute.xlu0 %1315
  %v1318 = vmul.f32 %v1214, %v1288
  %v1319 = vmul.f32 %v1216, %v1292
  %v1320 = vmul.f32 %v1218, %v1296
  %v1321 = vmul.f32 %v1220, %v1300
  %v1322 = vmul.f32 %v1222, %v1304
  %v1323 = vmul.f32 %v1224, %v1308
  %v1324 = vmul.f32 %v1226, %v1312
  %v1325 = vmul.f32 %v1228, %v1316
  %1334 = vrot.lane.b32.xlu0 %v1318, 127
  %v1335 = vpop.permute.xlu0 %1334
  %1336 = vrot.lane.b32.xlu0 %v1319, 127
  %v1337 = vpop.permute.xlu0 %1336
  %1338 = vrot.lane.b32.xlu0 %v1320, 127
  %v1339 = vpop.permute.xlu0 %1338
  %1340 = vrot.lane.b32.xlu0 %v1321, 127
  %v1341 = vpop.permute.xlu0 %1340
  %1342 = vrot.lane.b32.xlu0 %v1322, 127
  %v1343 = vpop.permute.xlu0 %1342
  %1344 = vrot.lane.b32.xlu0 %v1323, 127
  %v1345 = vpop.permute.xlu0 %1344
  %1346 = vrot.lane.b32.xlu0 %v1324, 127
  %v1347 = vpop.permute.xlu0 %1346
  %1348 = vrot.lane.b32.xlu0 %v1325, 127
  %v1349 = vpop.permute.xlu0 %1348
  %v1358 = vadd.f32 %v1278, %v1335
  %v1359 = vadd.f32 %v1279, %v1337
  %v1360 = vadd.f32 %v1280, %v1339
  %v1361 = vadd.f32 %v1281, %v1341
  %v1362 = vadd.f32 %v1282, %v1343
  %v1363 = vadd.f32 %v1283, %v1345
  %v1364 = vadd.f32 %v1284, %v1347
  %v1365 = vadd.f32 %v1285, %v1349
  %1366 = vset.pattern.permute.xlu0 2
  %1367 = vperm.xlu0 %1366, %v1206
  %v1368 = vpop.permute.xlu0 %1367
  %1370 = vset.pattern.permute.xlu0 2
  %1371 = vperm.xlu0 %1370, %v1207
  %v1372 = vpop.permute.xlu0 %1371
  %1374 = vset.pattern.permute.xlu0 2
  %1375 = vperm.xlu0 %1374, %v1208
  %v1376 = vpop.permute.xlu0 %1375
  %1378 = vset.pattern.permute.xlu0 2
  %1379 = vperm.xlu0 %1378, %v1209
  %v1380 = vpop.permute.xlu0 %1379
  %1382 = vset.pattern.permute.xlu0 2
  %1383 = vperm.xlu0 %1382, %v1210
  %v1384 = vpop.permute.xlu0 %1383
  %1386 = vset.pattern.permute.xlu0 2
  %1387 = vperm.xlu0 %1386, %v1211
  %v1388 = vpop.permute.xlu0 %1387
  %1390 = vset.pattern.permute.xlu0 2
  %1391 = vperm.xlu0 %1390, %v1212
  %v1392 = vpop.permute.xlu0 %1391
  %1394 = vset.pattern.permute.xlu0 2
  %1395 = vperm.xlu0 %1394, %v1213
  %v1396 = vpop.permute.xlu0 %1395
  %v1398 = vmul.f32 %v1214, %v1368
  %v1399 = vmul.f32 %v1216, %v1372
  %v1400 = vmul.f32 %v1218, %v1376
  %v1401 = vmul.f32 %v1220, %v1380
  %v1402 = vmul.f32 %v1222, %v1384
  %v1403 = vmul.f32 %v1224, %v1388
  %v1404 = vmul.f32 %v1226, %v1392
  %v1405 = vmul.f32 %v1228, %v1396
  %1414 = vrot.lane.b32.xlu0 %v1398, 126
  %v1415 = vpop.permute.xlu0 %1414
  %1416 = vrot.lane.b32.xlu0 %v1399, 126
  %v1417 = vpop.permute.xlu0 %1416
  %1418 = vrot.lane.b32.xlu0 %v1400, 126
  %v1419 = vpop.permute.xlu0 %1418
  %1420 = vrot.lane.b32.xlu0 %v1401, 126
  %v1421 = vpop.permute.xlu0 %1420
  %1422 = vrot.lane.b32.xlu0 %v1402, 126
  %v1423 = vpop.permute.xlu0 %1422
  %1424 = vrot.lane.b32.xlu0 %v1403, 126
  %v1425 = vpop.permute.xlu0 %1424
  %1426 = vrot.lane.b32.xlu0 %v1404, 126
  %v1427 = vpop.permute.xlu0 %1426
  %1428 = vrot.lane.b32.xlu0 %v1405, 126
  %v1429 = vpop.permute.xlu0 %1428
  %v1438 = vadd.f32 %v1358, %v1415
  %v1439 = vadd.f32 %v1359, %v1417
  %v1440 = vadd.f32 %v1360, %v1419
  %v1441 = vadd.f32 %v1361, %v1421
  %v1442 = vadd.f32 %v1362, %v1423
  %v1443 = vadd.f32 %v1363, %v1425
  %v1444 = vadd.f32 %v1364, %v1427
  %v1445 = vadd.f32 %v1365, %v1429
  %1446 = vset.pattern.permute.xlu0 3
  %1447 = vperm.xlu0 %1446, %v1206
  %v1448 = vpop.permute.xlu0 %1447
  %1450 = vset.pattern.permute.xlu0 3
  %1451 = vperm.xlu0 %1450, %v1207
  %v1452 = vpop.permute.xlu0 %1451
  %1454 = vset.pattern.permute.xlu0 3
  %1455 = vperm.xlu0 %1454, %v1208
  %v1456 = vpop.permute.xlu0 %1455
  %1458 = vset.pattern.permute.xlu0 3
  %1459 = vperm.xlu0 %1458, %v1209
  %v1460 = vpop.permute.xlu0 %1459
  %1462 = vset.pattern.permute.xlu0 3
  %1463 = vperm.xlu0 %1462, %v1210
  %v1464 = vpop.permute.xlu0 %1463
  %1466 = vset.pattern.permute.xlu0 3
  %1467 = vperm.xlu0 %1466, %v1211
  %v1468 = vpop.permute.xlu0 %1467
  %1470 = vset.pattern.permute.xlu0 3
  %1471 = vperm.xlu0 %1470, %v1212
  %v1472 = vpop.permute.xlu0 %1471
  %1474 = vset.pattern.permute.xlu0 3
  %1475 = vperm.xlu0 %1474, %v1213
  %v1476 = vpop.permute.xlu0 %1475
  %v1478 = vmul.f32 %v1214, %v1448
  %v1479 = vmul.f32 %v1216, %v1452
  %v1480 = vmul.f32 %v1218, %v1456
  %v1481 = vmul.f32 %v1220, %v1460
  %v1482 = vmul.f32 %v1222, %v1464
  %v1483 = vmul.f32 %v1224, %v1468
  %v1484 = vmul.f32 %v1226, %v1472
  %v1485 = vmul.f32 %v1228, %v1476
  %1494 = vrot.lane.b32.xlu0 %v1478, 125
  %v1495 = vpop.permute.xlu0 %1494
  %1496 = vrot.lane.b32.xlu0 %v1479, 125
  %v1497 = vpop.permute.xlu0 %1496
  %1498 = vrot.lane.b32.xlu0 %v1480, 125
  %v1499 = vpop.permute.xlu0 %1498
  %1500 = vrot.lane.b32.xlu0 %v1481, 125
  %v1501 = vpop.permute.xlu0 %1500
  %1502 = vrot.lane.b32.xlu0 %v1482, 125
  %v1503 = vpop.permute.xlu0 %1502
  %1504 = vrot.lane.b32.xlu0 %v1483, 125
  %v1505 = vpop.permute.xlu0 %1504
  %1506 = vrot.lane.b32.xlu0 %v1484, 125
  %v1507 = vpop.permute.xlu0 %1506
  %1508 = vrot.lane.b32.xlu0 %v1485, 125
  %v1509 = vpop.permute.xlu0 %1508
  %v1518 = vadd.f32 %v1438, %v1495
  %v1519 = vadd.f32 %v1439, %v1497
  %v1520 = vadd.f32 %v1440, %v1499
  %v1521 = vadd.f32 %v1441, %v1501
  %v1522 = vadd.f32 %v1442, %v1503
  %v1523 = vadd.f32 %v1443, %v1505
  %v1524 = vadd.f32 %v1444, %v1507
  %v1525 = vadd.f32 %v1445, %v1509
  %1526 = vset.pattern.permute.xlu0 6
  %1527 = vperm.xlu0 %1526, %v1206
  %v1528 = vpop.permute.xlu0 %1527
  %1530 = vset.pattern.permute.xlu0 6
  %1531 = vperm.xlu0 %1530, %v1207
  %v1532 = vpop.permute.xlu0 %1531
  %1534 = vset.pattern.permute.xlu0 6
  %1535 = vperm.xlu0 %1534, %v1208
  %v1536 = vpop.permute.xlu0 %1535
  %1538 = vset.pattern.permute.xlu0 6
  %1539 = vperm.xlu0 %1538, %v1209
  %v1540 = vpop.permute.xlu0 %1539
  %1542 = vset.pattern.permute.xlu0 6
  %1543 = vperm.xlu0 %1542, %v1210
  %v1544 = vpop.permute.xlu0 %1543
  %1546 = vset.pattern.permute.xlu0 6
  %1547 = vperm.xlu0 %1546, %v1211
  %v1548 = vpop.permute.xlu0 %1547
  %1550 = vset.pattern.permute.xlu0 6
  %1551 = vperm.xlu0 %1550, %v1212
  %v1552 = vpop.permute.xlu0 %1551
  %1554 = vset.pattern.permute.xlu0 6
  %1555 = vperm.xlu0 %1554, %v1213
  %v1556 = vpop.permute.xlu0 %1555
  %v1558 = vmul.f32 %v1214, %v1528
  %v1559 = vmul.f32 %v1216, %v1532
  %v1560 = vmul.f32 %v1218, %v1536
  %v1561 = vmul.f32 %v1220, %v1540
  %v1562 = vmul.f32 %v1222, %v1544
  %v1563 = vmul.f32 %v1224, %v1548
  %v1564 = vmul.f32 %v1226, %v1552
  %v1565 = vmul.f32 %v1228, %v1556
  %1574 = vrot.lane.b32.xlu0 %v1558, 118
  %v1575 = vpop.permute.xlu0 %1574
  %1576 = vrot.lane.b32.xlu0 %v1559, 118
  %v1577 = vpop.permute.xlu0 %1576
  %1578 = vrot.lane.b32.xlu0 %v1560, 118
  %v1579 = vpop.permute.xlu0 %1578
  %1580 = vrot.lane.b32.xlu0 %v1561, 118
  %v1581 = vpop.permute.xlu0 %1580
  %1582 = vrot.lane.b32.xlu0 %v1562, 118
  %v1583 = vpop.permute.xlu0 %1582
  %1584 = vrot.lane.b32.xlu0 %v1563, 118
  %v1585 = vpop.permute.xlu0 %1584
  %1586 = vrot.lane.b32.xlu0 %v1564, 118
  %v1587 = vpop.permute.xlu0 %1586
  %1588 = vrot.lane.b32.xlu0 %v1565, 118
  %v1589 = vpop.permute.xlu0 %1588
  %v1598 = vadd.f32 %v1518, %v1575
  %v1599 = vadd.f32 %v1519, %v1577
  %v1600 = vadd.f32 %v1520, %v1579
  %v1601 = vadd.f32 %v1521, %v1581
  %v1602 = vadd.f32 %v1522, %v1583
  %v1603 = vadd.f32 %v1523, %v1585
  %v1604 = vadd.f32 %v1524, %v1587
  %v1605 = vadd.f32 %v1525, %v1589
  %1606 = vset.pattern.permute.xlu0 7
  %1607 = vperm.xlu0 %1606, %v1206
  %v1608 = vpop.permute.xlu0 %1607
  %1610 = vset.pattern.permute.xlu0 7
  %1611 = vperm.xlu0 %1610, %v1207
  %v1612 = vpop.permute.xlu0 %1611
  %1614 = vset.pattern.permute.xlu0 7
  %1615 = vperm.xlu0 %1614, %v1208
  %v1616 = vpop.permute.xlu0 %1615
  %1618 = vset.pattern.permute.xlu0 7
  %1619 = vperm.xlu0 %1618, %v1209
  %v1620 = vpop.permute.xlu0 %1619
  %1622 = vset.pattern.permute.xlu0 7
  %1623 = vperm.xlu0 %1622, %v1210
  %v1624 = vpop.permute.xlu0 %1623
  %1626 = vset.pattern.permute.xlu0 7
  %1627 = vperm.xlu0 %1626, %v1211
  %v1628 = vpop.permute.xlu0 %1627
  %1630 = vset.pattern.permute.xlu0 7
  %1631 = vperm.xlu0 %1630, %v1212
  %v1632 = vpop.permute.xlu0 %1631
  %1634 = vset.pattern.permute.xlu0 7
  %1635 = vperm.xlu0 %1634, %v1213
  %v1636 = vpop.permute.xlu0 %1635
  %v1638 = vmul.f32 %v1214, %v1608
  %v1639 = vmul.f32 %v1216, %v1612
  %v1640 = vmul.f32 %v1218, %v1616
  %v1641 = vmul.f32 %v1220, %v1620
  %v1642 = vmul.f32 %v1222, %v1624
  %v1643 = vmul.f32 %v1224, %v1628
  %v1644 = vmul.f32 %v1226, %v1632
  %v1645 = vmul.f32 %v1228, %v1636
  %1654 = vrot.lane.b32.xlu0 %v1638, 117
  %v1655 = vpop.permute.xlu0 %1654
  %1656 = vrot.lane.b32.xlu0 %v1639, 117
  %v1657 = vpop.permute.xlu0 %1656
  %1658 = vrot.lane.b32.xlu0 %v1640, 117
  %v1659 = vpop.permute.xlu0 %1658
  %1660 = vrot.lane.b32.xlu0 %v1641, 117
  %v1661 = vpop.permute.xlu0 %1660
  %1662 = vrot.lane.b32.xlu0 %v1642, 117
  %v1663 = vpop.permute.xlu0 %1662
  %1664 = vrot.lane.b32.xlu0 %v1643, 117
  %v1665 = vpop.permute.xlu0 %1664
  %1666 = vrot.lane.b32.xlu0 %v1644, 117
  %v1667 = vpop.permute.xlu0 %1666
  %1668 = vrot.lane.b32.xlu0 %v1645, 117
  %v1669 = vpop.permute.xlu0 %1668
  %v1678 = vadd.f32 %v1598, %v1655
  %v1679 = vadd.f32 %v1599, %v1657
  %v1680 = vadd.f32 %v1600, %v1659
  %v1681 = vadd.f32 %v1601, %v1661
  %v1682 = vadd.f32 %v1602, %v1663
  %v1683 = vadd.f32 %v1603, %v1665
  %v1684 = vadd.f32 %v1604, %v1667
  %v1685 = vadd.f32 %v1605, %v1669
  %1686 = vset.pattern.permute.xlu0 8
  %1687 = vperm.xlu0 %1686, %v1206
  %v1688 = vpop.permute.xlu0 %1687
  %1690 = vset.pattern.permute.xlu0 8
  %1691 = vperm.xlu0 %1690, %v1207
  %v1692 = vpop.permute.xlu0 %1691
  %1694 = vset.pattern.permute.xlu0 8
  %1695 = vperm.xlu0 %1694, %v1208
  %v1696 = vpop.permute.xlu0 %1695
  %1698 = vset.pattern.permute.xlu0 8
  %1699 = vperm.xlu0 %1698, %v1209
  %v1700 = vpop.permute.xlu0 %1699
  %1702 = vset.pattern.permute.xlu0 8
  %1703 = vperm.xlu0 %1702, %v1210
  %v1704 = vpop.permute.xlu0 %1703
  %1706 = vset.pattern.permute.xlu0 8
  %1707 = vperm.xlu0 %1706, %v1211
  %v1708 = vpop.permute.xlu0 %1707
  %1710 = vset.pattern.permute.xlu0 8
  %1711 = vperm.xlu0 %1710, %v1212
  %v1712 = vpop.permute.xlu0 %1711
  %1714 = vset.pattern.permute.xlu0 8
  %1715 = vperm.xlu0 %1714, %v1213
  %v1716 = vpop.permute.xlu0 %1715
  %v1718 = vmul.f32 %v1214, %v1688
  %v1719 = vmul.f32 %v1216, %v1692
  %v1720 = vmul.f32 %v1218, %v1696
  %v1721 = vmul.f32 %v1220, %v1700
  %v1722 = vmul.f32 %v1222, %v1704
  %v1723 = vmul.f32 %v1224, %v1708
  %v1724 = vmul.f32 %v1226, %v1712
  %v1725 = vmul.f32 %v1228, %v1716
  %1734 = vrot.lane.b32.xlu0 %v1718, 116
  %v1735 = vpop.permute.xlu0 %1734
  %1736 = vrot.lane.b32.xlu0 %v1719, 116
  %v1737 = vpop.permute.xlu0 %1736
  %1738 = vrot.lane.b32.xlu0 %v1720, 116
  %v1739 = vpop.permute.xlu0 %1738
  %1740 = vrot.lane.b32.xlu0 %v1721, 116
  %v1741 = vpop.permute.xlu0 %1740
  %1742 = vrot.lane.b32.xlu0 %v1722, 116
  %v1743 = vpop.permute.xlu0 %1742
  %1744 = vrot.lane.b32.xlu0 %v1723, 116
  %v1745 = vpop.permute.xlu0 %1744
  %1746 = vrot.lane.b32.xlu0 %v1724, 116
  %v1747 = vpop.permute.xlu0 %1746
  %1748 = vrot.lane.b32.xlu0 %v1725, 116
  %v1749 = vpop.permute.xlu0 %1748
  %v1758 = vadd.f32 %v1678, %v1735
  %v1759 = vadd.f32 %v1679, %v1737
  %v1760 = vadd.f32 %v1680, %v1739
  %v1761 = vadd.f32 %v1681, %v1741
  %v1762 = vadd.f32 %v1682, %v1743
  %v1763 = vadd.f32 %v1683, %v1745
  %v1764 = vadd.f32 %v1684, %v1747
  %v1765 = vadd.f32 %v1685, %v1749
  %1766 = vset.pattern.permute.xlu0 9
  %1767 = vperm.xlu0 %1766, %v1206
  %v1768 = vpop.permute.xlu0 %1767
  %1770 = vset.pattern.permute.xlu0 9
  %1771 = vperm.xlu0 %1770, %v1207
  %v1772 = vpop.permute.xlu0 %1771
  %1774 = vset.pattern.permute.xlu0 9
  %1775 = vperm.xlu0 %1774, %v1208
  %v1776 = vpop.permute.xlu0 %1775
  %1778 = vset.pattern.permute.xlu0 9
  %1779 = vperm.xlu0 %1778, %v1209
  %v1780 = vpop.permute.xlu0 %1779
  %1782 = vset.pattern.permute.xlu0 9
  %1783 = vperm.xlu0 %1782, %v1210
  %v1784 = vpop.permute.xlu0 %1783
  %1786 = vset.pattern.permute.xlu0 9
  %1787 = vperm.xlu0 %1786, %v1211
  %v1788 = vpop.permute.xlu0 %1787
  %1790 = vset.pattern.permute.xlu0 9
  %1791 = vperm.xlu0 %1790, %v1212
  %v1792 = vpop.permute.xlu0 %1791
  %1794 = vset.pattern.permute.xlu0 9
  %1795 = vperm.xlu0 %1794, %v1213
  %v1796 = vpop.permute.xlu0 %1795
  %v1798 = vmul.f32 %v1214, %v1768
  %v1799 = vmul.f32 %v1216, %v1772
  %v1800 = vmul.f32 %v1218, %v1776
  %v1801 = vmul.f32 %v1220, %v1780
  %v1802 = vmul.f32 %v1222, %v1784
  %v1803 = vmul.f32 %v1224, %v1788
  %v1804 = vmul.f32 %v1226, %v1792
  %v1805 = vmul.f32 %v1228, %v1796
  %1814 = vrot.lane.b32.xlu0 %v1798, 115
  %v1815 = vpop.permute.xlu0 %1814
  %1816 = vrot.lane.b32.xlu0 %v1799, 115
  %v1817 = vpop.permute.xlu0 %1816
  %1818 = vrot.lane.b32.xlu0 %v1800, 115
  %v1819 = vpop.permute.xlu0 %1818
  %1820 = vrot.lane.b32.xlu0 %v1801, 115
  %v1821 = vpop.permute.xlu0 %1820
  %1822 = vrot.lane.b32.xlu0 %v1802, 115
  %v1823 = vpop.permute.xlu0 %1822
  %1824 = vrot.lane.b32.xlu0 %v1803, 115
  %v1825 = vpop.permute.xlu0 %1824
  %1826 = vrot.lane.b32.xlu0 %v1804, 115
  %v1827 = vpop.permute.xlu0 %1826
  %1828 = vrot.lane.b32.xlu0 %v1805, 115
  %v1829 = vpop.permute.xlu0 %1828
  %v1838 = vadd.f32 %v1758, %v1815
  %v1839 = vadd.f32 %v1759, %v1817
  %v1840 = vadd.f32 %v1760, %v1819
  %v1841 = vadd.f32 %v1761, %v1821
  %v1842 = vadd.f32 %v1762, %v1823
  %v1843 = vadd.f32 %v1763, %v1825
  %v1844 = vadd.f32 %v1764, %v1827
  %v1845 = vadd.f32 %v1765, %v1829
  %1846 = vset.pattern.permute.xlu0 12
  %1847 = vperm.xlu0 %1846, %v1206
  %v1848 = vpop.permute.xlu0 %1847
  %1850 = vset.pattern.permute.xlu0 12
  %1851 = vperm.xlu0 %1850, %v1207
  %v1852 = vpop.permute.xlu0 %1851
  %1854 = vset.pattern.permute.xlu0 12
  %1855 = vperm.xlu0 %1854, %v1208
  %v1856 = vpop.permute.xlu0 %1855
  %1858 = vset.pattern.permute.xlu0 12
  %1859 = vperm.xlu0 %1858, %v1209
  %v1860 = vpop.permute.xlu0 %1859
  %1862 = vset.pattern.permute.xlu0 12
  %1863 = vperm.xlu0 %1862, %v1210
  %v1864 = vpop.permute.xlu0 %1863
  %1866 = vset.pattern.permute.xlu0 12
  %1867 = vperm.xlu0 %1866, %v1211
  %v1868 = vpop.permute.xlu0 %1867
  %1870 = vset.pattern.permute.xlu0 12
  %1871 = vperm.xlu0 %1870, %v1212
  %v1872 = vpop.permute.xlu0 %1871
  %1874 = vset.pattern.permute.xlu0 12
  %1875 = vperm.xlu0 %1874, %v1213
  %v1876 = vpop.permute.xlu0 %1875
  %v1878 = vmul.f32 %v1214, %v1848
  %v1879 = vmul.f32 %v1216, %v1852
  %v1880 = vmul.f32 %v1218, %v1856
  %v1881 = vmul.f32 %v1220, %v1860
  %v1882 = vmul.f32 %v1222, %v1864
  %v1883 = vmul.f32 %v1224, %v1868
  %v1884 = vmul.f32 %v1226, %v1872
  %v1885 = vmul.f32 %v1228, %v1876
  %1894 = vrot.lane.b32.xlu0 %v1878, 108
  %v1895 = vpop.permute.xlu0 %1894
  %1896 = vrot.lane.b32.xlu0 %v1879, 108
  %v1897 = vpop.permute.xlu0 %1896
  %1898 = vrot.lane.b32.xlu0 %v1880, 108
  %v1899 = vpop.permute.xlu0 %1898
  %1900 = vrot.lane.b32.xlu0 %v1881, 108
  %v1901 = vpop.permute.xlu0 %1900
  %1902 = vrot.lane.b32.xlu0 %v1882, 108
  %v1903 = vpop.permute.xlu0 %1902
  %1904 = vrot.lane.b32.xlu0 %v1883, 108
  %v1905 = vpop.permute.xlu0 %1904
  %1906 = vrot.lane.b32.xlu0 %v1884, 108
  %v1907 = vpop.permute.xlu0 %1906
  %1908 = vrot.lane.b32.xlu0 %v1885, 108
  %v1909 = vpop.permute.xlu0 %1908
  %v1918 = vadd.f32 %v1838, %v1895
  %v1919 = vadd.f32 %v1839, %v1897
  %v1920 = vadd.f32 %v1840, %v1899
  %v1921 = vadd.f32 %v1841, %v1901
  %v1922 = vadd.f32 %v1842, %v1903
  %v1923 = vadd.f32 %v1843, %v1905
  %v1924 = vadd.f32 %v1844, %v1907
  %v1925 = vadd.f32 %v1845, %v1909
  %1926 = vset.pattern.permute.xlu0 13
  %1927 = vperm.xlu0 %1926, %v1206
  %v1928 = vpop.permute.xlu0 %1927
  %1930 = vset.pattern.permute.xlu0 13
  %1931 = vperm.xlu0 %1930, %v1207
  %v1932 = vpop.permute.xlu0 %1931
  %1934 = vset.pattern.permute.xlu0 13
  %1935 = vperm.xlu0 %1934, %v1208
  %v1936 = vpop.permute.xlu0 %1935
  %1938 = vset.pattern.permute.xlu0 13
  %1939 = vperm.xlu0 %1938, %v1209
  %v1940 = vpop.permute.xlu0 %1939
  %1942 = vset.pattern.permute.xlu0 13
  %1943 = vperm.xlu0 %1942, %v1210
  %v1944 = vpop.permute.xlu0 %1943
  %1946 = vset.pattern.permute.xlu0 13
  %1947 = vperm.xlu0 %1946, %v1211
  %v1948 = vpop.permute.xlu0 %1947
  %1950 = vset.pattern.permute.xlu0 13
  %1951 = vperm.xlu0 %1950, %v1212
  %v1952 = vpop.permute.xlu0 %1951
  %1954 = vset.pattern.permute.xlu0 13
  %1955 = vperm.xlu0 %1954, %v1213
  %v1956 = vpop.permute.xlu0 %1955
  %v1958 = vmul.f32 %v1214, %v1928
  %v1959 = vmul.f32 %v1216, %v1932
  %v1960 = vmul.f32 %v1218, %v1936
  %v1961 = vmul.f32 %v1220, %v1940
  %v1962 = vmul.f32 %v1222, %v1944
  %v1963 = vmul.f32 %v1224, %v1948
  %v1964 = vmul.f32 %v1226, %v1952
  %v1965 = vmul.f32 %v1228, %v1956
  %1974 = vrot.lane.b32.xlu0 %v1958, 107
  %v1975 = vpop.permute.xlu0 %1974
  %1976 = vrot.lane.b32.xlu0 %v1959, 107
  %v1977 = vpop.permute.xlu0 %1976
  %1978 = vrot.lane.b32.xlu0 %v1960, 107
  %v1979 = vpop.permute.xlu0 %1978
  %1980 = vrot.lane.b32.xlu0 %v1961, 107
  %v1981 = vpop.permute.xlu0 %1980
  %1982 = vrot.lane.b32.xlu0 %v1962, 107
  %v1983 = vpop.permute.xlu0 %1982
  %1984 = vrot.lane.b32.xlu0 %v1963, 107
  %v1985 = vpop.permute.xlu0 %1984
  %1986 = vrot.lane.b32.xlu0 %v1964, 107
  %v1987 = vpop.permute.xlu0 %1986
  %1988 = vrot.lane.b32.xlu0 %v1965, 107
  %v1989 = vpop.permute.xlu0 %1988
  %v1998 = vadd.f32 %v1918, %v1975
  %v1999 = vadd.f32 %v1919, %v1977
  %v2000 = vadd.f32 %v1920, %v1979
  %v2001 = vadd.f32 %v1921, %v1981
  %v2002 = vadd.f32 %v1922, %v1983
  %v2003 = vadd.f32 %v1923, %v1985
  %v2004 = vadd.f32 %v1924, %v1987
  %v2005 = vadd.f32 %v1925, %v1989
  %2006 = vset.pattern.permute.xlu0 14
  %2007 = vperm.xlu0 %2006, %v1206
  %v2008 = vpop.permute.xlu0 %2007
  %2010 = vset.pattern.permute.xlu0 14
  %2011 = vperm.xlu0 %2010, %v1207
  %v2012 = vpop.permute.xlu0 %2011
  %2014 = vset.pattern.permute.xlu0 14
  %2015 = vperm.xlu0 %2014, %v1208
  %v2016 = vpop.permute.xlu0 %2015
  %2018 = vset.pattern.permute.xlu0 14
  %2019 = vperm.xlu0 %2018, %v1209
  %v2020 = vpop.permute.xlu0 %2019
  %2022 = vset.pattern.permute.xlu0 14
  %2023 = vperm.xlu0 %2022, %v1210
  %v2024 = vpop.permute.xlu0 %2023
  %2026 = vset.pattern.permute.xlu0 14
  %2027 = vperm.xlu0 %2026, %v1211
  %v2028 = vpop.permute.xlu0 %2027
  %2030 = vset.pattern.permute.xlu0 14
  %2031 = vperm.xlu0 %2030, %v1212
  %v2032 = vpop.permute.xlu0 %2031
  %2034 = vset.pattern.permute.xlu0 14
  %2035 = vperm.xlu0 %2034, %v1213
  %v2036 = vpop.permute.xlu0 %2035
  %v2038 = vmul.f32 %v1214, %v2008
  %v2039 = vmul.f32 %v1216, %v2012
  %v2040 = vmul.f32 %v1218, %v2016
  %v2041 = vmul.f32 %v1220, %v2020
  %v2042 = vmul.f32 %v1222, %v2024
  %v2043 = vmul.f32 %v1224, %v2028
  %v2044 = vmul.f32 %v1226, %v2032
  %v2045 = vmul.f32 %v1228, %v2036
  %2054 = vrot.lane.b32.xlu0 %v2038, 106
  %v2055 = vpop.permute.xlu0 %2054
  %2056 = vrot.lane.b32.xlu0 %v2039, 106
  %v2057 = vpop.permute.xlu0 %2056
  %2058 = vrot.lane.b32.xlu0 %v2040, 106
  %v2059 = vpop.permute.xlu0 %2058
  %2060 = vrot.lane.b32.xlu0 %v2041, 106
  %v2061 = vpop.permute.xlu0 %2060
  %2062 = vrot.lane.b32.xlu0 %v2042, 106
  %v2063 = vpop.permute.xlu0 %2062
  %2064 = vrot.lane.b32.xlu0 %v2043, 106
  %v2065 = vpop.permute.xlu0 %2064
  %2066 = vrot.lane.b32.xlu0 %v2044, 106
  %v2067 = vpop.permute.xlu0 %2066
  %2068 = vrot.lane.b32.xlu0 %v2045, 106
  %v2069 = vpop.permute.xlu0 %2068
  %v2078 = vadd.f32 %v1998, %v2055
  %v2079 = vadd.f32 %v1999, %v2057
  %v2080 = vadd.f32 %v2000, %v2059
  %v2081 = vadd.f32 %v2001, %v2061
  %v2082 = vadd.f32 %v2002, %v2063
  %v2083 = vadd.f32 %v2003, %v2065
  %v2084 = vadd.f32 %v2004, %v2067
  %v2085 = vadd.f32 %v2005, %v2069
  %2086 = vset.pattern.permute.xlu0 15
  %2087 = vperm.xlu0 %2086, %v1206
  %v2088 = vpop.permute.xlu0 %2087
  %2090 = vset.pattern.permute.xlu0 15
  %2091 = vperm.xlu0 %2090, %v1207
  %v2092 = vpop.permute.xlu0 %2091
  %2094 = vset.pattern.permute.xlu0 15
  %2095 = vperm.xlu0 %2094, %v1208
  %v2096 = vpop.permute.xlu0 %2095
  %2098 = vset.pattern.permute.xlu0 15
  %2099 = vperm.xlu0 %2098, %v1209
  %v2100 = vpop.permute.xlu0 %2099
  %2102 = vset.pattern.permute.xlu0 15
  %2103 = vperm.xlu0 %2102, %v1210
  %v2104 = vpop.permute.xlu0 %2103
  %2106 = vset.pattern.permute.xlu0 15
  %2107 = vperm.xlu0 %2106, %v1211
  %v2108 = vpop.permute.xlu0 %2107
  %2110 = vset.pattern.permute.xlu0 15
  %2111 = vperm.xlu0 %2110, %v1212
  %v2112 = vpop.permute.xlu0 %2111
  %2114 = vset.pattern.permute.xlu0 15
  %2115 = vperm.xlu0 %2114, %v1213
  %v2116 = vpop.permute.xlu0 %2115
  %v2118 = vmul.f32 %v1214, %v2088
  %v2119 = vmul.f32 %v1216, %v2092
  %v2120 = vmul.f32 %v1218, %v2096
  %v2121 = vmul.f32 %v1220, %v2100
  %v2122 = vmul.f32 %v1222, %v2104
  %v2123 = vmul.f32 %v1224, %v2108
  %v2124 = vmul.f32 %v1226, %v2112
  %v2125 = vmul.f32 %v1228, %v2116
  %2134 = vrot.lane.b32.xlu0 %v2118, 105
  %v2135 = vpop.permute.xlu0 %2134
  %2136 = vrot.lane.b32.xlu0 %v2119, 105
  %v2137 = vpop.permute.xlu0 %2136
  %2138 = vrot.lane.b32.xlu0 %v2120, 105
  %v2139 = vpop.permute.xlu0 %2138
  %2140 = vrot.lane.b32.xlu0 %v2121, 105
  %v2141 = vpop.permute.xlu0 %2140
  %2142 = vrot.lane.b32.xlu0 %v2122, 105
  %v2143 = vpop.permute.xlu0 %2142
  %2144 = vrot.lane.b32.xlu0 %v2123, 105
  %v2145 = vpop.permute.xlu0 %2144
  %2146 = vrot.lane.b32.xlu0 %v2124, 105
  %v2147 = vpop.permute.xlu0 %2146
  %2148 = vrot.lane.b32.xlu0 %v2125, 105
  %v2149 = vpop.permute.xlu0 %2148
  %v2158 = vadd.f32 %v2078, %v2135
  %v2159 = vadd.f32 %v2079, %v2137
  %v2160 = vadd.f32 %v2080, %v2139
  %v2161 = vadd.f32 %v2081, %v2141
  %v2162 = vadd.f32 %v2082, %v2143
  %v2163 = vadd.f32 %v2083, %v2145
  %v2164 = vadd.f32 %v2084, %v2147
  %v2165 = vadd.f32 %v2085, %v2149
  %2166 = vset.pattern.permute.xlu0 18
  %2167 = vperm.xlu0 %2166, %v1206
  %v2168 = vpop.permute.xlu0 %2167
  %2170 = vset.pattern.permute.xlu0 18
  %2171 = vperm.xlu0 %2170, %v1207
  %v2172 = vpop.permute.xlu0 %2171
  %2174 = vset.pattern.permute.xlu0 18
  %2175 = vperm.xlu0 %2174, %v1208
  %v2176 = vpop.permute.xlu0 %2175
  %2178 = vset.pattern.permute.xlu0 18
  %2179 = vperm.xlu0 %2178, %v1209
  %v2180 = vpop.permute.xlu0 %2179
  %2182 = vset.pattern.permute.xlu0 18
  %2183 = vperm.xlu0 %2182, %v1210
  %v2184 = vpop.permute.xlu0 %2183
  %2186 = vset.pattern.permute.xlu0 18
  %2187 = vperm.xlu0 %2186, %v1211
  %v2188 = vpop.permute.xlu0 %2187
  %2190 = vset.pattern.permute.xlu0 18
  %2191 = vperm.xlu0 %2190, %v1212
  %v2192 = vpop.permute.xlu0 %2191
  %2194 = vset.pattern.permute.xlu0 18
  %2195 = vperm.xlu0 %2194, %v1213
  %v2196 = vpop.permute.xlu0 %2195
  %v2198 = vmul.f32 %v1214, %v2168
  %v2199 = vmul.f32 %v1216, %v2172
  %v2200 = vmul.f32 %v1218, %v2176
  %v2201 = vmul.f32 %v1220, %v2180
  %v2202 = vmul.f32 %v1222, %v2184
  %v2203 = vmul.f32 %v1224, %v2188
  %v2204 = vmul.f32 %v1226, %v2192
  %v2205 = vmul.f32 %v1228, %v2196
  %2214 = vrot.lane.b32.xlu0 %v2198, 98
  %v2215 = vpop.permute.xlu0 %2214
  %2216 = vrot.lane.b32.xlu0 %v2199, 98
  %v2217 = vpop.permute.xlu0 %2216
  %2218 = vrot.lane.b32.xlu0 %v2200, 98
  %v2219 = vpop.permute.xlu0 %2218
  %2220 = vrot.lane.b32.xlu0 %v2201, 98
  %v2221 = vpop.permute.xlu0 %2220
  %2222 = vrot.lane.b32.xlu0 %v2202, 98
  %v2223 = vpop.permute.xlu0 %2222
  %2224 = vrot.lane.b32.xlu0 %v2203, 98
  %v2225 = vpop.permute.xlu0 %2224
  %2226 = vrot.lane.b32.xlu0 %v2204, 98
  %v2227 = vpop.permute.xlu0 %2226
  %2228 = vrot.lane.b32.xlu0 %v2205, 98
  %v2229 = vpop.permute.xlu0 %2228
  %v2238 = vadd.f32 %v2158, %v2215
  %v2239 = vadd.f32 %v2159, %v2217
  %v2240 = vadd.f32 %v2160, %v2219
  %v2241 = vadd.f32 %v2161, %v2221
  %v2242 = vadd.f32 %v2162, %v2223
  %v2243 = vadd.f32 %v2163, %v2225
  %v2244 = vadd.f32 %v2164, %v2227
  %v2245 = vadd.f32 %v2165, %v2229
  %2246 = vset.pattern.permute.xlu0 19
  %2247 = vperm.xlu0 %2246, %v1206
  %v2248 = vpop.permute.xlu0 %2247
  %2250 = vset.pattern.permute.xlu0 19
  %2251 = vperm.xlu0 %2250, %v1207
  %v2252 = vpop.permute.xlu0 %2251
  %2254 = vset.pattern.permute.xlu0 19
  %2255 = vperm.xlu0 %2254, %v1208
  %v2256 = vpop.permute.xlu0 %2255
  %2258 = vset.pattern.permute.xlu0 19
  %2259 = vperm.xlu0 %2258, %v1209
  %v2260 = vpop.permute.xlu0 %2259
  %2262 = vset.pattern.permute.xlu0 19
  %2263 = vperm.xlu0 %2262, %v1210
  %v2264 = vpop.permute.xlu0 %2263
  %2266 = vset.pattern.permute.xlu0 19
  %2267 = vperm.xlu0 %2266, %v1211
  %v2268 = vpop.permute.xlu0 %2267
  %2270 = vset.pattern.permute.xlu0 19
  %2271 = vperm.xlu0 %2270, %v1212
  %v2272 = vpop.permute.xlu0 %2271
  %2274 = vset.pattern.permute.xlu0 19
  %2275 = vperm.xlu0 %2274, %v1213
  %v2276 = vpop.permute.xlu0 %2275
  %v2278 = vmul.f32 %v1214, %v2248
  %v2279 = vmul.f32 %v1216, %v2252
  %v2280 = vmul.f32 %v1218, %v2256
  %v2281 = vmul.f32 %v1220, %v2260
  %v2282 = vmul.f32 %v1222, %v2264
  %v2283 = vmul.f32 %v1224, %v2268
  %v2284 = vmul.f32 %v1226, %v2272
  %v2285 = vmul.f32 %v1228, %v2276
  %2294 = vrot.lane.b32.xlu0 %v2278, 97
  %v2295 = vpop.permute.xlu0 %2294
  %2296 = vrot.lane.b32.xlu0 %v2279, 97
  %v2297 = vpop.permute.xlu0 %2296
  %2298 = vrot.lane.b32.xlu0 %v2280, 97
  %v2299 = vpop.permute.xlu0 %2298
  %2300 = vrot.lane.b32.xlu0 %v2281, 97
  %v2301 = vpop.permute.xlu0 %2300
  %2302 = vrot.lane.b32.xlu0 %v2282, 97
  %v2303 = vpop.permute.xlu0 %2302
  %2304 = vrot.lane.b32.xlu0 %v2283, 97
  %v2305 = vpop.permute.xlu0 %2304
  %2306 = vrot.lane.b32.xlu0 %v2284, 97
  %v2307 = vpop.permute.xlu0 %2306
  %2308 = vrot.lane.b32.xlu0 %v2285, 97
  %v2309 = vpop.permute.xlu0 %2308
  %v2318 = vadd.f32 %v2238, %v2295
  %v2319 = vadd.f32 %v2239, %v2297
  %v2320 = vadd.f32 %v2240, %v2299
  %v2321 = vadd.f32 %v2241, %v2301
  %v2322 = vadd.f32 %v2242, %v2303
  %v2323 = vadd.f32 %v2243, %v2305
  %v2324 = vadd.f32 %v2244, %v2307
  %v2325 = vadd.f32 %v2245, %v2309
  %2326 = vset.pattern.permute.xlu0 20
  %2327 = vperm.xlu0 %2326, %v1206
  %v2328 = vpop.permute.xlu0 %2327
  %2330 = vset.pattern.permute.xlu0 20
  %2331 = vperm.xlu0 %2330, %v1207
  %v2332 = vpop.permute.xlu0 %2331
  %2334 = vset.pattern.permute.xlu0 20
  %2335 = vperm.xlu0 %2334, %v1208
  %v2336 = vpop.permute.xlu0 %2335
  %2338 = vset.pattern.permute.xlu0 20
  %2339 = vperm.xlu0 %2338, %v1209
  %v2340 = vpop.permute.xlu0 %2339
  %2342 = vset.pattern.permute.xlu0 20
  %2343 = vperm.xlu0 %2342, %v1210
  %v2344 = vpop.permute.xlu0 %2343
  %2346 = vset.pattern.permute.xlu0 20
  %2347 = vperm.xlu0 %2346, %v1211
  %v2348 = vpop.permute.xlu0 %2347
  %2350 = vset.pattern.permute.xlu0 20
  %2351 = vperm.xlu0 %2350, %v1212
  %v2352 = vpop.permute.xlu0 %2351
  %2354 = vset.pattern.permute.xlu0 20
  %2355 = vperm.xlu0 %2354, %v1213
  %v2356 = vpop.permute.xlu0 %2355
  %v2358 = vmul.f32 %v1214, %v2328
  %v2359 = vmul.f32 %v1216, %v2332
  %v2360 = vmul.f32 %v1218, %v2336
  %v2361 = vmul.f32 %v1220, %v2340
  %v2362 = vmul.f32 %v1222, %v2344
  %v2363 = vmul.f32 %v1224, %v2348
  %v2364 = vmul.f32 %v1226, %v2352
  %v2365 = vmul.f32 %v1228, %v2356
  %2374 = vrot.lane.b32.xlu0 %v2358, 96
  %v2375 = vpop.permute.xlu0 %2374
  %2376 = vrot.lane.b32.xlu0 %v2359, 96
  %v2377 = vpop.permute.xlu0 %2376
  %2378 = vrot.lane.b32.xlu0 %v2360, 96
  %v2379 = vpop.permute.xlu0 %2378
  %2380 = vrot.lane.b32.xlu0 %v2361, 96
  %v2381 = vpop.permute.xlu0 %2380
  %2382 = vrot.lane.b32.xlu0 %v2362, 96
  %v2383 = vpop.permute.xlu0 %2382
  %2384 = vrot.lane.b32.xlu0 %v2363, 96
  %v2385 = vpop.permute.xlu0 %2384
  %2386 = vrot.lane.b32.xlu0 %v2364, 96
  %v2387 = vpop.permute.xlu0 %2386
  %2388 = vrot.lane.b32.xlu0 %v2365, 96
  %v2389 = vpop.permute.xlu0 %2388
  %v2398 = vadd.f32 %v2318, %v2375
  %v2399 = vadd.f32 %v2319, %v2377
  %v2400 = vadd.f32 %v2320, %v2379
  %v2401 = vadd.f32 %v2321, %v2381
  %v2402 = vadd.f32 %v2322, %v2383
  %v2403 = vadd.f32 %v2323, %v2385
  %v2404 = vadd.f32 %v2324, %v2387
  %v2405 = vadd.f32 %v2325, %v2389
  %2406 = vset.pattern.permute.xlu0 21
  %2407 = vperm.xlu0 %2406, %v1206
  %v2408 = vpop.permute.xlu0 %2407
  %2410 = vset.pattern.permute.xlu0 21
  %2411 = vperm.xlu0 %2410, %v1207
  %v2412 = vpop.permute.xlu0 %2411
  %2414 = vset.pattern.permute.xlu0 21
  %2415 = vperm.xlu0 %2414, %v1208
  %v2416 = vpop.permute.xlu0 %2415
  %2418 = vset.pattern.permute.xlu0 21
  %2419 = vperm.xlu0 %2418, %v1209
  %v2420 = vpop.permute.xlu0 %2419
  %2422 = vset.pattern.permute.xlu0 21
  %2423 = vperm.xlu0 %2422, %v1210
  %v2424 = vpop.permute.xlu0 %2423
  %2426 = vset.pattern.permute.xlu0 21
  %2427 = vperm.xlu0 %2426, %v1211
  %v2428 = vpop.permute.xlu0 %2427
  %2430 = vset.pattern.permute.xlu0 21
  %2431 = vperm.xlu0 %2430, %v1212
  %v2432 = vpop.permute.xlu0 %2431
  %2434 = vset.pattern.permute.xlu0 21
  %2435 = vperm.xlu0 %2434, %v1213
  %v2436 = vpop.permute.xlu0 %2435
  %v2438 = vmul.f32 %v1214, %v2408
  %v2439 = vmul.f32 %v1216, %v2412
  %v2440 = vmul.f32 %v1218, %v2416
  %v2441 = vmul.f32 %v1220, %v2420
  %v2442 = vmul.f32 %v1222, %v2424
  %v2443 = vmul.f32 %v1224, %v2428
  %v2444 = vmul.f32 %v1226, %v2432
  %v2445 = vmul.f32 %v1228, %v2436
  %2454 = vrot.lane.b32.xlu0 %v2438, 95
  %v2455 = vpop.permute.xlu0 %2454
  %2456 = vrot.lane.b32.xlu0 %v2439, 95
  %v2457 = vpop.permute.xlu0 %2456
  %2458 = vrot.lane.b32.xlu0 %v2440, 95
  %v2459 = vpop.permute.xlu0 %2458
  %2460 = vrot.lane.b32.xlu0 %v2441, 95
  %v2461 = vpop.permute.xlu0 %2460
  %2462 = vrot.lane.b32.xlu0 %v2442, 95
  %v2463 = vpop.permute.xlu0 %2462
  %2464 = vrot.lane.b32.xlu0 %v2443, 95
  %v2465 = vpop.permute.xlu0 %2464
  %2466 = vrot.lane.b32.xlu0 %v2444, 95
  %v2467 = vpop.permute.xlu0 %2466
  %2468 = vrot.lane.b32.xlu0 %v2445, 95
  %v2469 = vpop.permute.xlu0 %2468
  %v2478 = vadd.f32 %v2398, %v2455
  %v2479 = vadd.f32 %v2399, %v2457
  %v2480 = vadd.f32 %v2400, %v2459
  %v2481 = vadd.f32 %v2401, %v2461
  %v2482 = vadd.f32 %v2402, %v2463
  %v2483 = vadd.f32 %v2403, %v2465
  %v2484 = vadd.f32 %v2404, %v2467
  %v2485 = vadd.f32 %v2405, %v2469
  %2494 = vrot.lane.b32.xlu0 %v2478, 84
  %v2495 = vpop.permute.xlu0 %2494
  %2496 = vrot.lane.b32.xlu0 %v2479, 84
  %v2497 = vpop.permute.xlu0 %2496
  %2498 = vrot.lane.b32.xlu0 %v2480, 84
  %v2499 = vpop.permute.xlu0 %2498
  %2500 = vrot.lane.b32.xlu0 %v2481, 84
  %v2501 = vpop.permute.xlu0 %2500
  %2502 = vrot.lane.b32.xlu0 %v2482, 84
  %v2503 = vpop.permute.xlu0 %2502
  %2504 = vrot.lane.b32.xlu0 %v2483, 84
  %v2505 = vpop.permute.xlu0 %2504
  %2506 = vrot.lane.b32.xlu0 %v2484, 84
  %v2507 = vpop.permute.xlu0 %2506
  %2508 = vrot.lane.b32.xlu0 %v2485, 84
  %v2509 = vpop.permute.xlu0 %2508
  %2518 = vrot.lane.b32.xlu0 %v2478, 79
  %v2519 = vpop.permute.xlu0 %2518
  %2520 = vrot.lane.b32.xlu0 %v2479, 79
  %v2521 = vpop.permute.xlu0 %2520
  %2522 = vrot.lane.b32.xlu0 %v2480, 79
  %v2523 = vpop.permute.xlu0 %2522
  %2524 = vrot.lane.b32.xlu0 %v2481, 79
  %v2525 = vpop.permute.xlu0 %2524
  %2526 = vrot.lane.b32.xlu0 %v2482, 79
  %v2527 = vpop.permute.xlu0 %2526
  %2528 = vrot.lane.b32.xlu0 %v2483, 79
  %v2529 = vpop.permute.xlu0 %2528
  %2530 = vrot.lane.b32.xlu0 %v2484, 79
  %v2531 = vpop.permute.xlu0 %2530
  %2532 = vrot.lane.b32.xlu0 %v2485, 79
  %v2533 = vpop.permute.xlu0 %2532
  %2542 = vrot.lane.b32.xlu0 %v2478, 74
  %v2543 = vpop.permute.xlu0 %2542
  %2544 = vrot.lane.b32.xlu0 %v2479, 74
  %v2545 = vpop.permute.xlu0 %2544
  %2546 = vrot.lane.b32.xlu0 %v2480, 74
  %v2547 = vpop.permute.xlu0 %2546
  %2548 = vrot.lane.b32.xlu0 %v2481, 74
  %v2549 = vpop.permute.xlu0 %2548
  %2550 = vrot.lane.b32.xlu0 %v2482, 74
  %v2551 = vpop.permute.xlu0 %2550
  %2552 = vrot.lane.b32.xlu0 %v2483, 74
  %v2553 = vpop.permute.xlu0 %2552
  %2554 = vrot.lane.b32.xlu0 %v2484, 74
  %v2555 = vpop.permute.xlu0 %2554
  %2556 = vrot.lane.b32.xlu0 %v2485, 74
  %v2557 = vpop.permute.xlu0 %2556
  %2566 = vrot.lane.b32.xlu0 %v2478, 69
  %v2567 = vpop.permute.xlu0 %2566
  %2568 = vrot.lane.b32.xlu0 %v2479, 69
  %v2569 = vpop.permute.xlu0 %2568
  %2570 = vrot.lane.b32.xlu0 %v2480, 69
  %v2571 = vpop.permute.xlu0 %2570
  %2572 = vrot.lane.b32.xlu0 %v2481, 69
  %v2573 = vpop.permute.xlu0 %2572
  %2574 = vrot.lane.b32.xlu0 %v2482, 69
  %v2575 = vpop.permute.xlu0 %2574
  %2576 = vrot.lane.b32.xlu0 %v2483, 69
  %v2577 = vpop.permute.xlu0 %2576
  %2578 = vrot.lane.b32.xlu0 %v2484, 69
  %v2579 = vpop.permute.xlu0 %2578
  %2580 = vrot.lane.b32.xlu0 %v2485, 69
  %v2581 = vpop.permute.xlu0 %2580
  %2590 = vrot.lane.b32.xlu0 %v2478, 64
  %v2591 = vpop.permute.xlu0 %2590
  %2592 = vrot.lane.b32.xlu0 %v2479, 64
  %v2593 = vpop.permute.xlu0 %2592
  %2594 = vrot.lane.b32.xlu0 %v2480, 64
  %v2595 = vpop.permute.xlu0 %2594
  %2596 = vrot.lane.b32.xlu0 %v2481, 64
  %v2597 = vpop.permute.xlu0 %2596
  %2598 = vrot.lane.b32.xlu0 %v2482, 64
  %v2599 = vpop.permute.xlu0 %2598
  %2600 = vrot.lane.b32.xlu0 %v2483, 64
  %v2601 = vpop.permute.xlu0 %2600
  %2602 = vrot.lane.b32.xlu0 %v2484, 64
  %v2603 = vpop.permute.xlu0 %2602
  %2604 = vrot.lane.b32.xlu0 %v2485, 64
  %v2605 = vpop.permute.xlu0 %2604
  %vm2614 = vcmask 39936
  %v2615 = vsel %vm2614, %v2495, %v2519
  %v2616 = vsel %vm2614, %v2497, %v2521
  %v2617 = vsel %vm2614, %v2499, %v2523
  %v2618 = vsel %vm2614, %v2501, %v2525
  %v2619 = vsel %vm2614, %v2503, %v2527
  %v2620 = vsel %vm2614, %v2505, %v2529
  %v2621 = vsel %vm2614, %v2507, %v2531
  %v2622 = vsel %vm2614, %v2509, %v2533
  %vm2623 = vcmask 80896
  %v2624 = vsel %vm2623, %v2615, %v2543
  %v2625 = vsel %vm2623, %v2616, %v2545
  %v2626 = vsel %vm2623, %v2617, %v2547
  %v2627 = vsel %vm2623, %v2618, %v2549
  %v2628 = vsel %vm2623, %v2619, %v2551
  %v2629 = vsel %vm2623, %v2620, %v2553
  %v2630 = vsel %vm2623, %v2621, %v2555
  %v2631 = vsel %vm2623, %v2622, %v2557
  %vm2632 = vcmask 121856
  %v2633 = vsel %vm2632, %v2624, %v2567
  %v2634 = vsel %vm2632, %v2625, %v2569
  %v2635 = vsel %vm2632, %v2626, %v2571
  %v2636 = vsel %vm2632, %v2627, %v2573
  %v2637 = vsel %vm2632, %v2628, %v2575
  %v2638 = vsel %vm2632, %v2629, %v2577
  %v2639 = vsel %vm2632, %v2630, %v2579
  %v2640 = vsel %vm2632, %v2631, %v2581
  %vm2641 = vcmask 162816
  %v2642 = vsel %vm2641, %v2633, %v2591
  %v2643 = vsel %vm2641, %v2634, %v2593
  %v2644 = vsel %vm2641, %v2635, %v2595
  %v2645 = vsel %vm2641, %v2636, %v2597
  %v2646 = vsel %vm2641, %v2637, %v2599
  %v2647 = vsel %vm2641, %v2638, %v2601
  %v2648 = vsel %vm2641, %v2639, %v2603
  %v2649 = vsel %vm2641, %v2640, %v2605
  %2650 = vset.pattern.permute.xlu0 22
  %2651 = vperm.xlu0 %2650, %v1206
  %v2652 = vpop.permute.xlu0 %2651
  %2654 = vset.pattern.permute.xlu0 22
  %2655 = vperm.xlu0 %2654, %v1207
  %v2656 = vpop.permute.xlu0 %2655
  %2658 = vset.pattern.permute.xlu0 22
  %2659 = vperm.xlu0 %2658, %v1208
  %v2660 = vpop.permute.xlu0 %2659
  %2662 = vset.pattern.permute.xlu0 22
  %2663 = vperm.xlu0 %2662, %v1209
  %v2664 = vpop.permute.xlu0 %2663
  %2666 = vset.pattern.permute.xlu0 22
  %2667 = vperm.xlu0 %2666, %v1210
  %v2668 = vpop.permute.xlu0 %2667
  %2670 = vset.pattern.permute.xlu0 22
  %2671 = vperm.xlu0 %2670, %v1211
  %v2672 = vpop.permute.xlu0 %2671
  %2674 = vset.pattern.permute.xlu0 22
  %2675 = vperm.xlu0 %2674, %v1212
  %v2676 = vpop.permute.xlu0 %2675
  %2678 = vset.pattern.permute.xlu0 22
  %2679 = vperm.xlu0 %2678, %v1213
  %v2680 = vpop.permute.xlu0 %2679
  %v2682 = vmul.f32 %v1214, %v2652
  %v2683 = vmul.f32 %v1215, %v2652
  %v2684 = vmul.f32 %v1216, %v2656
  %v2685 = vmul.f32 %v1217, %v2656
  %v2686 = vmul.f32 %v1218, %v2660
  %v2687 = vmul.f32 %v1219, %v2660
  %v2688 = vmul.f32 %v1220, %v2664
  %v2689 = vmul.f32 %v1221, %v2664
  %v2690 = vmul.f32 %v1222, %v2668
  %v2691 = vmul.f32 %v1223, %v2668
  %v2692 = vmul.f32 %v1224, %v2672
  %v2693 = vmul.f32 %v1225, %v2672
  %v2694 = vmul.f32 %v1226, %v2676
  %v2695 = vmul.f32 %v1227, %v2676
  %v2696 = vmul.f32 %v1228, %v2680
  %v2697 = vmul.f32 %v1229, %v2680
  %v2698 = vadd.f32 %v2682, 0.0
  %v2699 = vadd.f32 %v2683, 0.0
  %v2700 = vadd.f32 %v2684, 0.0
  %v2701 = vadd.f32 %v2685, 0.0
  %v2702 = vadd.f32 %v2686, 0.0
  %v2703 = vadd.f32 %v2687, 0.0
  %v2704 = vadd.f32 %v2688, 0.0
  %v2705 = vadd.f32 %v2689, 0.0
  %v2706 = vadd.f32 %v2690, 0.0
  %v2707 = vadd.f32 %v2691, 0.0
  %v2708 = vadd.f32 %v2692, 0.0
  %v2709 = vadd.f32 %v2693, 0.0
  %v2710 = vadd.f32 %v2694, 0.0
  %v2711 = vadd.f32 %v2695, 0.0
  %v2712 = vadd.f32 %v2696, 0.0
  %v2713 = vadd.f32 %v2697, 0.0
  %2714 = vset.pattern.permute.xlu0 23
  %2715 = vperm.xlu0 %2714, %v1206
  %v2716 = vpop.permute.xlu0 %2715
  %2718 = vset.pattern.permute.xlu0 23
  %2719 = vperm.xlu0 %2718, %v1207
  %v2720 = vpop.permute.xlu0 %2719
  %2722 = vset.pattern.permute.xlu0 23
  %2723 = vperm.xlu0 %2722, %v1208
  %v2724 = vpop.permute.xlu0 %2723
  %2726 = vset.pattern.permute.xlu0 23
  %2727 = vperm.xlu0 %2726, %v1209
  %v2728 = vpop.permute.xlu0 %2727
  %2730 = vset.pattern.permute.xlu0 23
  %2731 = vperm.xlu0 %2730, %v1210
  %v2732 = vpop.permute.xlu0 %2731
  %2734 = vset.pattern.permute.xlu0 23
  %2735 = vperm.xlu0 %2734, %v1211
  %v2736 = vpop.permute.xlu0 %2735
  %2738 = vset.pattern.permute.xlu0 23
  %2739 = vperm.xlu0 %2738, %v1212
  %v2740 = vpop.permute.xlu0 %2739
  %2742 = vset.pattern.permute.xlu0 23
  %2743 = vperm.xlu0 %2742, %v1213
  %v2744 = vpop.permute.xlu0 %2743
  %v2746 = vmul.f32 %v1214, %v2716
  %v2747 = vmul.f32 %v1215, %v2716
  %v2748 = vmul.f32 %v1216, %v2720
  %v2749 = vmul.f32 %v1217, %v2720
  %v2750 = vmul.f32 %v1218, %v2724
  %v2751 = vmul.f32 %v1219, %v2724
  %v2752 = vmul.f32 %v1220, %v2728
  %v2753 = vmul.f32 %v1221, %v2728
  %v2754 = vmul.f32 %v1222, %v2732
  %v2755 = vmul.f32 %v1223, %v2732
  %v2756 = vmul.f32 %v1224, %v2736
  %v2757 = vmul.f32 %v1225, %v2736
  %v2758 = vmul.f32 %v1226, %v2740
  %v2759 = vmul.f32 %v1227, %v2740
  %v2760 = vmul.f32 %v1228, %v2744
  %v2761 = vmul.f32 %v1229, %v2744
  %2778 = vrot.lane.b32.xlu0 %v2746, 127
  %v2779 = vpop.permute.xlu0 %2778
  %2780 = vrot.lane.b32.xlu0 %v2747, 127
  %v2781 = vpop.permute.xlu0 %2780
  %2782 = vrot.lane.b32.xlu0 %v2748, 127
  %v2783 = vpop.permute.xlu0 %2782
  %2784 = vrot.lane.b32.xlu0 %v2749, 127
  %v2785 = vpop.permute.xlu0 %2784
  %2786 = vrot.lane.b32.xlu0 %v2750, 127
  %v2787 = vpop.permute.xlu0 %2786
  %2788 = vrot.lane.b32.xlu0 %v2751, 127
  %v2789 = vpop.permute.xlu0 %2788
  %2790 = vrot.lane.b32.xlu0 %v2752, 127
  %v2791 = vpop.permute.xlu0 %2790
  %2792 = vrot.lane.b32.xlu0 %v2753, 127
  %v2793 = vpop.permute.xlu0 %2792
  %2794 = vrot.lane.b32.xlu0 %v2754, 127
  %v2795 = vpop.permute.xlu0 %2794
  %2796 = vrot.lane.b32.xlu0 %v2755, 127
  %v2797 = vpop.permute.xlu0 %2796
  %2798 = vrot.lane.b32.xlu0 %v2756, 127
  %v2799 = vpop.permute.xlu0 %2798
  %2800 = vrot.lane.b32.xlu0 %v2757, 127
  %v2801 = vpop.permute.xlu0 %2800
  %2802 = vrot.lane.b32.xlu0 %v2758, 127
  %v2803 = vpop.permute.xlu0 %2802
  %2804 = vrot.lane.b32.xlu0 %v2759, 127
  %v2805 = vpop.permute.xlu0 %2804
  %2806 = vrot.lane.b32.xlu0 %v2760, 127
  %v2807 = vpop.permute.xlu0 %2806
  %2808 = vrot.lane.b32.xlu0 %v2761, 127
  %v2809 = vpop.permute.xlu0 %2808
  %vm2810 = vcmask 1039360
  %v2811 = vsel %vm2810, %v2779, %v2781
  %v2812 = vsel %vm2810, %v2783, %v2785
  %v2813 = vsel %vm2810, %v2787, %v2789
  %v2814 = vsel %vm2810, %v2791, %v2793
  %v2815 = vsel %vm2810, %v2795, %v2797
  %v2816 = vsel %vm2810, %v2799, %v2801
  %v2817 = vsel %vm2810, %v2803, %v2805
  %v2818 = vsel %vm2810, %v2807, %v2809
  %v2835 = vadd.f32 %v2698, %v2811
  %v2836 = vadd.f32 %v2699, %v2781
  %v2837 = vadd.f32 %v2700, %v2812
  %v2838 = vadd.f32 %v2701, %v2785
  %v2839 = vadd.f32 %v2702, %v2813
  %v2840 = vadd.f32 %v2703, %v2789
  %v2841 = vadd.f32 %v2704, %v2814
  %v2842 = vadd.f32 %v2705, %v2793
  %v2843 = vadd.f32 %v2706, %v2815
  %v2844 = vadd.f32 %v2707, %v2797
  %v2845 = vadd.f32 %v2708, %v2816
  %v2846 = vadd.f32 %v2709, %v2801
  %v2847 = vadd.f32 %v2710, %v2817
  %v2848 = vadd.f32 %v2711, %v2805
  %v2849 = vadd.f32 %v2712, %v2818
  %v2850 = vadd.f32 %v2713, %v2809
  %2851 = vset.pattern.permute.xlu0 24
  %2852 = vperm.xlu0 %2851, %v1206
  %v2853 = vpop.permute.xlu0 %2852
  %2855 = vset.pattern.permute.xlu0 24
  %2856 = vperm.xlu0 %2855, %v1207
  %v2857 = vpop.permute.xlu0 %2856
  %2859 = vset.pattern.permute.xlu0 24
  %2860 = vperm.xlu0 %2859, %v1208
  %v2861 = vpop.permute.xlu0 %2860
  %2863 = vset.pattern.permute.xlu0 24
  %2864 = vperm.xlu0 %2863, %v1209
  %v2865 = vpop.permute.xlu0 %2864
  %2867 = vset.pattern.permute.xlu0 24
  %2868 = vperm.xlu0 %2867, %v1210
  %v2869 = vpop.permute.xlu0 %2868
  %2871 = vset.pattern.permute.xlu0 24
  %2872 = vperm.xlu0 %2871, %v1211
  %v2873 = vpop.permute.xlu0 %2872
  %2875 = vset.pattern.permute.xlu0 24
  %2876 = vperm.xlu0 %2875, %v1212
  %v2877 = vpop.permute.xlu0 %2876
  %2879 = vset.pattern.permute.xlu0 24
  %2880 = vperm.xlu0 %2879, %v1213
  %v2881 = vpop.permute.xlu0 %2880
  %v2883 = vmul.f32 %v1214, %v2853
  %v2884 = vmul.f32 %v1215, %v2853
  %v2885 = vmul.f32 %v1216, %v2857
  %v2886 = vmul.f32 %v1217, %v2857
  %v2887 = vmul.f32 %v1218, %v2861
  %v2888 = vmul.f32 %v1219, %v2861
  %v2889 = vmul.f32 %v1220, %v2865
  %v2890 = vmul.f32 %v1221, %v2865
  %v2891 = vmul.f32 %v1222, %v2869
  %v2892 = vmul.f32 %v1223, %v2869
  %v2893 = vmul.f32 %v1224, %v2873
  %v2894 = vmul.f32 %v1225, %v2873
  %v2895 = vmul.f32 %v1226, %v2877
  %v2896 = vmul.f32 %v1227, %v2877
  %v2897 = vmul.f32 %v1228, %v2881
  %v2898 = vmul.f32 %v1229, %v2881
  %2915 = vrot.lane.b32.xlu0 %v2883, 126
  %v2916 = vpop.permute.xlu0 %2915
  %2917 = vrot.lane.b32.xlu0 %v2884, 126
  %v2918 = vpop.permute.xlu0 %2917
  %2919 = vrot.lane.b32.xlu0 %v2885, 126
  %v2920 = vpop.permute.xlu0 %2919
  %2921 = vrot.lane.b32.xlu0 %v2886, 126
  %v2922 = vpop.permute.xlu0 %2921
  %2923 = vrot.lane.b32.xlu0 %v2887, 126
  %v2924 = vpop.permute.xlu0 %2923
  %2925 = vrot.lane.b32.xlu0 %v2888, 126
  %v2926 = vpop.permute.xlu0 %2925
  %2927 = vrot.lane.b32.xlu0 %v2889, 126
  %v2928 = vpop.permute.xlu0 %2927
  %2929 = vrot.lane.b32.xlu0 %v2890, 126
  %v2930 = vpop.permute.xlu0 %2929
  %2931 = vrot.lane.b32.xlu0 %v2891, 126
  %v2932 = vpop.permute.xlu0 %2931
  %2933 = vrot.lane.b32.xlu0 %v2892, 126
  %v2934 = vpop.permute.xlu0 %2933
  %2935 = vrot.lane.b32.xlu0 %v2893, 126
  %v2936 = vpop.permute.xlu0 %2935
  %2937 = vrot.lane.b32.xlu0 %v2894, 126
  %v2938 = vpop.permute.xlu0 %2937
  %2939 = vrot.lane.b32.xlu0 %v2895, 126
  %v2940 = vpop.permute.xlu0 %2939
  %2941 = vrot.lane.b32.xlu0 %v2896, 126
  %v2942 = vpop.permute.xlu0 %2941
  %2943 = vrot.lane.b32.xlu0 %v2897, 126
  %v2944 = vpop.permute.xlu0 %2943
  %2945 = vrot.lane.b32.xlu0 %v2898, 126
  %v2946 = vpop.permute.xlu0 %2945
  %vm2947 = vcmask 1031168
  %v2948 = vsel %vm2947, %v2916, %v2918
  %v2949 = vsel %vm2947, %v2920, %v2922
  %v2950 = vsel %vm2947, %v2924, %v2926
  %v2951 = vsel %vm2947, %v2928, %v2930
  %v2952 = vsel %vm2947, %v2932, %v2934
  %v2953 = vsel %vm2947, %v2936, %v2938
  %v2954 = vsel %vm2947, %v2940, %v2942
  %v2955 = vsel %vm2947, %v2944, %v2946
  %v2972 = vadd.f32 %v2835, %v2948
  %v2973 = vadd.f32 %v2836, %v2918
  %v2974 = vadd.f32 %v2837, %v2949
  %v2975 = vadd.f32 %v2838, %v2922
  %v2976 = vadd.f32 %v2839, %v2950
  %v2977 = vadd.f32 %v2840, %v2926
  %v2978 = vadd.f32 %v2841, %v2951
  %v2979 = vadd.f32 %v2842, %v2930
  %v2980 = vadd.f32 %v2843, %v2952
  %v2981 = vadd.f32 %v2844, %v2934
  %v2982 = vadd.f32 %v2845, %v2953
  %v2983 = vadd.f32 %v2846, %v2938
  %v2984 = vadd.f32 %v2847, %v2954
  %v2985 = vadd.f32 %v2848, %v2942
  %v2986 = vadd.f32 %v2849, %v2955
  %v2987 = vadd.f32 %v2850, %v2946
  %2988 = vset.pattern.permute.xlu0 25
  %2989 = vperm.xlu0 %2988, %v1206
  %v2990 = vpop.permute.xlu0 %2989
  %2992 = vset.pattern.permute.xlu0 25
  %2993 = vperm.xlu0 %2992, %v1207
  %v2994 = vpop.permute.xlu0 %2993
  %2996 = vset.pattern.permute.xlu0 25
  %2997 = vperm.xlu0 %2996, %v1208
  %v2998 = vpop.permute.xlu0 %2997
  %3000 = vset.pattern.permute.xlu0 25
  %3001 = vperm.xlu0 %3000, %v1209
  %v3002 = vpop.permute.xlu0 %3001
  %3004 = vset.pattern.permute.xlu0 25
  %3005 = vperm.xlu0 %3004, %v1210
  %v3006 = vpop.permute.xlu0 %3005
  %3008 = vset.pattern.permute.xlu0 25
  %3009 = vperm.xlu0 %3008, %v1211
  %v3010 = vpop.permute.xlu0 %3009
  %3012 = vset.pattern.permute.xlu0 25
  %3013 = vperm.xlu0 %3012, %v1212
  %v3014 = vpop.permute.xlu0 %3013
  %3016 = vset.pattern.permute.xlu0 25
  %3017 = vperm.xlu0 %3016, %v1213
  %v3018 = vpop.permute.xlu0 %3017
  %v3020 = vmul.f32 %v1214, %v2990
  %v3021 = vmul.f32 %v1215, %v2990
  %v3022 = vmul.f32 %v1216, %v2994
  %v3023 = vmul.f32 %v1217, %v2994
  %v3024 = vmul.f32 %v1218, %v2998
  %v3025 = vmul.f32 %v1219, %v2998
  %v3026 = vmul.f32 %v1220, %v3002
  %v3027 = vmul.f32 %v1221, %v3002
  %v3028 = vmul.f32 %v1222, %v3006
  %v3029 = vmul.f32 %v1223, %v3006
  %v3030 = vmul.f32 %v1224, %v3010
  %v3031 = vmul.f32 %v1225, %v3010
  %v3032 = vmul.f32 %v1226, %v3014
  %v3033 = vmul.f32 %v1227, %v3014
  %v3034 = vmul.f32 %v1228, %v3018
  %v3035 = vmul.f32 %v1229, %v3018
  %3052 = vrot.lane.b32.xlu0 %v3020, 125
  %v3053 = vpop.permute.xlu0 %3052
  %3054 = vrot.lane.b32.xlu0 %v3021, 125
  %v3055 = vpop.permute.xlu0 %3054
  %3056 = vrot.lane.b32.xlu0 %v3022, 125
  %v3057 = vpop.permute.xlu0 %3056
  %3058 = vrot.lane.b32.xlu0 %v3023, 125
  %v3059 = vpop.permute.xlu0 %3058
  %3060 = vrot.lane.b32.xlu0 %v3024, 125
  %v3061 = vpop.permute.xlu0 %3060
  %3062 = vrot.lane.b32.xlu0 %v3025, 125
  %v3063 = vpop.permute.xlu0 %3062
  %3064 = vrot.lane.b32.xlu0 %v3026, 125
  %v3065 = vpop.permute.xlu0 %3064
  %3066 = vrot.lane.b32.xlu0 %v3027, 125
  %v3067 = vpop.permute.xlu0 %3066
  %3068 = vrot.lane.b32.xlu0 %v3028, 125
  %v3069 = vpop.permute.xlu0 %3068
  %3070 = vrot.lane.b32.xlu0 %v3029, 125
  %v3071 = vpop.permute.xlu0 %3070
  %3072 = vrot.lane.b32.xlu0 %v3030, 125
  %v3073 = vpop.permute.xlu0 %3072
  %3074 = vrot.lane.b32.xlu0 %v3031, 125
  %v3075 = vpop.permute.xlu0 %3074
  %3076 = vrot.lane.b32.xlu0 %v3032, 125
  %v3077 = vpop.permute.xlu0 %3076
  %3078 = vrot.lane.b32.xlu0 %v3033, 125
  %v3079 = vpop.permute.xlu0 %3078
  %3080 = vrot.lane.b32.xlu0 %v3034, 125
  %v3081 = vpop.permute.xlu0 %3080
  %3082 = vrot.lane.b32.xlu0 %v3035, 125
  %v3083 = vpop.permute.xlu0 %3082
  %vm3084 = vcmask 1022976
  %v3085 = vsel %vm3084, %v3053, %v3055
  %v3086 = vsel %vm3084, %v3057, %v3059
  %v3087 = vsel %vm3084, %v3061, %v3063
  %v3088 = vsel %vm3084, %v3065, %v3067
  %v3089 = vsel %vm3084, %v3069, %v3071
  %v3090 = vsel %vm3084, %v3073, %v3075
  %v3091 = vsel %vm3084, %v3077, %v3079
  %v3092 = vsel %vm3084, %v3081, %v3083
  %v3109 = vadd.f32 %v2972, %v3085
  %v3110 = vadd.f32 %v2973, %v3055
  %v3111 = vadd.f32 %v2974, %v3086
  %v3112 = vadd.f32 %v2975, %v3059
  %v3113 = vadd.f32 %v2976, %v3087
  %v3114 = vadd.f32 %v2977, %v3063
  %v3115 = vadd.f32 %v2978, %v3088
  %v3116 = vadd.f32 %v2979, %v3067
  %v3117 = vadd.f32 %v2980, %v3089
  %v3118 = vadd.f32 %v2981, %v3071
  %v3119 = vadd.f32 %v2982, %v3090
  %v3120 = vadd.f32 %v2983, %v3075
  %v3121 = vadd.f32 %v2984, %v3091
  %v3122 = vadd.f32 %v2985, %v3079
  %v3123 = vadd.f32 %v2986, %v3092
  %v3124 = vadd.f32 %v2987, %v3083
  %3125 = vset.pattern.permute.xlu0 28
  %3126 = vperm.xlu0 %3125, %v1206
  %v3127 = vpop.permute.xlu0 %3126
  %3129 = vset.pattern.permute.xlu0 28
  %3130 = vperm.xlu0 %3129, %v1207
  %v3131 = vpop.permute.xlu0 %3130
  %3133 = vset.pattern.permute.xlu0 28
  %3134 = vperm.xlu0 %3133, %v1208
  %v3135 = vpop.permute.xlu0 %3134
  %3137 = vset.pattern.permute.xlu0 28
  %3138 = vperm.xlu0 %3137, %v1209
  %v3139 = vpop.permute.xlu0 %3138
  %3141 = vset.pattern.permute.xlu0 28
  %3142 = vperm.xlu0 %3141, %v1210
  %v3143 = vpop.permute.xlu0 %3142
  %3145 = vset.pattern.permute.xlu0 28
  %3146 = vperm.xlu0 %3145, %v1211
  %v3147 = vpop.permute.xlu0 %3146
  %3149 = vset.pattern.permute.xlu0 28
  %3150 = vperm.xlu0 %3149, %v1212
  %v3151 = vpop.permute.xlu0 %3150
  %3153 = vset.pattern.permute.xlu0 28
  %3154 = vperm.xlu0 %3153, %v1213
  %v3155 = vpop.permute.xlu0 %3154
  %v3157 = vmul.f32 %v1215, %v3127
  %v3158 = vmul.f32 %v1217, %v3131
  %v3159 = vmul.f32 %v1219, %v3135
  %v3160 = vmul.f32 %v1221, %v3139
  %v3161 = vmul.f32 %v1223, %v3143
  %v3162 = vmul.f32 %v1225, %v3147
  %v3163 = vmul.f32 %v1227, %v3151
  %v3164 = vmul.f32 %v1229, %v3155
  %3173 = vrot.lane.b32.xlu0 %v3157, 118
  %v3174 = vpop.permute.xlu0 %3173
  %3175 = vrot.lane.b32.xlu0 %v3158, 118
  %v3176 = vpop.permute.xlu0 %3175
  %3177 = vrot.lane.b32.xlu0 %v3159, 118
  %v3178 = vpop.permute.xlu0 %3177
  %3179 = vrot.lane.b32.xlu0 %v3160, 118
  %v3180 = vpop.permute.xlu0 %3179
  %3181 = vrot.lane.b32.xlu0 %v3161, 118
  %v3182 = vpop.permute.xlu0 %3181
  %3183 = vrot.lane.b32.xlu0 %v3162, 118
  %v3184 = vpop.permute.xlu0 %3183
  %3185 = vrot.lane.b32.xlu0 %v3163, 118
  %v3186 = vpop.permute.xlu0 %3185
  %3187 = vrot.lane.b32.xlu0 %v3164, 118
  %v3188 = vpop.permute.xlu0 %3187
  %v3197 = vadd.f32 %v3109, %v3174
  %v3198 = vadd.f32 %v3110, %v3174
  %v3199 = vadd.f32 %v3111, %v3176
  %v3200 = vadd.f32 %v3112, %v3176
  %v3201 = vadd.f32 %v3113, %v3178
  %v3202 = vadd.f32 %v3114, %v3178
  %v3203 = vadd.f32 %v3115, %v3180
  %v3204 = vadd.f32 %v3116, %v3180
  %v3205 = vadd.f32 %v3117, %v3182
  %v3206 = vadd.f32 %v3118, %v3182
  %v3207 = vadd.f32 %v3119, %v3184
  %v3208 = vadd.f32 %v3120, %v3184
  %v3209 = vadd.f32 %v3121, %v3186
  %v3210 = vadd.f32 %v3122, %v3186
  %v3211 = vadd.f32 %v3123, %v3188
  %v3212 = vadd.f32 %v3124, %v3188
  %3213 = vset.pattern.permute.xlu0 29
  %3214 = vperm.xlu0 %3213, %v1206
  %v3215 = vpop.permute.xlu0 %3214
  %3217 = vset.pattern.permute.xlu0 29
  %3218 = vperm.xlu0 %3217, %v1207
  %v3219 = vpop.permute.xlu0 %3218
  %3221 = vset.pattern.permute.xlu0 29
  %3222 = vperm.xlu0 %3221, %v1208
  %v3223 = vpop.permute.xlu0 %3222
  %3225 = vset.pattern.permute.xlu0 29
  %3226 = vperm.xlu0 %3225, %v1209
  %v3227 = vpop.permute.xlu0 %3226
  %3229 = vset.pattern.permute.xlu0 29
  %3230 = vperm.xlu0 %3229, %v1210
  %v3231 = vpop.permute.xlu0 %3230
  %3233 = vset.pattern.permute.xlu0 29
  %3234 = vperm.xlu0 %3233, %v1211
  %v3235 = vpop.permute.xlu0 %3234
  %3237 = vset.pattern.permute.xlu0 29
  %3238 = vperm.xlu0 %3237, %v1212
  %v3239 = vpop.permute.xlu0 %3238
  %3241 = vset.pattern.permute.xlu0 29
  %3242 = vperm.xlu0 %3241, %v1213
  %v3243 = vpop.permute.xlu0 %3242
  %v3245 = vmul.f32 %v1215, %v3215
  %v3246 = vmul.f32 %v1217, %v3219
  %v3247 = vmul.f32 %v1219, %v3223
  %v3248 = vmul.f32 %v1221, %v3227
  %v3249 = vmul.f32 %v1223, %v3231
  %v3250 = vmul.f32 %v1225, %v3235
  %v3251 = vmul.f32 %v1227, %v3239
  %v3252 = vmul.f32 %v1229, %v3243
  %3261 = vrot.lane.b32.xlu0 %v3245, 117
  %v3262 = vpop.permute.xlu0 %3261
  %3263 = vrot.lane.b32.xlu0 %v3246, 117
  %v3264 = vpop.permute.xlu0 %3263
  %3265 = vrot.lane.b32.xlu0 %v3247, 117
  %v3266 = vpop.permute.xlu0 %3265
  %3267 = vrot.lane.b32.xlu0 %v3248, 117
  %v3268 = vpop.permute.xlu0 %3267
  %3269 = vrot.lane.b32.xlu0 %v3249, 117
  %v3270 = vpop.permute.xlu0 %3269
  %3271 = vrot.lane.b32.xlu0 %v3250, 117
  %v3272 = vpop.permute.xlu0 %3271
  %3273 = vrot.lane.b32.xlu0 %v3251, 117
  %v3274 = vpop.permute.xlu0 %3273
  %3275 = vrot.lane.b32.xlu0 %v3252, 117
  %v3276 = vpop.permute.xlu0 %3275
  %v3285 = vadd.f32 %v3197, %v3262
  %v3286 = vadd.f32 %v3198, %v3262
  %v3287 = vadd.f32 %v3199, %v3264
  %v3288 = vadd.f32 %v3200, %v3264
  %v3289 = vadd.f32 %v3201, %v3266
  %v3290 = vadd.f32 %v3202, %v3266
  %v3291 = vadd.f32 %v3203, %v3268
  %v3292 = vadd.f32 %v3204, %v3268
  %v3293 = vadd.f32 %v3205, %v3270
  %v3294 = vadd.f32 %v3206, %v3270
  %v3295 = vadd.f32 %v3207, %v3272
  %v3296 = vadd.f32 %v3208, %v3272
  %v3297 = vadd.f32 %v3209, %v3274
  %v3298 = vadd.f32 %v3210, %v3274
  %v3299 = vadd.f32 %v3211, %v3276
  %v3300 = vadd.f32 %v3212, %v3276
  %3301 = vset.pattern.permute.xlu0 30
  %3302 = vperm.xlu0 %3301, %v1206
  %v3303 = vpop.permute.xlu0 %3302
  %3305 = vset.pattern.permute.xlu0 30
  %3306 = vperm.xlu0 %3305, %v1207
  %v3307 = vpop.permute.xlu0 %3306
  %3309 = vset.pattern.permute.xlu0 30
  %3310 = vperm.xlu0 %3309, %v1208
  %v3311 = vpop.permute.xlu0 %3310
  %3313 = vset.pattern.permute.xlu0 30
  %3314 = vperm.xlu0 %3313, %v1209
  %v3315 = vpop.permute.xlu0 %3314
  %3317 = vset.pattern.permute.xlu0 30
  %3318 = vperm.xlu0 %3317, %v1210
  %v3319 = vpop.permute.xlu0 %3318
  %3321 = vset.pattern.permute.xlu0 30
  %3322 = vperm.xlu0 %3321, %v1211
  %v3323 = vpop.permute.xlu0 %3322
  %3325 = vset.pattern.permute.xlu0 30
  %3326 = vperm.xlu0 %3325, %v1212
  %v3327 = vpop.permute.xlu0 %3326
  %3329 = vset.pattern.permute.xlu0 30
  %3330 = vperm.xlu0 %3329, %v1213
  %v3331 = vpop.permute.xlu0 %3330
  %v3333 = vmul.f32 %v1215, %v3303
  %v3334 = vmul.f32 %v1217, %v3307
  %v3335 = vmul.f32 %v1219, %v3311
  %v3336 = vmul.f32 %v1221, %v3315
  %v3337 = vmul.f32 %v1223, %v3319
  %v3338 = vmul.f32 %v1225, %v3323
  %v3339 = vmul.f32 %v1227, %v3327
  %v3340 = vmul.f32 %v1229, %v3331
  %3349 = vrot.lane.b32.xlu0 %v3333, 116
  %v3350 = vpop.permute.xlu0 %3349
  %3351 = vrot.lane.b32.xlu0 %v3334, 116
  %v3352 = vpop.permute.xlu0 %3351
  %3353 = vrot.lane.b32.xlu0 %v3335, 116
  %v3354 = vpop.permute.xlu0 %3353
  %3355 = vrot.lane.b32.xlu0 %v3336, 116
  %v3356 = vpop.permute.xlu0 %3355
  %3357 = vrot.lane.b32.xlu0 %v3337, 116
  %v3358 = vpop.permute.xlu0 %3357
  %3359 = vrot.lane.b32.xlu0 %v3338, 116
  %v3360 = vpop.permute.xlu0 %3359
  %3361 = vrot.lane.b32.xlu0 %v3339, 116
  %v3362 = vpop.permute.xlu0 %3361
  %3363 = vrot.lane.b32.xlu0 %v3340, 116
  %v3364 = vpop.permute.xlu0 %3363
  %v3373 = vadd.f32 %v3285, %v3350
  %v3374 = vadd.f32 %v3286, %v3350
  %v3375 = vadd.f32 %v3287, %v3352
  %v3376 = vadd.f32 %v3288, %v3352
  %v3377 = vadd.f32 %v3289, %v3354
  %v3378 = vadd.f32 %v3290, %v3354
  %v3379 = vadd.f32 %v3291, %v3356
  %v3380 = vadd.f32 %v3292, %v3356
  %v3381 = vadd.f32 %v3293, %v3358
  %v3382 = vadd.f32 %v3294, %v3358
  %v3383 = vadd.f32 %v3295, %v3360
  %v3384 = vadd.f32 %v3296, %v3360
  %v3385 = vadd.f32 %v3297, %v3362
  %v3386 = vadd.f32 %v3298, %v3362
  %v3387 = vadd.f32 %v3299, %v3364
  %v3388 = vadd.f32 %v3300, %v3364
  %3389 = vset.pattern.permute.xlu0 31
  %3390 = vperm.xlu0 %3389, %v1206
  %v3391 = vpop.permute.xlu0 %3390
  %3393 = vset.pattern.permute.xlu0 31
  %3394 = vperm.xlu0 %3393, %v1207
  %v3395 = vpop.permute.xlu0 %3394
  %3397 = vset.pattern.permute.xlu0 31
  %3398 = vperm.xlu0 %3397, %v1208
  %v3399 = vpop.permute.xlu0 %3398
  %3401 = vset.pattern.permute.xlu0 31
  %3402 = vperm.xlu0 %3401, %v1209
  %v3403 = vpop.permute.xlu0 %3402
  %3405 = vset.pattern.permute.xlu0 31
  %3406 = vperm.xlu0 %3405, %v1210
  %v3407 = vpop.permute.xlu0 %3406
  %3409 = vset.pattern.permute.xlu0 31
  %3410 = vperm.xlu0 %3409, %v1211
  %v3411 = vpop.permute.xlu0 %3410
  %3413 = vset.pattern.permute.xlu0 31
  %3414 = vperm.xlu0 %3413, %v1212
  %v3415 = vpop.permute.xlu0 %3414
  %3417 = vset.pattern.permute.xlu0 31
  %3418 = vperm.xlu0 %3417, %v1213
  %v3419 = vpop.permute.xlu0 %3418
  %v3421 = vmul.f32 %v1215, %v3391
  %v3422 = vmul.f32 %v1217, %v3395
  %v3423 = vmul.f32 %v1219, %v3399
  %v3424 = vmul.f32 %v1221, %v3403
  %v3425 = vmul.f32 %v1223, %v3407
  %v3426 = vmul.f32 %v1225, %v3411
  %v3427 = vmul.f32 %v1227, %v3415
  %v3428 = vmul.f32 %v1229, %v3419
  %3437 = vrot.lane.b32.xlu0 %v3421, 115
  %v3438 = vpop.permute.xlu0 %3437
  %3439 = vrot.lane.b32.xlu0 %v3422, 115
  %v3440 = vpop.permute.xlu0 %3439
  %3441 = vrot.lane.b32.xlu0 %v3423, 115
  %v3442 = vpop.permute.xlu0 %3441
  %3443 = vrot.lane.b32.xlu0 %v3424, 115
  %v3444 = vpop.permute.xlu0 %3443
  %3445 = vrot.lane.b32.xlu0 %v3425, 115
  %v3446 = vpop.permute.xlu0 %3445
  %3447 = vrot.lane.b32.xlu0 %v3426, 115
  %v3448 = vpop.permute.xlu0 %3447
  %3449 = vrot.lane.b32.xlu0 %v3427, 115
  %v3450 = vpop.permute.xlu0 %3449
  %3451 = vrot.lane.b32.xlu0 %v3428, 115
  %v3452 = vpop.permute.xlu0 %3451
  %v3461 = vadd.f32 %v3373, %v3438
  %v3462 = vadd.f32 %v3374, %v3438
  %v3463 = vadd.f32 %v3375, %v3440
  %v3464 = vadd.f32 %v3376, %v3440
  %v3465 = vadd.f32 %v3377, %v3442
  %v3466 = vadd.f32 %v3378, %v3442
  %v3467 = vadd.f32 %v3379, %v3444
  %v3468 = vadd.f32 %v3380, %v3444
  %v3469 = vadd.f32 %v3381, %v3446
  %v3470 = vadd.f32 %v3382, %v3446
  %v3471 = vadd.f32 %v3383, %v3448
  %v3472 = vadd.f32 %v3384, %v3448
  %v3473 = vadd.f32 %v3385, %v3450
  %v3474 = vadd.f32 %v3386, %v3450
  %v3475 = vadd.f32 %v3387, %v3452
  %v3476 = vadd.f32 %v3388, %v3452
  %3477 = vset.pattern.permute.xlu0 34
  %3478 = vperm.xlu0 %3477, %v1206
  %v3479 = vpop.permute.xlu0 %3478
  %3481 = vset.pattern.permute.xlu0 34
  %3482 = vperm.xlu0 %3481, %v1207
  %v3483 = vpop.permute.xlu0 %3482
  %3485 = vset.pattern.permute.xlu0 34
  %3486 = vperm.xlu0 %3485, %v1208
  %v3487 = vpop.permute.xlu0 %3486
  %3489 = vset.pattern.permute.xlu0 34
  %3490 = vperm.xlu0 %3489, %v1209
  %v3491 = vpop.permute.xlu0 %3490
  %3493 = vset.pattern.permute.xlu0 34
  %3494 = vperm.xlu0 %3493, %v1210
  %v3495 = vpop.permute.xlu0 %3494
  %3497 = vset.pattern.permute.xlu0 34
  %3498 = vperm.xlu0 %3497, %v1211
  %v3499 = vpop.permute.xlu0 %3498
  %3501 = vset.pattern.permute.xlu0 34
  %3502 = vperm.xlu0 %3501, %v1212
  %v3503 = vpop.permute.xlu0 %3502
  %3505 = vset.pattern.permute.xlu0 34
  %3506 = vperm.xlu0 %3505, %v1213
  %v3507 = vpop.permute.xlu0 %3506
  %v3509 = vmul.f32 %v1215, %v3479
  %v3510 = vmul.f32 %v1217, %v3483
  %v3511 = vmul.f32 %v1219, %v3487
  %v3512 = vmul.f32 %v1221, %v3491
  %v3513 = vmul.f32 %v1223, %v3495
  %v3514 = vmul.f32 %v1225, %v3499
  %v3515 = vmul.f32 %v1227, %v3503
  %v3516 = vmul.f32 %v1229, %v3507
  %3525 = vrot.lane.b32.xlu0 %v3509, 108
  %v3526 = vpop.permute.xlu0 %3525
  %3527 = vrot.lane.b32.xlu0 %v3510, 108
  %v3528 = vpop.permute.xlu0 %3527
  %3529 = vrot.lane.b32.xlu0 %v3511, 108
  %v3530 = vpop.permute.xlu0 %3529
  %3531 = vrot.lane.b32.xlu0 %v3512, 108
  %v3532 = vpop.permute.xlu0 %3531
  %3533 = vrot.lane.b32.xlu0 %v3513, 108
  %v3534 = vpop.permute.xlu0 %3533
  %3535 = vrot.lane.b32.xlu0 %v3514, 108
  %v3536 = vpop.permute.xlu0 %3535
  %3537 = vrot.lane.b32.xlu0 %v3515, 108
  %v3538 = vpop.permute.xlu0 %3537
  %3539 = vrot.lane.b32.xlu0 %v3516, 108
  %v3540 = vpop.permute.xlu0 %3539
  %v3549 = vadd.f32 %v3461, %v3526
  %v3550 = vadd.f32 %v3462, %v3526
  %v3551 = vadd.f32 %v3463, %v3528
  %v3552 = vadd.f32 %v3464, %v3528
  %v3553 = vadd.f32 %v3465, %v3530
  %v3554 = vadd.f32 %v3466, %v3530
  %v3555 = vadd.f32 %v3467, %v3532
  %v3556 = vadd.f32 %v3468, %v3532
  %v3557 = vadd.f32 %v3469, %v3534
  %v3558 = vadd.f32 %v3470, %v3534
  %v3559 = vadd.f32 %v3471, %v3536
  %v3560 = vadd.f32 %v3472, %v3536
  %v3561 = vadd.f32 %v3473, %v3538
  %v3562 = vadd.f32 %v3474, %v3538
  %v3563 = vadd.f32 %v3475, %v3540
  %v3564 = vadd.f32 %v3476, %v3540
  %3565 = vset.pattern.permute.xlu0 35
  %3566 = vperm.xlu0 %3565, %v1206
  %v3567 = vpop.permute.xlu0 %3566
  %3569 = vset.pattern.permute.xlu0 35
  %3570 = vperm.xlu0 %3569, %v1207
  %v3571 = vpop.permute.xlu0 %3570
  %3573 = vset.pattern.permute.xlu0 35
  %3574 = vperm.xlu0 %3573, %v1208
  %v3575 = vpop.permute.xlu0 %3574
  %3577 = vset.pattern.permute.xlu0 35
  %3578 = vperm.xlu0 %3577, %v1209
  %v3579 = vpop.permute.xlu0 %3578
  %3581 = vset.pattern.permute.xlu0 35
  %3582 = vperm.xlu0 %3581, %v1210
  %v3583 = vpop.permute.xlu0 %3582
  %3585 = vset.pattern.permute.xlu0 35
  %3586 = vperm.xlu0 %3585, %v1211
  %v3587 = vpop.permute.xlu0 %3586
  %3589 = vset.pattern.permute.xlu0 35
  %3590 = vperm.xlu0 %3589, %v1212
  %v3591 = vpop.permute.xlu0 %3590
  %3593 = vset.pattern.permute.xlu0 35
  %3594 = vperm.xlu0 %3593, %v1213
  %v3595 = vpop.permute.xlu0 %3594
  %v3597 = vmul.f32 %v1215, %v3567
  %v3598 = vmul.f32 %v1217, %v3571
  %v3599 = vmul.f32 %v1219, %v3575
  %v3600 = vmul.f32 %v1221, %v3579
  %v3601 = vmul.f32 %v1223, %v3583
  %v3602 = vmul.f32 %v1225, %v3587
  %v3603 = vmul.f32 %v1227, %v3591
  %v3604 = vmul.f32 %v1229, %v3595
  %3613 = vrot.lane.b32.xlu0 %v3597, 107
  %v3614 = vpop.permute.xlu0 %3613
  %3615 = vrot.lane.b32.xlu0 %v3598, 107
  %v3616 = vpop.permute.xlu0 %3615
  %3617 = vrot.lane.b32.xlu0 %v3599, 107
  %v3618 = vpop.permute.xlu0 %3617
  %3619 = vrot.lane.b32.xlu0 %v3600, 107
  %v3620 = vpop.permute.xlu0 %3619
  %3621 = vrot.lane.b32.xlu0 %v3601, 107
  %v3622 = vpop.permute.xlu0 %3621
  %3623 = vrot.lane.b32.xlu0 %v3602, 107
  %v3624 = vpop.permute.xlu0 %3623
  %3625 = vrot.lane.b32.xlu0 %v3603, 107
  %v3626 = vpop.permute.xlu0 %3625
  %3627 = vrot.lane.b32.xlu0 %v3604, 107
  %v3628 = vpop.permute.xlu0 %3627
  %v3637 = vadd.f32 %v3549, %v3614
  %v3638 = vadd.f32 %v3550, %v3614
  %v3639 = vadd.f32 %v3551, %v3616
  %v3640 = vadd.f32 %v3552, %v3616
  %v3641 = vadd.f32 %v3553, %v3618
  %v3642 = vadd.f32 %v3554, %v3618
  %v3643 = vadd.f32 %v3555, %v3620
  %v3644 = vadd.f32 %v3556, %v3620
  %v3645 = vadd.f32 %v3557, %v3622
  %v3646 = vadd.f32 %v3558, %v3622
  %v3647 = vadd.f32 %v3559, %v3624
  %v3648 = vadd.f32 %v3560, %v3624
  %v3649 = vadd.f32 %v3561, %v3626
  %v3650 = vadd.f32 %v3562, %v3626
  %v3651 = vadd.f32 %v3563, %v3628
  %v3652 = vadd.f32 %v3564, %v3628
  %3653 = vset.pattern.permute.xlu0 36
  %3654 = vperm.xlu0 %3653, %v1206
  %v3655 = vpop.permute.xlu0 %3654
  %3657 = vset.pattern.permute.xlu0 36
  %3658 = vperm.xlu0 %3657, %v1207
  %v3659 = vpop.permute.xlu0 %3658
  %3661 = vset.pattern.permute.xlu0 36
  %3662 = vperm.xlu0 %3661, %v1208
  %v3663 = vpop.permute.xlu0 %3662
  %3665 = vset.pattern.permute.xlu0 36
  %3666 = vperm.xlu0 %3665, %v1209
  %v3667 = vpop.permute.xlu0 %3666
  %3669 = vset.pattern.permute.xlu0 36
  %3670 = vperm.xlu0 %3669, %v1210
  %v3671 = vpop.permute.xlu0 %3670
  %3673 = vset.pattern.permute.xlu0 36
  %3674 = vperm.xlu0 %3673, %v1211
  %v3675 = vpop.permute.xlu0 %3674
  %3677 = vset.pattern.permute.xlu0 36
  %3678 = vperm.xlu0 %3677, %v1212
  %v3679 = vpop.permute.xlu0 %3678
  %3681 = vset.pattern.permute.xlu0 36
  %3682 = vperm.xlu0 %3681, %v1213
  %v3683 = vpop.permute.xlu0 %3682
  %v3685 = vmul.f32 %v1215, %v3655
  %v3686 = vmul.f32 %v1217, %v3659
  %v3687 = vmul.f32 %v1219, %v3663
  %v3688 = vmul.f32 %v1221, %v3667
  %v3689 = vmul.f32 %v1223, %v3671
  %v3690 = vmul.f32 %v1225, %v3675
  %v3691 = vmul.f32 %v1227, %v3679
  %v3692 = vmul.f32 %v1229, %v3683
  %3701 = vrot.lane.b32.xlu0 %v3685, 106
  %v3702 = vpop.permute.xlu0 %3701
  %3703 = vrot.lane.b32.xlu0 %v3686, 106
  %v3704 = vpop.permute.xlu0 %3703
  %3705 = vrot.lane.b32.xlu0 %v3687, 106
  %v3706 = vpop.permute.xlu0 %3705
  %3707 = vrot.lane.b32.xlu0 %v3688, 106
  %v3708 = vpop.permute.xlu0 %3707
  %3709 = vrot.lane.b32.xlu0 %v3689, 106
  %v3710 = vpop.permute.xlu0 %3709
  %3711 = vrot.lane.b32.xlu0 %v3690, 106
  %v3712 = vpop.permute.xlu0 %3711
  %3713 = vrot.lane.b32.xlu0 %v3691, 106
  %v3714 = vpop.permute.xlu0 %3713
  %3715 = vrot.lane.b32.xlu0 %v3692, 106
  %v3716 = vpop.permute.xlu0 %3715
  %v3725 = vadd.f32 %v3637, %v3702
  %v3726 = vadd.f32 %v3638, %v3702
  %v3727 = vadd.f32 %v3639, %v3704
  %v3728 = vadd.f32 %v3640, %v3704
  %v3729 = vadd.f32 %v3641, %v3706
  %v3730 = vadd.f32 %v3642, %v3706
  %v3731 = vadd.f32 %v3643, %v3708
  %v3732 = vadd.f32 %v3644, %v3708
  %v3733 = vadd.f32 %v3645, %v3710
  %v3734 = vadd.f32 %v3646, %v3710
  %v3735 = vadd.f32 %v3647, %v3712
  %v3736 = vadd.f32 %v3648, %v3712
  %v3737 = vadd.f32 %v3649, %v3714
  %v3738 = vadd.f32 %v3650, %v3714
  %v3739 = vadd.f32 %v3651, %v3716
  %v3740 = vadd.f32 %v3652, %v3716
  %3741 = vset.pattern.permute.xlu0 37
  %3742 = vperm.xlu0 %3741, %v1206
  %v3743 = vpop.permute.xlu0 %3742
  %3745 = vset.pattern.permute.xlu0 37
  %3746 = vperm.xlu0 %3745, %v1207
  %v3747 = vpop.permute.xlu0 %3746
  %3749 = vset.pattern.permute.xlu0 37
  %3750 = vperm.xlu0 %3749, %v1208
  %v3751 = vpop.permute.xlu0 %3750
  %3753 = vset.pattern.permute.xlu0 37
  %3754 = vperm.xlu0 %3753, %v1209
  %v3755 = vpop.permute.xlu0 %3754
  %3757 = vset.pattern.permute.xlu0 37
  %3758 = vperm.xlu0 %3757, %v1210
  %v3759 = vpop.permute.xlu0 %3758
  %3761 = vset.pattern.permute.xlu0 37
  %3762 = vperm.xlu0 %3761, %v1211
  %v3763 = vpop.permute.xlu0 %3762
  %3765 = vset.pattern.permute.xlu0 37
  %3766 = vperm.xlu0 %3765, %v1212
  %v3767 = vpop.permute.xlu0 %3766
  %3769 = vset.pattern.permute.xlu0 37
  %3770 = vperm.xlu0 %3769, %v1213
  %v3771 = vpop.permute.xlu0 %3770
  %v3773 = vmul.f32 %v1215, %v3743
  %v3774 = vmul.f32 %v1217, %v3747
  %v3775 = vmul.f32 %v1219, %v3751
  %v3776 = vmul.f32 %v1221, %v3755
  %v3777 = vmul.f32 %v1223, %v3759
  %v3778 = vmul.f32 %v1225, %v3763
  %v3779 = vmul.f32 %v1227, %v3767
  %v3780 = vmul.f32 %v1229, %v3771
  %3789 = vrot.lane.b32.xlu0 %v3773, 105
  %v3790 = vpop.permute.xlu0 %3789
  %3791 = vrot.lane.b32.xlu0 %v3774, 105
  %v3792 = vpop.permute.xlu0 %3791
  %3793 = vrot.lane.b32.xlu0 %v3775, 105
  %v3794 = vpop.permute.xlu0 %3793
  %3795 = vrot.lane.b32.xlu0 %v3776, 105
  %v3796 = vpop.permute.xlu0 %3795
  %3797 = vrot.lane.b32.xlu0 %v3777, 105
  %v3798 = vpop.permute.xlu0 %3797
  %3799 = vrot.lane.b32.xlu0 %v3778, 105
  %v3800 = vpop.permute.xlu0 %3799
  %3801 = vrot.lane.b32.xlu0 %v3779, 105
  %v3802 = vpop.permute.xlu0 %3801
  %3803 = vrot.lane.b32.xlu0 %v3780, 105
  %v3804 = vpop.permute.xlu0 %3803
  %v3813 = vadd.f32 %v3725, %v3790
  %v3814 = vadd.f32 %v3726, %v3790
  %v3815 = vadd.f32 %v3727, %v3792
  %v3816 = vadd.f32 %v3728, %v3792
  %v3817 = vadd.f32 %v3729, %v3794
  %v3818 = vadd.f32 %v3730, %v3794
  %v3819 = vadd.f32 %v3731, %v3796
  %v3820 = vadd.f32 %v3732, %v3796
  %v3821 = vadd.f32 %v3733, %v3798
  %v3822 = vadd.f32 %v3734, %v3798
  %v3823 = vadd.f32 %v3735, %v3800
  %v3824 = vadd.f32 %v3736, %v3800
  %v3825 = vadd.f32 %v3737, %v3802
  %v3826 = vadd.f32 %v3738, %v3802
  %v3827 = vadd.f32 %v3739, %v3804
  %v3828 = vadd.f32 %v3740, %v3804
  %3829 = vset.pattern.permute.xlu0 40
  %3830 = vperm.xlu0 %3829, %v1206
  %v3831 = vpop.permute.xlu0 %3830
  %3833 = vset.pattern.permute.xlu0 40
  %3834 = vperm.xlu0 %3833, %v1207
  %v3835 = vpop.permute.xlu0 %3834
  %3837 = vset.pattern.permute.xlu0 40
  %3838 = vperm.xlu0 %3837, %v1208
  %v3839 = vpop.permute.xlu0 %3838
  %3841 = vset.pattern.permute.xlu0 40
  %3842 = vperm.xlu0 %3841, %v1209
  %v3843 = vpop.permute.xlu0 %3842
  %3845 = vset.pattern.permute.xlu0 40
  %3846 = vperm.xlu0 %3845, %v1210
  %v3847 = vpop.permute.xlu0 %3846
  %3849 = vset.pattern.permute.xlu0 40
  %3850 = vperm.xlu0 %3849, %v1211
  %v3851 = vpop.permute.xlu0 %3850
  %3853 = vset.pattern.permute.xlu0 40
  %3854 = vperm.xlu0 %3853, %v1212
  %v3855 = vpop.permute.xlu0 %3854
  %3857 = vset.pattern.permute.xlu0 40
  %3858 = vperm.xlu0 %3857, %v1213
  %v3859 = vpop.permute.xlu0 %3858
  %v3861 = vmul.f32 %v1215, %v3831
  %v3862 = vmul.f32 %v1217, %v3835
  %v3863 = vmul.f32 %v1219, %v3839
  %v3864 = vmul.f32 %v1221, %v3843
  %v3865 = vmul.f32 %v1223, %v3847
  %v3866 = vmul.f32 %v1225, %v3851
  %v3867 = vmul.f32 %v1227, %v3855
  %v3868 = vmul.f32 %v1229, %v3859
  %3877 = vrot.lane.b32.xlu0 %v3861, 98
  %v3878 = vpop.permute.xlu0 %3877
  %3879 = vrot.lane.b32.xlu0 %v3862, 98
  %v3880 = vpop.permute.xlu0 %3879
  %3881 = vrot.lane.b32.xlu0 %v3863, 98
  %v3882 = vpop.permute.xlu0 %3881
  %3883 = vrot.lane.b32.xlu0 %v3864, 98
  %v3884 = vpop.permute.xlu0 %3883
  %3885 = vrot.lane.b32.xlu0 %v3865, 98
  %v3886 = vpop.permute.xlu0 %3885
  %3887 = vrot.lane.b32.xlu0 %v3866, 98
  %v3888 = vpop.permute.xlu0 %3887
  %3889 = vrot.lane.b32.xlu0 %v3867, 98
  %v3890 = vpop.permute.xlu0 %3889
  %3891 = vrot.lane.b32.xlu0 %v3868, 98
  %v3892 = vpop.permute.xlu0 %3891
  %v3901 = vadd.f32 %v3813, %v3878
  %v3902 = vadd.f32 %v3814, %v3878
  %v3903 = vadd.f32 %v3815, %v3880
  %v3904 = vadd.f32 %v3816, %v3880
  %v3905 = vadd.f32 %v3817, %v3882
  %v3906 = vadd.f32 %v3818, %v3882
  %v3907 = vadd.f32 %v3819, %v3884
  %v3908 = vadd.f32 %v3820, %v3884
  %v3909 = vadd.f32 %v3821, %v3886
  %v3910 = vadd.f32 %v3822, %v3886
  %v3911 = vadd.f32 %v3823, %v3888
  %v3912 = vadd.f32 %v3824, %v3888
  %v3913 = vadd.f32 %v3825, %v3890
  %v3914 = vadd.f32 %v3826, %v3890
  %v3915 = vadd.f32 %v3827, %v3892
  %v3916 = vadd.f32 %v3828, %v3892
  %3917 = vset.pattern.permute.xlu0 41
  %3918 = vperm.xlu0 %3917, %v1206
  %v3919 = vpop.permute.xlu0 %3918
  %3921 = vset.pattern.permute.xlu0 41
  %3922 = vperm.xlu0 %3921, %v1207
  %v3923 = vpop.permute.xlu0 %3922
  %3925 = vset.pattern.permute.xlu0 41
  %3926 = vperm.xlu0 %3925, %v1208
  %v3927 = vpop.permute.xlu0 %3926
  %3929 = vset.pattern.permute.xlu0 41
  %3930 = vperm.xlu0 %3929, %v1209
  %v3931 = vpop.permute.xlu0 %3930
  %3933 = vset.pattern.permute.xlu0 41
  %3934 = vperm.xlu0 %3933, %v1210
  %v3935 = vpop.permute.xlu0 %3934
  %3937 = vset.pattern.permute.xlu0 41
  %3938 = vperm.xlu0 %3937, %v1211
  %v3939 = vpop.permute.xlu0 %3938
  %3941 = vset.pattern.permute.xlu0 41
  %3942 = vperm.xlu0 %3941, %v1212
  %v3943 = vpop.permute.xlu0 %3942
  %3945 = vset.pattern.permute.xlu0 41
  %3946 = vperm.xlu0 %3945, %v1213
  %v3947 = vpop.permute.xlu0 %3946
  %v3949 = vmul.f32 %v1215, %v3919
  %v3950 = vmul.f32 %v1217, %v3923
  %v3951 = vmul.f32 %v1219, %v3927
  %v3952 = vmul.f32 %v1221, %v3931
  %v3953 = vmul.f32 %v1223, %v3935
  %v3954 = vmul.f32 %v1225, %v3939
  %v3955 = vmul.f32 %v1227, %v3943
  %v3956 = vmul.f32 %v1229, %v3947
  %3965 = vrot.lane.b32.xlu0 %v3949, 97
  %v3966 = vpop.permute.xlu0 %3965
  %3967 = vrot.lane.b32.xlu0 %v3950, 97
  %v3968 = vpop.permute.xlu0 %3967
  %3969 = vrot.lane.b32.xlu0 %v3951, 97
  %v3970 = vpop.permute.xlu0 %3969
  %3971 = vrot.lane.b32.xlu0 %v3952, 97
  %v3972 = vpop.permute.xlu0 %3971
  %3973 = vrot.lane.b32.xlu0 %v3953, 97
  %v3974 = vpop.permute.xlu0 %3973
  %3975 = vrot.lane.b32.xlu0 %v3954, 97
  %v3976 = vpop.permute.xlu0 %3975
  %3977 = vrot.lane.b32.xlu0 %v3955, 97
  %v3978 = vpop.permute.xlu0 %3977
  %3979 = vrot.lane.b32.xlu0 %v3956, 97
  %v3980 = vpop.permute.xlu0 %3979
  %v3989 = vadd.f32 %v3901, %v3966
  %v3990 = vadd.f32 %v3902, %v3966
  %v3991 = vadd.f32 %v3903, %v3968
  %v3992 = vadd.f32 %v3904, %v3968
  %v3993 = vadd.f32 %v3905, %v3970
  %v3994 = vadd.f32 %v3906, %v3970
  %v3995 = vadd.f32 %v3907, %v3972
  %v3996 = vadd.f32 %v3908, %v3972
  %v3997 = vadd.f32 %v3909, %v3974
  %v3998 = vadd.f32 %v3910, %v3974
  %v3999 = vadd.f32 %v3911, %v3976
  %v4000 = vadd.f32 %v3912, %v3976
  %v4001 = vadd.f32 %v3913, %v3978
  %v4002 = vadd.f32 %v3914, %v3978
  %v4003 = vadd.f32 %v3915, %v3980
  %v4004 = vadd.f32 %v3916, %v3980
  %4005 = vset.pattern.permute.xlu0 42
  %4006 = vperm.xlu0 %4005, %v1206
  %v4007 = vpop.permute.xlu0 %4006
  %4009 = vset.pattern.permute.xlu0 42
  %4010 = vperm.xlu0 %4009, %v1207
  %v4011 = vpop.permute.xlu0 %4010
  %4013 = vset.pattern.permute.xlu0 42
  %4014 = vperm.xlu0 %4013, %v1208
  %v4015 = vpop.permute.xlu0 %4014
  %4017 = vset.pattern.permute.xlu0 42
  %4018 = vperm.xlu0 %4017, %v1209
  %v4019 = vpop.permute.xlu0 %4018
  %4021 = vset.pattern.permute.xlu0 42
  %4022 = vperm.xlu0 %4021, %v1210
  %v4023 = vpop.permute.xlu0 %4022
  %4025 = vset.pattern.permute.xlu0 42
  %4026 = vperm.xlu0 %4025, %v1211
  %v4027 = vpop.permute.xlu0 %4026
  %4029 = vset.pattern.permute.xlu0 42
  %4030 = vperm.xlu0 %4029, %v1212
  %v4031 = vpop.permute.xlu0 %4030
  %4033 = vset.pattern.permute.xlu0 42
  %4034 = vperm.xlu0 %4033, %v1213
  %v4035 = vpop.permute.xlu0 %4034
  %v4037 = vmul.f32 %v1215, %v4007
  %v4038 = vmul.f32 %v1217, %v4011
  %v4039 = vmul.f32 %v1219, %v4015
  %v4040 = vmul.f32 %v1221, %v4019
  %v4041 = vmul.f32 %v1223, %v4023
  %v4042 = vmul.f32 %v1225, %v4027
  %v4043 = vmul.f32 %v1227, %v4031
  %v4044 = vmul.f32 %v1229, %v4035
  %4053 = vrot.lane.b32.xlu0 %v4037, 96
  %v4054 = vpop.permute.xlu0 %4053
  %4055 = vrot.lane.b32.xlu0 %v4038, 96
  %v4056 = vpop.permute.xlu0 %4055
  %4057 = vrot.lane.b32.xlu0 %v4039, 96
  %v4058 = vpop.permute.xlu0 %4057
  %4059 = vrot.lane.b32.xlu0 %v4040, 96
  %v4060 = vpop.permute.xlu0 %4059
  %4061 = vrot.lane.b32.xlu0 %v4041, 96
  %v4062 = vpop.permute.xlu0 %4061
  %4063 = vrot.lane.b32.xlu0 %v4042, 96
  %v4064 = vpop.permute.xlu0 %4063
  %4065 = vrot.lane.b32.xlu0 %v4043, 96
  %v4066 = vpop.permute.xlu0 %4065
  %4067 = vrot.lane.b32.xlu0 %v4044, 96
  %v4068 = vpop.permute.xlu0 %4067
  %v4077 = vadd.f32 %v3989, %v4054
  %v4078 = vadd.f32 %v3990, %v4054
  %v4079 = vadd.f32 %v3991, %v4056
  %v4080 = vadd.f32 %v3992, %v4056
  %v4081 = vadd.f32 %v3993, %v4058
  %v4082 = vadd.f32 %v3994, %v4058
  %v4083 = vadd.f32 %v3995, %v4060
  %v4084 = vadd.f32 %v3996, %v4060
  %v4085 = vadd.f32 %v3997, %v4062
  %v4086 = vadd.f32 %v3998, %v4062
  %v4087 = vadd.f32 %v3999, %v4064
  %v4088 = vadd.f32 %v4000, %v4064
  %v4089 = vadd.f32 %v4001, %v4066
  %v4090 = vadd.f32 %v4002, %v4066
  %v4091 = vadd.f32 %v4003, %v4068
  %v4092 = vadd.f32 %v4004, %v4068
  %4093 = vset.pattern.permute.xlu0 43
  %4094 = vperm.xlu0 %4093, %v1206
  %v4095 = vpop.permute.xlu0 %4094
  %4097 = vset.pattern.permute.xlu0 43
  %4098 = vperm.xlu0 %4097, %v1207
  %v4099 = vpop.permute.xlu0 %4098
  %4101 = vset.pattern.permute.xlu0 43
  %4102 = vperm.xlu0 %4101, %v1208
  %v4103 = vpop.permute.xlu0 %4102
  %4105 = vset.pattern.permute.xlu0 43
  %4106 = vperm.xlu0 %4105, %v1209
  %v4107 = vpop.permute.xlu0 %4106
  %4109 = vset.pattern.permute.xlu0 43
  %4110 = vperm.xlu0 %4109, %v1210
  %v4111 = vpop.permute.xlu0 %4110
  %4113 = vset.pattern.permute.xlu0 43
  %4114 = vperm.xlu0 %4113, %v1211
  %v4115 = vpop.permute.xlu0 %4114
  %4117 = vset.pattern.permute.xlu0 43
  %4118 = vperm.xlu0 %4117, %v1212
  %v4119 = vpop.permute.xlu0 %4118
  %4121 = vset.pattern.permute.xlu0 43
  %4122 = vperm.xlu0 %4121, %v1213
  %v4123 = vpop.permute.xlu0 %4122
  %v4125 = vmul.f32 %v1215, %v4095
  %v4126 = vmul.f32 %v1217, %v4099
  %v4127 = vmul.f32 %v1219, %v4103
  %v4128 = vmul.f32 %v1221, %v4107
  %v4129 = vmul.f32 %v1223, %v4111
  %v4130 = vmul.f32 %v1225, %v4115
  %v4131 = vmul.f32 %v1227, %v4119
  %v4132 = vmul.f32 %v1229, %v4123
  %4141 = vrot.lane.b32.xlu0 %v4125, 95
  %v4142 = vpop.permute.xlu0 %4141
  %4143 = vrot.lane.b32.xlu0 %v4126, 95
  %v4144 = vpop.permute.xlu0 %4143
  %4145 = vrot.lane.b32.xlu0 %v4127, 95
  %v4146 = vpop.permute.xlu0 %4145
  %4147 = vrot.lane.b32.xlu0 %v4128, 95
  %v4148 = vpop.permute.xlu0 %4147
  %4149 = vrot.lane.b32.xlu0 %v4129, 95
  %v4150 = vpop.permute.xlu0 %4149
  %4151 = vrot.lane.b32.xlu0 %v4130, 95
  %v4152 = vpop.permute.xlu0 %4151
  %4153 = vrot.lane.b32.xlu0 %v4131, 95
  %v4154 = vpop.permute.xlu0 %4153
  %4155 = vrot.lane.b32.xlu0 %v4132, 95
  %v4156 = vpop.permute.xlu0 %4155
  %v4165 = vadd.f32 %v4077, %v4142
  %v4166 = vadd.f32 %v4078, %v4142
  %v4167 = vadd.f32 %v4079, %v4144
  %v4168 = vadd.f32 %v4080, %v4144
  %v4169 = vadd.f32 %v4081, %v4146
  %v4170 = vadd.f32 %v4082, %v4146
  %v4171 = vadd.f32 %v4083, %v4148
  %v4172 = vadd.f32 %v4084, %v4148
  %v4173 = vadd.f32 %v4085, %v4150
  %v4174 = vadd.f32 %v4086, %v4150
  %v4175 = vadd.f32 %v4087, %v4152
  %v4176 = vadd.f32 %v4088, %v4152
  %v4177 = vadd.f32 %v4089, %v4154
  %v4178 = vadd.f32 %v4090, %v4154
  %v4179 = vadd.f32 %v4091, %v4156
  %v4180 = vadd.f32 %v4092, %v4156
  %4189 = vrot.lane.b32.xlu0 %v4165, 6
  %v4190 = vpop.permute.xlu0 %4189
  %4191 = vrot.lane.b32.xlu0 %v4167, 6
  %v4192 = vpop.permute.xlu0 %4191
  %4193 = vrot.lane.b32.xlu0 %v4169, 6
  %v4194 = vpop.permute.xlu0 %4193
  %4195 = vrot.lane.b32.xlu0 %v4171, 6
  %v4196 = vpop.permute.xlu0 %4195
  %4197 = vrot.lane.b32.xlu0 %v4173, 6
  %v4198 = vpop.permute.xlu0 %4197
  %4199 = vrot.lane.b32.xlu0 %v4175, 6
  %v4200 = vpop.permute.xlu0 %4199
  %4201 = vrot.lane.b32.xlu0 %v4177, 6
  %v4202 = vpop.permute.xlu0 %4201
  %4203 = vrot.lane.b32.xlu0 %v4179, 6
  %v4204 = vpop.permute.xlu0 %4203
  %4221 = vrot.lane.b32.xlu0 %v4166, 1
  %v4222 = vpop.permute.xlu0 %4221
  %4223 = vrot.lane.b32.xlu0 %v4168, 1
  %v4224 = vpop.permute.xlu0 %4223
  %4225 = vrot.lane.b32.xlu0 %v4170, 1
  %v4226 = vpop.permute.xlu0 %4225
  %4227 = vrot.lane.b32.xlu0 %v4172, 1
  %v4228 = vpop.permute.xlu0 %4227
  %4229 = vrot.lane.b32.xlu0 %v4174, 1
  %v4230 = vpop.permute.xlu0 %4229
  %4231 = vrot.lane.b32.xlu0 %v4176, 1
  %v4232 = vpop.permute.xlu0 %4231
  %4233 = vrot.lane.b32.xlu0 %v4178, 1
  %v4234 = vpop.permute.xlu0 %4233
  %4235 = vrot.lane.b32.xlu0 %v4180, 1
  %v4236 = vpop.permute.xlu0 %4235
  %4245 = vrot.lane.b32.xlu0 %v4166, 124
  %v4246 = vpop.permute.xlu0 %4245
  %4247 = vrot.lane.b32.xlu0 %v4168, 124
  %v4248 = vpop.permute.xlu0 %4247
  %4249 = vrot.lane.b32.xlu0 %v4170, 124
  %v4250 = vpop.permute.xlu0 %4249
  %4251 = vrot.lane.b32.xlu0 %v4172, 124
  %v4252 = vpop.permute.xlu0 %4251
  %4253 = vrot.lane.b32.xlu0 %v4174, 124
  %v4254 = vpop.permute.xlu0 %4253
  %4255 = vrot.lane.b32.xlu0 %v4176, 124
  %v4256 = vpop.permute.xlu0 %4255
  %4257 = vrot.lane.b32.xlu0 %v4178, 124
  %v4258 = vpop.permute.xlu0 %4257
  %4259 = vrot.lane.b32.xlu0 %v4180, 124
  %v4260 = vpop.permute.xlu0 %4259
  %4269 = vrot.lane.b32.xlu0 %v4166, 119
  %v4270 = vpop.permute.xlu0 %4269
  %4271 = vrot.lane.b32.xlu0 %v4168, 119
  %v4272 = vpop.permute.xlu0 %4271
  %4273 = vrot.lane.b32.xlu0 %v4170, 119
  %v4274 = vpop.permute.xlu0 %4273
  %4275 = vrot.lane.b32.xlu0 %v4172, 119
  %v4276 = vpop.permute.xlu0 %4275
  %4277 = vrot.lane.b32.xlu0 %v4174, 119
  %v4278 = vpop.permute.xlu0 %4277
  %4279 = vrot.lane.b32.xlu0 %v4176, 119
  %v4280 = vpop.permute.xlu0 %4279
  %4281 = vrot.lane.b32.xlu0 %v4178, 119
  %v4282 = vpop.permute.xlu0 %4281
  %4283 = vrot.lane.b32.xlu0 %v4180, 119
  %v4284 = vpop.permute.xlu0 %4283
  %4293 = vrot.lane.b32.xlu0 %v4166, 114
  %v4294 = vpop.permute.xlu0 %4293
  %4295 = vrot.lane.b32.xlu0 %v4168, 114
  %v4296 = vpop.permute.xlu0 %4295
  %4297 = vrot.lane.b32.xlu0 %v4170, 114
  %v4298 = vpop.permute.xlu0 %4297
  %4299 = vrot.lane.b32.xlu0 %v4172, 114
  %v4300 = vpop.permute.xlu0 %4299
  %4301 = vrot.lane.b32.xlu0 %v4174, 114
  %v4302 = vpop.permute.xlu0 %4301
  %4303 = vrot.lane.b32.xlu0 %v4176, 114
  %v4304 = vpop.permute.xlu0 %4303
  %4305 = vrot.lane.b32.xlu0 %v4178, 114
  %v4306 = vpop.permute.xlu0 %4305
  %4307 = vrot.lane.b32.xlu0 %v4180, 114
  %v4308 = vpop.permute.xlu0 %4307
  %v4317 = vsel %vm2614, %v4190, %v4222
  %v4318 = vsel %vm2614, %v4192, %v4224
  %v4319 = vsel %vm2614, %v4194, %v4226
  %v4320 = vsel %vm2614, %v4196, %v4228
  %v4321 = vsel %vm2614, %v4198, %v4230
  %v4322 = vsel %vm2614, %v4200, %v4232
  %v4323 = vsel %vm2614, %v4202, %v4234
  %v4324 = vsel %vm2614, %v4204, %v4236
  %v4325 = vsel %vm2623, %v4317, %v4246
  %v4326 = vsel %vm2623, %v4318, %v4248
  %v4327 = vsel %vm2623, %v4319, %v4250
  %v4328 = vsel %vm2623, %v4320, %v4252
  %v4329 = vsel %vm2623, %v4321, %v4254
  %v4330 = vsel %vm2623, %v4322, %v4256
  %v4331 = vsel %vm2623, %v4323, %v4258
  %v4332 = vsel %vm2623, %v4324, %v4260
  %v4333 = vsel %vm2632, %v4325, %v4270
  %v4334 = vsel %vm2632, %v4326, %v4272
  %v4335 = vsel %vm2632, %v4327, %v4274
  %v4336 = vsel %vm2632, %v4328, %v4276
  %v4337 = vsel %vm2632, %v4329, %v4278
  %v4338 = vsel %vm2632, %v4330, %v4280
  %v4339 = vsel %vm2632, %v4331, %v4282
  %v4340 = vsel %vm2632, %v4332, %v4284
  %v4341 = vsel %vm2641, %v4333, %v4294
  %v4342 = vsel %vm2641, %v4334, %v4296
  %v4343 = vsel %vm2641, %v4335, %v4298
  %v4344 = vsel %vm2641, %v4336, %v4300
  %v4345 = vsel %vm2641, %v4337, %v4302
  %v4346 = vsel %vm2641, %v4338, %v4304
  %v4347 = vsel %vm2641, %v4339, %v4306
  %v4348 = vsel %vm2641, %v4340, %v4308
  %4357 = vrot.lane.b32.xlu0 %v4341, 25
  %v4358 = vpop.permute.xlu0 %4357
  %4359 = vrot.lane.b32.xlu0 %v4342, 25
  %v4360 = vpop.permute.xlu0 %4359
  %4361 = vrot.lane.b32.xlu0 %v4343, 25
  %v4362 = vpop.permute.xlu0 %4361
  %4363 = vrot.lane.b32.xlu0 %v4344, 25
  %v4364 = vpop.permute.xlu0 %4363
  %4365 = vrot.lane.b32.xlu0 %v4345, 25
  %v4366 = vpop.permute.xlu0 %4365
  %4367 = vrot.lane.b32.xlu0 %v4346, 25
  %v4368 = vpop.permute.xlu0 %4367
  %4369 = vrot.lane.b32.xlu0 %v4347, 25
  %v4370 = vpop.permute.xlu0 %4369
  %4371 = vrot.lane.b32.xlu0 %v4348, 25
  %v4372 = vpop.permute.xlu0 %4371
  %vm4381 = vcmask 203776
  %v4382 = vsel %vm4381, %v2642, %v4358
  %v4383 = vsel %vm4381, %v2643, %v4360
  %v4384 = vsel %vm4381, %v2644, %v4362
  %v4385 = vsel %vm4381, %v2645, %v4364
  %v4386 = vsel %vm4381, %v2646, %v4366
  %v4387 = vsel %vm4381, %v2647, %v4368
  %v4388 = vsel %vm4381, %v2648, %v4370
  %v4389 = vsel %vm4381, %v2649, %v4372
  %v4390 = vld [vmem:[%s3] sm:$0xf]
  %v4391 = vld [vmem:[%s3 + $0x4] sm:$0xf]
  %v4392 = vld [vmem:[%s3 + $0x8] sm:$0xf]
  %v4393 = vld [vmem:[%s3 + $0xc] sm:$0xf]
  %v4394 = vld [vmem:[%s3 + $0x10] sm:$0xf]
  %v4395 = vld [vmem:[%s3 + $0x14] sm:$0xf]
  %v4396 = vld [vmem:[%s3 + $0x18] sm:$0xf]
  %v4397 = vld [vmem:[%s3 + $0x1c] sm:$0xf]
  %v4398 = vpack.c.bf16 %v4383, %v4382
  %v4399 = vpack.c.bf16 %v4385, %v4384
  %v4400 = vpack.c.bf16 %v4387, %v4386
  %v4401 = vpack.c.bf16 %v4389, %v4388
  %v4410 = vunpack.c.l.b16 %v4390
  %v4411 = vunpack.c.l.b16 %v4391
  %v4412 = vunpack.c.l.b16 %v4392
  %v4413 = vunpack.c.l.b16 %v4393
  %v4414 = vunpack.c.l.b16 %v4394
  %v4415 = vunpack.c.l.b16 %v4395
  %v4416 = vunpack.c.l.b16 %v4396
  %v4417 = vunpack.c.l.b16 %v4397
  %v4418 = vpack.c.b16 %v4411, %v4410
  %v4419 = vpack.c.b16 %v4413, %v4412
  %v4420 = vpack.c.b16 %v4415, %v4414
  %v4421 = vpack.c.b16 %v4417, %v4416
  %vm4422 = vcmask 523264
  %v4424 = vsel %vm4422, %v4418, 0
  %v4427 = vsel %vm4422, %v4419, 0
  %v4430 = vsel %vm4422, %v4420, 0
  %v4433 = vsel %vm4422, %v4421, 0
  %4435 = vmatprep.subr.bf16.mxu0 0
  %4436 = vmatpush1.bf16.msra.mxu0 0
  %4437 = vmatprep.subr.bf16.mxu0 0
  %4438 = vmatpush1.bf16.msra.mxu0 0
  %4439 = vmatprep.subr.bf16.mxu0 0
  %4440 = vmatpush1.bf16.msra.mxu0 0
  %4441 = vmatprep.subr.bf16.mxu0 0
  %4442 = vmatpush1.bf16.msra.mxu0 0
  %4443 = vmatprep.subr.bf16.mxu0 0
  %4444 = vmatpush1.bf16.msra.mxu0 %v4401
  %4445 = vmatprep.subr.bf16.mxu0 0
  %4446 = vmatpush1.bf16.msra.mxu0 %v4400
  %4447 = vmatprep.subr.bf16.mxu0 0
  %4448 = vmatpush1.bf16.msra.mxu0 %v4399
  %4449 = vmatprep.subr.bf16.mxu0 0
  %4450 = vmatpush1.bf16.msra.mxu0 %v4398
  %4451 = vmatprep.subr.bf16.mxu0 0
  %4452 = vmatpush2.bf16.msra.mxu0 0
  %4453 = vmatprep.subr.bf16.mxu0 0
  %4454 = vmatpush2.bf16.msra.mxu0 0
  %4455 = vmatprep.subr.bf16.mxu0 0
  %4456 = vmatpush2.bf16.msra.mxu0 0
  %4457 = vmatprep.subr.bf16.mxu0 0
  %4458 = vmatpush2.bf16.msra.mxu0 0
  %4459 = vmatprep.subr.bf16.mxu0 0
  %4460 = vmatpush2.bf16.msra.mxu0 0
  %4461 = vmatprep.subr.bf16.mxu0 0
  %4462 = vmatpush2.bf16.msra.mxu0 0
  %4463 = vmatprep.subr.bf16.mxu0 0
  %4464 = vmatpush2.bf16.msra.mxu0 0
  %4465 = vmatprep.subr.bf16.mxu0 0
  %4466 = vmatpush2.bf16.msra.mxu0 0
  %4467 = vmatprep.mubr.bf16.mxu0 0
  %4468 = vmatmul.mubr.bf16.gmra.mxu0 %v4424
  %v4469 = vpop.f32.mrf.mxu0
  %v4470 = vadd.f32 0.0, %v4469
  %v4471 = vpop.f32.mrf.mxu0
  %v4472 = vpop.f32.mrf.mxu0
  %v4473 = vadd.f32 0.0, %v4472
  %v4474 = vpop.f32.mrf.mxu0
  %4475 = vmatprep.mubr.bf16.mxu0 0
  %4476 = vmatmul.mubr.bf16.gmra.mxu0 %v4427
  %v4477 = vpop.f32.mrf.mxu0
  %v4478 = vadd.f32 0.0, %v4477
  %v4479 = vpop.f32.mrf.mxu0
  %v4480 = vpop.f32.mrf.mxu0
  %v4481 = vadd.f32 0.0, %v4480
  %v4482 = vpop.f32.mrf.mxu0
  %4483 = vmatprep.mubr.bf16.mxu0 0
  %4484 = vmatmul.mubr.bf16.gmra.mxu0 %v4430
  %v4485 = vpop.f32.mrf.mxu0
  %v4486 = vadd.f32 0.0, %v4485
  %v4487 = vpop.f32.mrf.mxu0
  %v4488 = vpop.f32.mrf.mxu0
  %v4489 = vadd.f32 0.0, %v4488
  %v4490 = vpop.f32.mrf.mxu0
  %4491 = vmatprep.mubr.bf16.mxu0 0
  %4492 = vmatmul.mubr.bf16.gmra.mxu0 %v4433
  %v4493 = vpop.f32.mrf.mxu0
  %v4494 = vadd.f32 0.0, %v4493
  %v4495 = vpop.f32.mrf.mxu0
  %v4496 = vpop.f32.mrf.mxu0
  %v4497 = vadd.f32 0.0, %v4496
  %v4498 = vpop.f32.mrf.mxu0
  %4499 = vdwg.mxu0
  %v4500 = vmax.f32 %v4470, 0.0
  %v4501 = vmax.f32 %v4473, 0.0
  %v4502 = vmax.f32 %v4478, 0.0
  %v4503 = vmax.f32 %v4481, 0.0
  %v4504 = vmax.f32 %v4486, 0.0
  %v4505 = vmax.f32 %v4489, 0.0
  %v4506 = vmax.f32 %v4494, 0.0
  %v4507 = vmax.f32 %v4497, 0.0
  %v4508 = vld [vmem:[%s4] sm:$0xf]
  %v4509 = vpack.c.bf16 %v4501, %v4500
  %v4510 = vpack.c.bf16 %v4503, %v4502
  %v4511 = vpack.c.bf16 %v4505, %v4504
  %v4512 = vpack.c.bf16 %v4507, %v4506
  %v4513 = vld [vmem:[%s5] sm:$0xff]
  %4515 = vset.pattern.permute.xlu0 0
  %4516 = vperm.xlu0 %4515, %v4513
  %v4517 = vpop.permute.xlu0 %4516
  %v4520 = vsel %vm4422, %v4508, 0
  %4522 = vmatprep.subr.bf16.mxu0 0
  %4523 = vmatpush1.bf16.msra.mxu0 0
  %4524 = vmatprep.subr.bf16.mxu0 0
  %4525 = vmatpush1.bf16.msra.mxu0 0
  %4526 = vmatprep.subr.bf16.mxu0 0
  %4527 = vmatpush1.bf16.msra.mxu0 0
  %4528 = vmatprep.subr.bf16.mxu0 0
  %4529 = vmatpush1.bf16.msra.mxu0 0
  %4530 = vmatprep.subr.bf16.mxu0 0
  %4531 = vmatpush1.bf16.msra.mxu0 %v4512
  %4532 = vmatprep.subr.bf16.mxu0 0
  %4533 = vmatpush1.bf16.msra.mxu0 %v4511
  %4534 = vmatprep.subr.bf16.mxu0 0
  %4535 = vmatpush1.bf16.msra.mxu0 %v4510
  %4536 = vmatprep.subr.bf16.mxu0 0
  %4537 = vmatpush1.bf16.msra.mxu0 %v4509
  %4538 = vmatprep.subr.bf16.mxu0 0
  %4539 = vmatpush2.bf16.msra.mxu0 0
  %4540 = vmatprep.subr.bf16.mxu0 0
  %4541 = vmatpush2.bf16.msra.mxu0 0
  %4542 = vmatprep.subr.bf16.mxu0 0
  %4543 = vmatpush2.bf16.msra.mxu0 0
  %4544 = vmatprep.subr.bf16.mxu0 0
  %4545 = vmatpush2.bf16.msra.mxu0 0
  %4546 = vmatprep.subr.bf16.mxu0 0
  %4547 = vmatpush2.bf16.msra.mxu0 0
  %4548 = vmatprep.subr.bf16.mxu0 0
  %4549 = vmatpush2.bf16.msra.mxu0 0
  %4550 = vmatprep.subr.bf16.mxu0 0
  %4551 = vmatpush2.bf16.msra.mxu0 0
  %4552 = vmatprep.subr.bf16.mxu0 0
  %4553 = vmatpush2.bf16.msra.mxu0 0
  %4554 = vmatprep.mubr.bf16.mxu0 0
  %4555 = vmatmul.mubr.bf16.gmra.mxu0 %v4520
  %v4556 = vpop.f32.mrf.mxu0
  %v4557 = vadd.f32 %v4517, %v4556
  %v4558 = vpop.f32.mrf.mxu0
  %v4559 = vpop.f32.mrf.mxu0
  %v4560 = vpop.f32.mrf.mxu0
  %4561 = vdwg.mxu0
  %vm4562 = vcmask 196608
  %4563 = vst.msk [vmem:[%s6] sm:$0x1] %vm4562, %v4557
  %vm4564 = vcmask 200705
  %4565 = vst.msk [vmem:[%s7 - $0x1] sm:$0x1e] %vm4564, %v4557
  %4567 = vrot.lane.b32.xlu0 %v4557, 103
  %v4568 = vpop.permute.xlu0 %4567
  %s4570 = scalar_lea.vmem %s6, 1
  %4571 = vst.msk [vmem:[%s4570] sm:$0x1] %vm4562, %v4568
  %s4572 = scalar_lea.vmem %s7, 4
  %4573 = vst.msk [vmem:[%s4572 - $0x1] sm:$0x1e] %vm4564, %v4568
  // Predicated region
  $region26: #{depthwise_siamese_forward.1} parent=0 // pred_check
    _
  $region27: #{depthwise_siamese_forward.1} parent=0 // pred_check_branch
    %4575 = sbr.rel (0) target = $region29
  $region28: #{depthwise_siamese_forward.1} parent=0 // pred_region
    _
  $region29: #{depthwise_siamese_forward.1} parent=0 // pred_fallthru
    _
  // Predicated region
  $region30: #{depthwise_siamese_forward.1} parent=0 // pred_check
    _
  $region31: #{depthwise_siamese_forward.1} parent=0 // pred_check_branch
    %4577 = sbr.rel (0) target = $region33
  $region32: #{depthwise_siamese_forward.1} parent=0 // pred_region
    _
  $region33: #{depthwise_siamese_forward.1} parent=0 // pred_fallthru
    _
  // Predicated region
  $region34: #{depthwise_siamese_forward.1} parent=0 // pred_check
    _
  $region35: #{depthwise_siamese_forward.1} parent=0 // pred_check_branch
    %4579 = sbr.rel (0) target = $region37
  $region36: #{depthwise_siamese_forward.1} parent=0 // pred_region
    _
  $region37: #{depthwise_siamese_forward.1} parent=0 // pred_fallthru
    _
  // Predicated region
  $region38: #{depthwise_siamese_forward.1} parent=0 // pred_check
    _
  $region39: #{depthwise_siamese_forward.1} parent=0 // pred_check_branch
    %4581 = sbr.rel (0) target = $region41
  $region40: #{depthwise_siamese_forward.1} parent=0 // pred_region
    _
  $region41: #{depthwise_siamese_forward.1} parent=0 // pred_fallthru
    _

</llo_original>
